<compile_context>
chip_gen: v7x
topology: tpu7x:2x2x1
jax: 0.10.0
libtpu: 0.0.40
codegen_flags: <defaults>
</compile_context>

<pallas_src>
import jax
import jax.numpy as jnp
import numpy as np
from jax.experimental import pallas as pl
from jax.experimental.pallas import tpu as pltpu


# ---------------------------------------------------------------------------
# Host-side one-time packing of conv / conv-transpose weights into
# matmul-ready structural matrices (runs once, outside jit).
# ---------------------------------------------------------------------------
def _conv_matrices(w_oihw, b, alpha, H, W, stride, pad):
    """KxK Conv2d on an (H, W*Cin) activation ->
       S:(K,Ho,H) row-select, Wm:(K, W*Cin, Wo*Cout) banded weights,
       BA:(2 or 1, Wo*Cout) [bias; prelu-alpha] rows."""
    w = np.asarray(w_oihw, np.float32)
    Cout, Cin, KH, KW = w.shape
    Ho = (H + 2 * pad - KH) // stride + 1
    Wo = (W + 2 * pad - KW) // stride + 1

    S = np.zeros((KH, Ho, H), np.float32)
    for kh in range(KH):
        for i in range(Ho):
            h = stride * i + kh - pad
            if 0 <= h < H:
                S[kh, i, h] = 1.0

    Wm = np.zeros((KH, W * Cin, Wo * Cout), np.float32)
    for kh in range(KH):
        for j in range(Wo):
            for kw in range(KW):
                wc = stride * j + kw - pad
                if 0 <= wc < W:
                    Wm[kh, wc * Cin:(wc + 1) * Cin,
                           j * Cout:(j + 1) * Cout] = w[:, :, kh, kw].T

    brow = np.tile(np.asarray(b, np.float32), Wo)[None, :]
    if alpha is not None:
        arow = np.tile(np.asarray(alpha, np.float32), Wo)[None, :]
        ba = np.concatenate([brow, arow], axis=0)          # (2, Wo*Cout)
    else:
        ba = brow                                          # (1, Wo*Cout)
    return S, Wm, ba, Ho, Wo


def _convT_matrices(w_iohw, b, H, W):
    """ConvTranspose2d(k=2, s=2) on an (H, W*Cin) activation ->
       R:(2, 2H, H) row-scatter, Tm:(2, W*Cin, 2W*Cout) interleaved weights,
       B:(1, 2W*Cout) bias row."""
    w = np.asarray(w_iohw, np.float32)
    Cin, Cout, KH, KW = w.shape                            # (Cin, Cout, 2, 2)

    R = np.zeros((KH, 2 * H, H), np.float32)
    for dh in range(KH):
        for i in range(H):
            R[dh, 2 * i + dh, i] = 1.0

    Tm = np.zeros((KH, W * Cin, 2 * W * Cout), np.float32)
    for dh in range(KH):
        for wc in range(W):
            for dw in range(KW):
                jp = 2 * wc + dw
                Tm[dh, wc * Cin:(wc + 1) * Cin,
                       jp * Cout:(jp + 1) * Cout] = w[:, :, dh, dw]

    brow = np.tile(np.asarray(b, np.float32), 2 * W)[None, :]
    return R, Tm, brow, 2 * H, 2 * W


def init_params(key):
    """Raw PyTorch-layout parameters (deterministic uniform init)."""
    ks = jax.random.split(key, 14)

    def u(k, shape, fan_in):
        bound = 1.0 / (fan_in ** 0.5)
        return jax.random.uniform(k, shape, jnp.float32, -bound, bound)

    p = {}
    p["d1_w"] = u(ks[0], (32, 3, 3, 3), 3 * 9);    p["d1_b"] = u(ks[1], (32,), 3 * 9)
    p["d1_a"] = jnp.full((32,), 0.25, jnp.float32)
    p["d2_w"] = u(ks[2], (32, 32, 3, 3), 32 * 9);  p["d2_b"] = u(ks[3], (32,), 32 * 9)
    p["d2_a"] = jnp.full((32,), 0.25, jnp.float32)
    p["d3_w"] = u(ks[4], (32, 32, 3, 3), 32 * 9);  p["d3_b"] = u(ks[5], (32,), 32 * 9)
    p["d3_a"] = jnp.full((32,), 0.25, jnp.float32)
    p["u1_w"] = u(ks[6], (32, 32, 2, 2), 32 * 4);  p["u1_b"] = u(ks[7], (32,), 32 * 4)
    p["u2_w"] = u(ks[8], (32, 32, 2, 2), 32 * 4);  p["u2_b"] = u(ks[9], (32,), 32 * 4)
    p["u3t_w"] = u(ks[10], (32, 32, 2, 2), 32 * 4); p["u3t_b"] = u(ks[11], (32,), 32 * 4)
    p["u3c_w"] = u(ks[12], (3, 32, 3, 3), 32 * 9);  p["u3c_b"] = u(ks[13], (3,), 32 * 9)
    return p


def pack_params(raw, H=16, W=16):
    """One-time repack of raw weights into matmul-ready matrices."""
    p = {}
    h, w = H, W
    S, Wm, BA, h, w = _conv_matrices(raw["d1_w"], raw["d1_b"], raw["d1_a"], h, w, 2, 1)
    p["d1_S"], p["d1_W"], p["d1_BA"] = S, Wm, BA            # 16x16x3  -> 8x8x32
    S, Wm, BA, h, w = _conv_matrices(raw["d2_w"], raw["d2_b"], raw["d2_a"], h, w, 2, 1)
    p["d2_S"], p["d2_W"], p["d2_BA"] = S, Wm, BA            # 8x8x32   -> 4x4x32
    S, Wm, BA, h, w = _conv_matrices(raw["d3_w"], raw["d3_b"], raw["d3_a"], h, w, 2, 1)
    p["d3_S"], p["d3_W"], p["d3_BA"] = S, Wm, BA            # 4x4x32   -> 2x2x32
    R, Tm, B, h, w = _convT_matrices(raw["u1_w"], raw["u1_b"], h, w)
    p["u1_R"], p["u1_T"], p["u1_B"] = R, Tm, B              # 2x2x32   -> 4x4x32
    R, Tm, B, h, w = _convT_matrices(raw["u2_w"], raw["u2_b"], h, w)
    p["u2_R"], p["u2_T"], p["u2_B"] = R, Tm, B              # 4x4x32   -> 8x8x32
    R, Tm, B, h, w = _convT_matrices(raw["u3t_w"], raw["u3t_b"], h, w)
    p["u3_R"], p["u3_T"], p["u3_B"] = R, Tm, B              # 8x8x32   -> 16x16x32
    S, Wm, B, h, w = _conv_matrices(raw["u3c_w"], raw["u3c_b"], None, h, w, 1, 1)
    p["uc_S"], p["uc_W"], p["uc_B"] = S, Wm, B              # 16x16x32 -> 16x16x3

    out = {}
    for k, v in p.items():
        # structural / weight matrices -> bf16 (native MXU), bias/alpha -> f32
        if k.endswith(("_S", "_W", "_R", "_T")):
            out[k] = jnp.asarray(v, dtype=jnp.bfloat16)
        else:
            out[k] = jnp.asarray(v, dtype=jnp.float32)
    return out


_PARAM_ORDER = [
    "d1_S", "d1_W", "d1_BA", "d2_S", "d2_W", "d2_BA", "d3_S", "d3_W", "d3_BA",
    "u1_R", "u1_T", "u1_B", "u2_R", "u2_T", "u2_B", "u3_R", "u3_T", "u3_B",
    "uc_S", "uc_W", "uc_B",
]


# ---------------------------------------------------------------------------
# The single fused kernel: one image per grid step, everything in VMEM.
# ---------------------------------------------------------------------------
def _unet_kernel(x_ref,
                 d1s, d1w, d1ba, d2s, d2w, d2ba, d3s, d3w, d3ba,
                 u1r, u1t, u1b, u2r, u2t, u2b, u3r, u3t, u3b,
                 ucs, ucw, ucb,
                 o_ref):
    f32, bf16 = jnp.float32, jnp.bfloat16

    def conv(x, s_ref, w_ref, ba_ref, prelu):
        # x: (H, W*Cin) f32 -> (Ho, Wo*Cout) f32
        xb = x.astype(bf16)
        acc = None
        for kh in range(s_ref.shape[0]):
            rows = jnp.dot(s_ref[kh], xb, preferred_element_type=f32)
            term = jnp.dot(rows.astype(bf16), w_ref[kh], preferred_element_type=f32)
            acc = term if acc is None else acc + term
        y = acc + ba_ref[0:1, :]
        if prelu:
            a = ba_ref[1:2, :]
            y = jnp.where(y > 0, y, y * a)
        return y

    def convT(x, r_ref, t_ref, b_ref):
        # x: (H, W*Cin) f32 -> (2H, 2W*Cout) f32
        xb = x.astype(bf16)
        acc = None
        for dh in range(r_ref.shape[0]):
            cols = jnp.dot(xb, t_ref[dh], preferred_element_type=f32)
            term = jnp.dot(r_ref[dh], cols.astype(bf16), preferred_element_type=f32)
            acc = term if acc is None else acc + term
        return acc + b_ref[0:1, :]

    x = x_ref[0]                                   # (16, 48)
    d1 = conv(x, d1s, d1w, d1ba, True)             # (8, 256)
    d2 = conv(d1, d2s, d2w, d2ba, True)            # (4, 128)
    d3 = conv(d2, d3s, d3w, d3ba, True)            # (2, 64)
    u1 = convT(d3, u1r, u1t, u1b)                  # (4, 128)
    u2 = convT(u1 + d2, u2r, u2t, u2b)             # (8, 256)   up2(u1 + d2)
    u3 = convT(u2 + d1, u3r, u3t, u3b)             # (16, 512)  up3[0](u2 + d1)
    y = conv(u3, ucs, ucw, ucb, False)             # (16, 48)   up3[1]
    o_ref[0] = y


def unet_tiny_rf(packed, x_nchw):
    N, Cin, H, W = x_nchw.shape
    Cout = 3
    # NCHW -> per-image (H, W*Cin) lane-packed layout (cheap, input-only glue).
    x2d = jnp.transpose(x_nchw, (0, 2, 3, 1)).reshape(N, H, W * Cin)

    weights = [packed[k] for k in _PARAM_ORDER]
    in_specs = [pl.BlockSpec((1, H, W * Cin), lambda b: (b, 0, 0))]
    for a in weights:   # weights: whole-array blocks, constant index -> DMA'd once
        in_specs.append(pl.BlockSpec(a.shape, lambda b, nd=a.ndim: (0,) * nd))

    out = pl.pallas_call(
        _unet_kernel,
        out_shape=jax.ShapeDtypeStruct((N, H, W * Cout), jnp.float32),
        grid=(N,),
        in_specs=in_specs,
        out_specs=pl.BlockSpec((1, H, W * Cout), lambda b: (b, 0, 0)),
        compiler_params=pltpu.CompilerParams(
            dimension_semantics=("parallel",)),    # one image per TC on v7x
    )(x2d, *weights)

    # (N, H, W*3) -> NCHW (output-only glue).
    return jnp.transpose(out.reshape(N, H, W, Cout), (0, 3, 1, 2))


if __name__ == "__main__":
    key = jax.random.PRNGKey(0)
    pkey, xkey = jax.random.split(key)
    raw = init_params(pkey)
    params = pack_params(raw, H=16, W=16)
    x = jax.random.normal(xkey, (2, 3, 16, 16), dtype=jnp.float32)

    fwd = jax.jit(unet_tiny_rf)
    out = fwd(params, x)
    jax.block_until_ready(out)

    assert out.shape == (2, 3, 16, 16), out.shape
    assert bool(jnp.all(jnp.isfinite(out)))
    # TODO(synk): for inputs much larger than 16x16, add an M-row grid/tiling
    # (the whole-image-in-VMEM design assumes small spatial extents).
    print("KERNEL_OK")
</pallas_src>

<mosaic_0001>
module attributes {stable_mosaic.version = 11 : i64} {
  func.func @_unet_kernel(%arg0: i32, %arg1: memref<1x16x48xf32, #tpu.memory_space<vmem>>, %arg2: memref<3x8x16xbf16, #tpu.memory_space<vmem>>, %arg3: memref<3x48x256xbf16, #tpu.memory_space<vmem>>, %arg4: memref<2x256xf32, #tpu.memory_space<vmem>>, %arg5: memref<3x4x8xbf16, #tpu.memory_space<vmem>>, %arg6: memref<3x256x128xbf16, #tpu.memory_space<vmem>>, %arg7: memref<2x128xf32, #tpu.memory_space<vmem>>, %arg8: memref<3x2x4xbf16, #tpu.memory_space<vmem>>, %arg9: memref<3x128x64xbf16, #tpu.memory_space<vmem>>, %arg10: memref<2x64xf32, #tpu.memory_space<vmem>>, %arg11: memref<2x4x2xbf16, #tpu.memory_space<vmem>>, %arg12: memref<2x64x128xbf16, #tpu.memory_space<vmem>>, %arg13: memref<1x128xf32, #tpu.memory_space<vmem>>, %arg14: memref<2x8x4xbf16, #tpu.memory_space<vmem>>, %arg15: memref<2x128x256xbf16, #tpu.memory_space<vmem>>, %arg16: memref<1x256xf32, #tpu.memory_space<vmem>>, %arg17: memref<2x16x8xbf16, #tpu.memory_space<vmem>>, %arg18: memref<2x256x512xbf16, #tpu.memory_space<vmem>>, %arg19: memref<1x512xf32, #tpu.memory_space<vmem>>, %arg20: memref<3x16x16xbf16, #tpu.memory_space<vmem>>, %arg21: memref<3x512x48xbf16, #tpu.memory_space<vmem>>, %arg22: memref<1x48xf32, #tpu.memory_space<vmem>>, %arg23: memref<1x16x48xf32, #tpu.memory_space<vmem>>) attributes {dimension_semantics = [#tpu.dimension_semantics<parallel>], iteration_bounds = array<i64: 2>, scalar_prefetch = 0 : i64, scratch_operands = 0 : i64, tpu.core_type = #tpu.core_type<tc>, window_params = [{transform_indices = @transform_0, window_bounds = array<i64: 1, 16, 48>}, {pipeline_mode = #tpu.pipeline_mode<synchronous>, transform_indices = @transform_1, window_bounds = array<i64: 3, 8, 16>}, {pipeline_mode = #tpu.pipeline_mode<synchronous>, transform_indices = @transform_2, window_bounds = array<i64: 3, 48, 256>}, {pipeline_mode = #tpu.pipeline_mode<synchronous>, transform_indices = @transform_3, window_bounds = array<i64: 2, 256>}, {pipeline_mode = #tpu.pipeline_mode<synchronous>, transform_indices = @transform_4, window_bounds = array<i64: 3, 4, 8>}, {pipeline_mode = #tpu.pipeline_mode<synchronous>, transform_indices = @transform_5, window_bounds = array<i64: 3, 256, 128>}, {pipeline_mode = #tpu.pipeline_mode<synchronous>, transform_indices = @transform_6, window_bounds = array<i64: 2, 128>}, {pipeline_mode = #tpu.pipeline_mode<synchronous>, transform_indices = @transform_7, window_bounds = array<i64: 3, 2, 4>}, {pipeline_mode = #tpu.pipeline_mode<synchronous>, transform_indices = @transform_8, window_bounds = array<i64: 3, 128, 64>}, {pipeline_mode = #tpu.pipeline_mode<synchronous>, transform_indices = @transform_9, window_bounds = array<i64: 2, 64>}, {pipeline_mode = #tpu.pipeline_mode<synchronous>, transform_indices = @transform_10, window_bounds = array<i64: 2, 4, 2>}, {pipeline_mode = #tpu.pipeline_mode<synchronous>, transform_indices = @transform_11, window_bounds = array<i64: 2, 64, 128>}, {pipeline_mode = #tpu.pipeline_mode<synchronous>, transform_indices = @transform_12, window_bounds = array<i64: 1, 128>}, {pipeline_mode = #tpu.pipeline_mode<synchronous>, transform_indices = @transform_13, window_bounds = array<i64: 2, 8, 4>}, {pipeline_mode = #tpu.pipeline_mode<synchronous>, transform_indices = @transform_14, window_bounds = array<i64: 2, 128, 256>}, {pipeline_mode = #tpu.pipeline_mode<synchronous>, transform_indices = @transform_15, window_bounds = array<i64: 1, 256>}, {pipeline_mode = #tpu.pipeline_mode<synchronous>, transform_indices = @transform_16, window_bounds = array<i64: 2, 16, 8>}, {pipeline_mode = #tpu.pipeline_mode<synchronous>, transform_indices = @transform_17, window_bounds = array<i64: 2, 256, 512>}, {pipeline_mode = #tpu.pipeline_mode<synchronous>, transform_indices = @transform_18, window_bounds = array<i64: 1, 512>}, {pipeline_mode = #tpu.pipeline_mode<synchronous>, transform_indices = @transform_19, window_bounds = array<i64: 3, 16, 16>}, {pipeline_mode = #tpu.pipeline_mode<synchronous>, transform_indices = @transform_20, window_bounds = array<i64: 3, 512, 48>}, {pipeline_mode = #tpu.pipeline_mode<synchronous>, transform_indices = @transform_21, window_bounds = array<i64: 1, 48>}, {transform_indices = @transform_22, window_bounds = array<i64: 1, 16, 48>}]} {
    %c0 = arith.constant 0 : index
    %c0_0 = arith.constant 0 : index
    %c0_1 = arith.constant 0 : index
    %0 = vector.load %arg1[%c0, %c0_0, %c0_1] : memref<1x16x48xf32, #tpu.memory_space<vmem>>, vector<1x16x48xf32>
    %1 = vector.shape_cast %0 : vector<1x16x48xf32> to vector<16x48xf32>
    %2 = arith.truncf %1 : vector<16x48xf32> to vector<16x48xbf16>
    %c0_2 = arith.constant 0 : index
    %c0_3 = arith.constant 0 : index
    %c0_4 = arith.constant 0 : index
    %3 = vector.load %arg2[%c0_2, %c0_3, %c0_4] : memref<3x8x16xbf16, #tpu.memory_space<vmem>>, vector<1x8x16xbf16>
    %4 = vector.shape_cast %3 : vector<1x8x16xbf16> to vector<8x16xbf16>
    %cst = arith.constant dense<0.000000e+00> : vector<8x48xf32>
    %5 = tpu.matmul %4, %2, %cst {dimension_numbers = #tpu.dot_dimension_numbers<[1], [0], [0], [1], [0, 0, 1, 1], [], []>} : vector<8x16xbf16>, vector<16x48xbf16>, vector<8x48xf32> -> vector<8x48xf32>
    %6 = arith.truncf %5 : vector<8x48xf32> to vector<8x48xbf16>
    %c0_5 = arith.constant 0 : index
    %c0_6 = arith.constant 0 : index
    %c0_7 = arith.constant 0 : index
    %7 = vector.load %arg3[%c0_5, %c0_6, %c0_7] : memref<3x48x256xbf16, #tpu.memory_space<vmem>>, vector<1x48x256xbf16>
    %8 = vector.shape_cast %7 : vector<1x48x256xbf16> to vector<48x256xbf16>
    %cst_8 = arith.constant dense<0.000000e+00> : vector<8x256xf32>
    %9 = tpu.matmul %6, %8, %cst_8 {dimension_numbers = #tpu.dot_dimension_numbers<[1], [0], [0], [1], [0, 0, 1, 1], [], []>} : vector<8x48xbf16>, vector<48x256xbf16>, vector<8x256xf32> -> vector<8x256xf32>
    %c1 = arith.constant 1 : index
    %c0_9 = arith.constant 0 : index
    %c0_10 = arith.constant 0 : index
    %10 = vector.load %arg2[%c1, %c0_9, %c0_10] : memref<3x8x16xbf16, #tpu.memory_space<vmem>>, vector<1x8x16xbf16>
    %11 = vector.shape_cast %10 : vector<1x8x16xbf16> to vector<8x16xbf16>
    %cst_11 = arith.constant dense<0.000000e+00> : vector<8x48xf32>
    %12 = tpu.matmul %11, %2, %cst_11 {dimension_numbers = #tpu.dot_dimension_numbers<[1], [0], [0], [1], [0, 0, 1, 1], [], []>} : vector<8x16xbf16>, vector<16x48xbf16>, vector<8x48xf32> -> vector<8x48xf32>
    %13 = arith.truncf %12 : vector<8x48xf32> to vector<8x48xbf16>
    %c1_12 = arith.constant 1 : index
    %c0_13 = arith.constant 0 : index
    %c0_14 = arith.constant 0 : index
    %14 = vector.load %arg3[%c1_12, %c0_13, %c0_14] : memref<3x48x256xbf16, #tpu.memory_space<vmem>>, vector<1x48x256xbf16>
    %15 = vector.shape_cast %14 : vector<1x48x256xbf16> to vector<48x256xbf16>
    %cst_15 = arith.constant dense<0.000000e+00> : vector<8x256xf32>
    %16 = tpu.matmul %13, %15, %cst_15 {dimension_numbers = #tpu.dot_dimension_numbers<[1], [0], [0], [1], [0, 0, 1, 1], [], []>} : vector<8x48xbf16>, vector<48x256xbf16>, vector<8x256xf32> -> vector<8x256xf32>
    %17 = arith.addf %9, %16 : vector<8x256xf32>
    %c2 = arith.constant 2 : index
    %c0_16 = arith.constant 0 : index
    %c0_17 = arith.constant 0 : index
    %18 = vector.load %arg2[%c2, %c0_16, %c0_17] : memref<3x8x16xbf16, #tpu.memory_space<vmem>>, vector<1x8x16xbf16>
    %19 = vector.shape_cast %18 : vector<1x8x16xbf16> to vector<8x16xbf16>
    %cst_18 = arith.constant dense<0.000000e+00> : vector<8x48xf32>
    %20 = tpu.matmul %19, %2, %cst_18 {dimension_numbers = #tpu.dot_dimension_numbers<[1], [0], [0], [1], [0, 0, 1, 1], [], []>} : vector<8x16xbf16>, vector<16x48xbf16>, vector<8x48xf32> -> vector<8x48xf32>
    %21 = arith.truncf %20 : vector<8x48xf32> to vector<8x48xbf16>
    %c2_19 = arith.constant 2 : index
    %c0_20 = arith.constant 0 : index
    %c0_21 = arith.constant 0 : index
    %22 = vector.load %arg3[%c2_19, %c0_20, %c0_21] : memref<3x48x256xbf16, #tpu.memory_space<vmem>>, vector<1x48x256xbf16>
    %23 = vector.shape_cast %22 : vector<1x48x256xbf16> to vector<48x256xbf16>
    %cst_22 = arith.constant dense<0.000000e+00> : vector<8x256xf32>
    %24 = tpu.matmul %21, %23, %cst_22 {dimension_numbers = #tpu.dot_dimension_numbers<[1], [0], [0], [1], [0, 0, 1, 1], [], []>} : vector<8x48xbf16>, vector<48x256xbf16>, vector<8x256xf32> -> vector<8x256xf32>
    %25 = arith.addf %17, %24 : vector<8x256xf32>
    %c0_23 = arith.constant 0 : index
    %c0_24 = arith.constant 0 : index
    %26 = vector.load %arg4[%c0_23, %c0_24] : memref<2x256xf32, #tpu.memory_space<vmem>>, vector<1x256xf32>
    %27 = vector.broadcast %26 : vector<1x256xf32> to vector<8x256xf32>
    %28 = arith.addf %25, %27 : vector<8x256xf32>
    %c1_25 = arith.constant 1 : index
    %c0_26 = arith.constant 0 : index
    %29 = vector.load %arg4[%c1_25, %c0_26] : memref<2x256xf32, #tpu.memory_space<vmem>>, vector<1x256xf32>
    %cst_27 = arith.constant 0.000000e+00 : f32
    %30 = vector.broadcast %cst_27 : f32 to vector<8x256xf32>
    %31 = arith.cmpf ogt, %28, %30 : vector<8x256xf32>
    %32 = vector.broadcast %29 : vector<1x256xf32> to vector<8x256xf32>
    %33 = arith.mulf %28, %32 : vector<8x256xf32>
    %34 = arith.select %31, %28, %33 : vector<8x256xi1>, vector<8x256xf32>
    %35 = arith.truncf %34 : vector<8x256xf32> to vector<8x256xbf16>
    %c0_28 = arith.constant 0 : index
    %c0_29 = arith.constant 0 : index
    %c0_30 = arith.constant 0 : index
    %36 = vector.load %arg5[%c0_28, %c0_29, %c0_30] : memref<3x4x8xbf16, #tpu.memory_space<vmem>>, vector<1x4x8xbf16>
    %37 = vector.shape_cast %36 : vector<1x4x8xbf16> to vector<4x8xbf16>
    %cst_31 = arith.constant dense<0.000000e+00> : vector<4x256xf32>
    %38 = tpu.matmul %37, %35, %cst_31 {dimension_numbers = #tpu.dot_dimension_numbers<[1], [0], [0], [1], [0, 0, 1, 1], [], []>} : vector<4x8xbf16>, vector<8x256xbf16>, vector<4x256xf32> -> vector<4x256xf32>
    %39 = arith.truncf %38 : vector<4x256xf32> to vector<4x256xbf16>
    %c0_32 = arith.constant 0 : index
    %c0_33 = arith.constant 0 : index
    %c0_34 = arith.constant 0 : index
    %40 = vector.load %arg6[%c0_32, %c0_33, %c0_34] : memref<3x256x128xbf16, #tpu.memory_space<vmem>>, vector<1x256x128xbf16>
    %41 = vector.shape_cast %40 : vector<1x256x128xbf16> to vector<256x128xbf16>
    %cst_35 = arith.constant dense<0.000000e+00> : vector<4x128xf32>
    %42 = tpu.matmul %39, %41, %cst_35 {dimension_numbers = #tpu.dot_dimension_numbers<[1], [0], [0], [1], [0, 0, 1, 1], [], []>} : vector<4x256xbf16>, vector<256x128xbf16>, vector<4x128xf32> -> vector<4x128xf32>
    %c1_36 = arith.constant 1 : index
    %c0_37 = arith.constant 0 : index
    %c0_38 = arith.constant 0 : index
    %43 = vector.load %arg5[%c1_36, %c0_37, %c0_38] : memref<3x4x8xbf16, #tpu.memory_space<vmem>>, vector<1x4x8xbf16>
    %44 = vector.shape_cast %43 : vector<1x4x8xbf16> to vector<4x8xbf16>
    %cst_39 = arith.constant dense<0.000000e+00> : vector<4x256xf32>
    %45 = tpu.matmul %44, %35, %cst_39 {dimension_numbers = #tpu.dot_dimension_numbers<[1], [0], [0], [1], [0, 0, 1, 1], [], []>} : vector<4x8xbf16>, vector<8x256xbf16>, vector<4x256xf32> -> vector<4x256xf32>
    %46 = arith.truncf %45 : vector<4x256xf32> to vector<4x256xbf16>
    %c1_40 = arith.constant 1 : index
    %c0_41 = arith.constant 0 : index
    %c0_42 = arith.constant 0 : index
    %47 = vector.load %arg6[%c1_40, %c0_41, %c0_42] : memref<3x256x128xbf16, #tpu.memory_space<vmem>>, vector<1x256x128xbf16>
    %48 = vector.shape_cast %47 : vector<1x256x128xbf16> to vector<256x128xbf16>
    %cst_43 = arith.constant dense<0.000000e+00> : vector<4x128xf32>
    %49 = tpu.matmul %46, %48, %cst_43 {dimension_numbers = #tpu.dot_dimension_numbers<[1], [0], [0], [1], [0, 0, 1, 1], [], []>} : vector<4x256xbf16>, vector<256x128xbf16>, vector<4x128xf32> -> vector<4x128xf32>
    %50 = arith.addf %42, %49 : vector<4x128xf32>
    %c2_44 = arith.constant 2 : index
    %c0_45 = arith.constant 0 : index
    %c0_46 = arith.constant 0 : index
    %51 = vector.load %arg5[%c2_44, %c0_45, %c0_46] : memref<3x4x8xbf16, #tpu.memory_space<vmem>>, vector<1x4x8xbf16>
    %52 = vector.shape_cast %51 : vector<1x4x8xbf16> to vector<4x8xbf16>
    %cst_47 = arith.constant dense<0.000000e+00> : vector<4x256xf32>
    %53 = tpu.matmul %52, %35, %cst_47 {dimension_numbers = #tpu.dot_dimension_numbers<[1], [0], [0], [1], [0, 0, 1, 1], [], []>} : vector<4x8xbf16>, vector<8x256xbf16>, vector<4x256xf32> -> vector<4x256xf32>
    %54 = arith.truncf %53 : vector<4x256xf32> to vector<4x256xbf16>
    %c2_48 = arith.constant 2 : index
    %c0_49 = arith.constant 0 : index
    %c0_50 = arith.constant 0 : index
    %55 = vector.load %arg6[%c2_48, %c0_49, %c0_50] : memref<3x256x128xbf16, #tpu.memory_space<vmem>>, vector<1x256x128xbf16>
    %56 = vector.shape_cast %55 : vector<1x256x128xbf16> to vector<256x128xbf16>
    %cst_51 = arith.constant dense<0.000000e+00> : vector<4x128xf32>
    %57 = tpu.matmul %54, %56, %cst_51 {dimension_numbers = #tpu.dot_dimension_numbers<[1], [0], [0], [1], [0, 0, 1, 1], [], []>} : vector<4x256xbf16>, vector<256x128xbf16>, vector<4x128xf32> -> vector<4x128xf32>
    %58 = arith.addf %50, %57 : vector<4x128xf32>
    %c0_52 = arith.constant 0 : index
    %c0_53 = arith.constant 0 : index
    %59 = vector.load %arg7[%c0_52, %c0_53] : memref<2x128xf32, #tpu.memory_space<vmem>>, vector<1x128xf32>
    %60 = vector.broadcast %59 : vector<1x128xf32> to vector<4x128xf32>
    %61 = arith.addf %58, %60 : vector<4x128xf32>
    %c1_54 = arith.constant 1 : index
    %c0_55 = arith.constant 0 : index
    %62 = vector.load %arg7[%c1_54, %c0_55] : memref<2x128xf32, #tpu.memory_space<vmem>>, vector<1x128xf32>
    %cst_56 = arith.constant 0.000000e+00 : f32
    %63 = vector.broadcast %cst_56 : f32 to vector<4x128xf32>
    %64 = arith.cmpf ogt, %61, %63 : vector<4x128xf32>
    %65 = vector.broadcast %62 : vector<1x128xf32> to vector<4x128xf32>
    %66 = arith.mulf %61, %65 : vector<4x128xf32>
    %67 = arith.select %64, %61, %66 : vector<4x128xi1>, vector<4x128xf32>
    %68 = arith.truncf %67 : vector<4x128xf32> to vector<4x128xbf16>
    %c0_57 = arith.constant 0 : index
    %c0_58 = arith.constant 0 : index
    %c0_59 = arith.constant 0 : index
    %69 = vector.load %arg8[%c0_57, %c0_58, %c0_59] : memref<3x2x4xbf16, #tpu.memory_space<vmem>>, vector<1x2x4xbf16>
    %70 = vector.shape_cast %69 : vector<1x2x4xbf16> to vector<2x4xbf16>
    %cst_60 = arith.constant dense<0.000000e+00> : vector<2x128xf32>
    %71 = tpu.matmul %70, %68, %cst_60 {dimension_numbers = #tpu.dot_dimension_numbers<[1], [0], [0], [1], [0, 0, 1, 1], [], []>} : vector<2x4xbf16>, vector<4x128xbf16>, vector<2x128xf32> -> vector<2x128xf32>
    %72 = arith.truncf %71 : vector<2x128xf32> to vector<2x128xbf16>
    %c0_61 = arith.constant 0 : index
    %c0_62 = arith.constant 0 : index
    %c0_63 = arith.constant 0 : index
    %73 = vector.load %arg9[%c0_61, %c0_62, %c0_63] : memref<3x128x64xbf16, #tpu.memory_space<vmem>>, vector<1x128x64xbf16>
    %74 = vector.shape_cast %73 : vector<1x128x64xbf16> to vector<128x64xbf16>
    %cst_64 = arith.constant dense<0.000000e+00> : vector<2x64xf32>
    %75 = tpu.matmul %72, %74, %cst_64 {dimension_numbers = #tpu.dot_dimension_numbers<[1], [0], [0], [1], [0, 0, 1, 1], [], []>} : vector<2x128xbf16>, vector<128x64xbf16>, vector<2x64xf32> -> vector<2x64xf32>
    %c1_65 = arith.constant 1 : index
    %c0_66 = arith.constant 0 : index
    %c0_67 = arith.constant 0 : index
    %76 = vector.load %arg8[%c1_65, %c0_66, %c0_67] : memref<3x2x4xbf16, #tpu.memory_space<vmem>>, vector<1x2x4xbf16>
    %77 = vector.shape_cast %76 : vector<1x2x4xbf16> to vector<2x4xbf16>
    %cst_68 = arith.constant dense<0.000000e+00> : vector<2x128xf32>
    %78 = tpu.matmul %77, %68, %cst_68 {dimension_numbers = #tpu.dot_dimension_numbers<[1], [0], [0], [1], [0, 0, 1, 1], [], []>} : vector<2x4xbf16>, vector<4x128xbf16>, vector<2x128xf32> -> vector<2x128xf32>
    %79 = arith.truncf %78 : vector<2x128xf32> to vector<2x128xbf16>
    %c1_69 = arith.constant 1 : index
    %c0_70 = arith.constant 0 : index
    %c0_71 = arith.constant 0 : index
    %80 = vector.load %arg9[%c1_69, %c0_70, %c0_71] : memref<3x128x64xbf16, #tpu.memory_space<vmem>>, vector<1x128x64xbf16>
    %81 = vector.shape_cast %80 : vector<1x128x64xbf16> to vector<128x64xbf16>
    %cst_72 = arith.constant dense<0.000000e+00> : vector<2x64xf32>
    %82 = tpu.matmul %79, %81, %cst_72 {dimension_numbers = #tpu.dot_dimension_numbers<[1], [0], [0], [1], [0, 0, 1, 1], [], []>} : vector<2x128xbf16>, vector<128x64xbf16>, vector<2x64xf32> -> vector<2x64xf32>
    %83 = arith.addf %75, %82 : vector<2x64xf32>
    %c2_73 = arith.constant 2 : index
    %c0_74 = arith.constant 0 : index
    %c0_75 = arith.constant 0 : index
    %84 = vector.load %arg8[%c2_73, %c0_74, %c0_75] : memref<3x2x4xbf16, #tpu.memory_space<vmem>>, vector<1x2x4xbf16>
    %85 = vector.shape_cast %84 : vector<1x2x4xbf16> to vector<2x4xbf16>
    %cst_76 = arith.constant dense<0.000000e+00> : vector<2x128xf32>
    %86 = tpu.matmul %85, %68, %cst_76 {dimension_numbers = #tpu.dot_dimension_numbers<[1], [0], [0], [1], [0, 0, 1, 1], [], []>} : vector<2x4xbf16>, vector<4x128xbf16>, vector<2x128xf32> -> vector<2x128xf32>
    %87 = arith.truncf %86 : vector<2x128xf32> to vector<2x128xbf16>
    %c2_77 = arith.constant 2 : index
    %c0_78 = arith.constant 0 : index
    %c0_79 = arith.constant 0 : index
    %88 = vector.load %arg9[%c2_77, %c0_78, %c0_79] : memref<3x128x64xbf16, #tpu.memory_space<vmem>>, vector<1x128x64xbf16>
    %89 = vector.shape_cast %88 : vector<1x128x64xbf16> to vector<128x64xbf16>
    %cst_80 = arith.constant dense<0.000000e+00> : vector<2x64xf32>
    %90 = tpu.matmul %87, %89, %cst_80 {dimension_numbers = #tpu.dot_dimension_numbers<[1], [0], [0], [1], [0, 0, 1, 1], [], []>} : vector<2x128xbf16>, vector<128x64xbf16>, vector<2x64xf32> -> vector<2x64xf32>
    %91 = arith.addf %83, %90 : vector<2x64xf32>
    %c0_81 = arith.constant 0 : index
    %c0_82 = arith.constant 0 : index
    %92 = vector.load %arg10[%c0_81, %c0_82] : memref<2x64xf32, #tpu.memory_space<vmem>>, vector<1x64xf32>
    %93 = vector.broadcast %92 : vector<1x64xf32> to vector<2x64xf32>
    %94 = arith.addf %91, %93 : vector<2x64xf32>
    %c1_83 = arith.constant 1 : index
    %c0_84 = arith.constant 0 : index
    %95 = vector.load %arg10[%c1_83, %c0_84] : memref<2x64xf32, #tpu.memory_space<vmem>>, vector<1x64xf32>
    %cst_85 = arith.constant 0.000000e+00 : f32
    %96 = vector.broadcast %cst_85 : f32 to vector<2x64xf32>
    %97 = arith.cmpf ogt, %94, %96 : vector<2x64xf32>
    %98 = vector.broadcast %95 : vector<1x64xf32> to vector<2x64xf32>
    %99 = arith.mulf %94, %98 : vector<2x64xf32>
    %100 = arith.select %97, %94, %99 : vector<2x64xi1>, vector<2x64xf32>
    %101 = arith.truncf %100 : vector<2x64xf32> to vector<2x64xbf16>
    %c0_86 = arith.constant 0 : index
    %c0_87 = arith.constant 0 : index
    %c0_88 = arith.constant 0 : index
    %102 = vector.load %arg12[%c0_86, %c0_87, %c0_88] : memref<2x64x128xbf16, #tpu.memory_space<vmem>>, vector<1x64x128xbf16>
    %103 = vector.shape_cast %102 : vector<1x64x128xbf16> to vector<64x128xbf16>
    %cst_89 = arith.constant dense<0.000000e+00> : vector<2x128xf32>
    %104 = tpu.matmul %101, %103, %cst_89 {dimension_numbers = #tpu.dot_dimension_numbers<[1], [0], [0], [1], [0, 0, 1, 1], [], []>} : vector<2x64xbf16>, vector<64x128xbf16>, vector<2x128xf32> -> vector<2x128xf32>
    %c0_90 = arith.constant 0 : index
    %c0_91 = arith.constant 0 : index
    %c0_92 = arith.constant 0 : index
    %105 = vector.load %arg11[%c0_90, %c0_91, %c0_92] : memref<2x4x2xbf16, #tpu.memory_space<vmem>>, vector<1x4x2xbf16>
    %106 = vector.shape_cast %105 : vector<1x4x2xbf16> to vector<4x2xbf16>
    %107 = arith.truncf %104 : vector<2x128xf32> to vector<2x128xbf16>
    %cst_93 = arith.constant dense<0.000000e+00> : vector<4x128xf32>
    %108 = tpu.matmul %106, %107, %cst_93 {dimension_numbers = #tpu.dot_dimension_numbers<[1], [0], [0], [1], [0, 0, 1, 1], [], []>} : vector<4x2xbf16>, vector<2x128xbf16>, vector<4x128xf32> -> vector<4x128xf32>
    %c1_94 = arith.constant 1 : index
    %c0_95 = arith.constant 0 : index
    %c0_96 = arith.constant 0 : index
    %109 = vector.load %arg12[%c1_94, %c0_95, %c0_96] : memref<2x64x128xbf16, #tpu.memory_space<vmem>>, vector<1x64x128xbf16>
    %110 = vector.shape_cast %109 : vector<1x64x128xbf16> to vector<64x128xbf16>
    %cst_97 = arith.constant dense<0.000000e+00> : vector<2x128xf32>
    %111 = tpu.matmul %101, %110, %cst_97 {dimension_numbers = #tpu.dot_dimension_numbers<[1], [0], [0], [1], [0, 0, 1, 1], [], []>} : vector<2x64xbf16>, vector<64x128xbf16>, vector<2x128xf32> -> vector<2x128xf32>
    %c1_98 = arith.constant 1 : index
    %c0_99 = arith.constant 0 : index
    %c0_100 = arith.constant 0 : index
    %112 = vector.load %arg11[%c1_98, %c0_99, %c0_100] : memref<2x4x2xbf16, #tpu.memory_space<vmem>>, vector<1x4x2xbf16>
    %113 = vector.shape_cast %112 : vector<1x4x2xbf16> to vector<4x2xbf16>
    %114 = arith.truncf %111 : vector<2x128xf32> to vector<2x128xbf16>
    %cst_101 = arith.constant dense<0.000000e+00> : vector<4x128xf32>
    %115 = tpu.matmul %113, %114, %cst_101 {dimension_numbers = #tpu.dot_dimension_numbers<[1], [0], [0], [1], [0, 0, 1, 1], [], []>} : vector<4x2xbf16>, vector<2x128xbf16>, vector<4x128xf32> -> vector<4x128xf32>
    %116 = arith.addf %108, %115 : vector<4x128xf32>
    %c0_102 = arith.constant 0 : index
    %c0_103 = arith.constant 0 : index
    %117 = vector.load %arg13[%c0_102, %c0_103] : memref<1x128xf32, #tpu.memory_space<vmem>>, vector<1x128xf32>
    %118 = vector.broadcast %117 : vector<1x128xf32> to vector<4x128xf32>
    %119 = arith.addf %116, %118 : vector<4x128xf32>
    %120 = arith.addf %119, %67 : vector<4x128xf32>
    %121 = arith.truncf %120 : vector<4x128xf32> to vector<4x128xbf16>
    %c0_104 = arith.constant 0 : index
    %c0_105 = arith.constant 0 : index
    %c0_106 = arith.constant 0 : index
    %122 = vector.load %arg15[%c0_104, %c0_105, %c0_106] : memref<2x128x256xbf16, #tpu.memory_space<vmem>>, vector<1x128x256xbf16>
    %123 = vector.shape_cast %122 : vector<1x128x256xbf16> to vector<128x256xbf16>
    %cst_107 = arith.constant dense<0.000000e+00> : vector<4x256xf32>
    %124 = tpu.matmul %121, %123, %cst_107 {dimension_numbers = #tpu.dot_dimension_numbers<[1], [0], [0], [1], [0, 0, 1, 1], [], []>} : vector<4x128xbf16>, vector<128x256xbf16>, vector<4x256xf32> -> vector<4x256xf32>
    %c0_108 = arith.constant 0 : index
    %c0_109 = arith.constant 0 : index
    %c0_110 = arith.constant 0 : index
    %125 = vector.load %arg14[%c0_108, %c0_109, %c0_110] : memref<2x8x4xbf16, #tpu.memory_space<vmem>>, vector<1x8x4xbf16>
    %126 = vector.shape_cast %125 : vector<1x8x4xbf16> to vector<8x4xbf16>
    %127 = arith.truncf %124 : vector<4x256xf32> to vector<4x256xbf16>
    %cst_111 = arith.constant dense<0.000000e+00> : vector<8x256xf32>
    %128 = tpu.matmul %126, %127, %cst_111 {dimension_numbers = #tpu.dot_dimension_numbers<[1], [0], [0], [1], [0, 0, 1, 1], [], []>} : vector<8x4xbf16>, vector<4x256xbf16>, vector<8x256xf32> -> vector<8x256xf32>
    %c1_112 = arith.constant 1 : index
    %c0_113 = arith.constant 0 : index
    %c0_114 = arith.constant 0 : index
    %129 = vector.load %arg15[%c1_112, %c0_113, %c0_114] : memref<2x128x256xbf16, #tpu.memory_space<vmem>>, vector<1x128x256xbf16>
    %130 = vector.shape_cast %129 : vector<1x128x256xbf16> to vector<128x256xbf16>
    %cst_115 = arith.constant dense<0.000000e+00> : vector<4x256xf32>
    %131 = tpu.matmul %121, %130, %cst_115 {dimension_numbers = #tpu.dot_dimension_numbers<[1], [0], [0], [1], [0, 0, 1, 1], [], []>} : vector<4x128xbf16>, vector<128x256xbf16>, vector<4x256xf32> -> vector<4x256xf32>
    %c1_116 = arith.constant 1 : index
    %c0_117 = arith.constant 0 : index
    %c0_118 = arith.constant 0 : index
    %132 = vector.load %arg14[%c1_116, %c0_117, %c0_118] : memref<2x8x4xbf16, #tpu.memory_space<vmem>>, vector<1x8x4xbf16>
    %133 = vector.shape_cast %132 : vector<1x8x4xbf16> to vector<8x4xbf16>
    %134 = arith.truncf %131 : vector<4x256xf32> to vector<4x256xbf16>
    %cst_119 = arith.constant dense<0.000000e+00> : vector<8x256xf32>
    %135 = tpu.matmul %133, %134, %cst_119 {dimension_numbers = #tpu.dot_dimension_numbers<[1], [0], [0], [1], [0, 0, 1, 1], [], []>} : vector<8x4xbf16>, vector<4x256xbf16>, vector<8x256xf32> -> vector<8x256xf32>
    %136 = arith.addf %128, %135 : vector<8x256xf32>
    %c0_120 = arith.constant 0 : index
    %c0_121 = arith.constant 0 : index
    %137 = vector.load %arg16[%c0_120, %c0_121] : memref<1x256xf32, #tpu.memory_space<vmem>>, vector<1x256xf32>
    %138 = vector.broadcast %137 : vector<1x256xf32> to vector<8x256xf32>
    %139 = arith.addf %136, %138 : vector<8x256xf32>
    %140 = arith.addf %139, %34 : vector<8x256xf32>
    %141 = arith.truncf %140 : vector<8x256xf32> to vector<8x256xbf16>
    %c0_122 = arith.constant 0 : index
    %c0_123 = arith.constant 0 : index
    %c0_124 = arith.constant 0 : index
    %142 = vector.load %arg18[%c0_122, %c0_123, %c0_124] : memref<2x256x512xbf16, #tpu.memory_space<vmem>>, vector<1x256x512xbf16>
    %143 = vector.shape_cast %142 : vector<1x256x512xbf16> to vector<256x512xbf16>
    %cst_125 = arith.constant dense<0.000000e+00> : vector<8x512xf32>
    %144 = tpu.matmul %141, %143, %cst_125 {dimension_numbers = #tpu.dot_dimension_numbers<[1], [0], [0], [1], [0, 0, 1, 1], [], []>} : vector<8x256xbf16>, vector<256x512xbf16>, vector<8x512xf32> -> vector<8x512xf32>
    %c0_126 = arith.constant 0 : index
    %c0_127 = arith.constant 0 : index
    %c0_128 = arith.constant 0 : index
    %145 = vector.load %arg17[%c0_126, %c0_127, %c0_128] : memref<2x16x8xbf16, #tpu.memory_space<vmem>>, vector<1x16x8xbf16>
    %146 = vector.shape_cast %145 : vector<1x16x8xbf16> to vector<16x8xbf16>
    %147 = arith.truncf %144 : vector<8x512xf32> to vector<8x512xbf16>
    %cst_129 = arith.constant dense<0.000000e+00> : vector<16x512xf32>
    %148 = tpu.matmul %146, %147, %cst_129 {dimension_numbers = #tpu.dot_dimension_numbers<[1], [0], [0], [1], [0, 0, 1, 1], [], []>} : vector<16x8xbf16>, vector<8x512xbf16>, vector<16x512xf32> -> vector<16x512xf32>
    %c1_130 = arith.constant 1 : index
    %c0_131 = arith.constant 0 : index
    %c0_132 = arith.constant 0 : index
    %149 = vector.load %arg18[%c1_130, %c0_131, %c0_132] : memref<2x256x512xbf16, #tpu.memory_space<vmem>>, vector<1x256x512xbf16>
    %150 = vector.shape_cast %149 : vector<1x256x512xbf16> to vector<256x512xbf16>
    %cst_133 = arith.constant dense<0.000000e+00> : vector<8x512xf32>
    %151 = tpu.matmul %141, %150, %cst_133 {dimension_numbers = #tpu.dot_dimension_numbers<[1], [0], [0], [1], [0, 0, 1, 1], [], []>} : vector<8x256xbf16>, vector<256x512xbf16>, vector<8x512xf32> -> vector<8x512xf32>
    %c1_134 = arith.constant 1 : index
    %c0_135 = arith.constant 0 : index
    %c0_136 = arith.constant 0 : index
    %152 = vector.load %arg17[%c1_134, %c0_135, %c0_136] : memref<2x16x8xbf16, #tpu.memory_space<vmem>>, vector<1x16x8xbf16>
    %153 = vector.shape_cast %152 : vector<1x16x8xbf16> to vector<16x8xbf16>
    %154 = arith.truncf %151 : vector<8x512xf32> to vector<8x512xbf16>
    %cst_137 = arith.constant dense<0.000000e+00> : vector<16x512xf32>
    %155 = tpu.matmul %153, %154, %cst_137 {dimension_numbers = #tpu.dot_dimension_numbers<[1], [0], [0], [1], [0, 0, 1, 1], [], []>} : vector<16x8xbf16>, vector<8x512xbf16>, vector<16x512xf32> -> vector<16x512xf32>
    %156 = arith.addf %148, %155 : vector<16x512xf32>
    %c0_138 = arith.constant 0 : index
    %c0_139 = arith.constant 0 : index
    %157 = vector.load %arg19[%c0_138, %c0_139] : memref<1x512xf32, #tpu.memory_space<vmem>>, vector<1x512xf32>
    %158 = vector.broadcast %157 : vector<1x512xf32> to vector<16x512xf32>
    %159 = arith.addf %156, %158 : vector<16x512xf32>
    %160 = arith.truncf %159 : vector<16x512xf32> to vector<16x512xbf16>
    %c0_140 = arith.constant 0 : index
    %c0_141 = arith.constant 0 : index
    %c0_142 = arith.constant 0 : index
    %161 = vector.load %arg20[%c0_140, %c0_141, %c0_142] : memref<3x16x16xbf16, #tpu.memory_space<vmem>>, vector<1x16x16xbf16>
    %162 = vector.shape_cast %161 : vector<1x16x16xbf16> to vector<16x16xbf16>
    %cst_143 = arith.constant dense<0.000000e+00> : vector<16x512xf32>
    %163 = tpu.matmul %162, %160, %cst_143 {dimension_numbers = #tpu.dot_dimension_numbers<[1], [0], [0], [1], [0, 0, 1, 1], [], []>} : vector<16x16xbf16>, vector<16x512xbf16>, vector<16x512xf32> -> vector<16x512xf32>
    %164 = arith.truncf %163 : vector<16x512xf32> to vector<16x512xbf16>
    %c0_144 = arith.constant 0 : index
    %c0_145 = arith.constant 0 : index
    %c0_146 = arith.constant 0 : index
    %165 = vector.load %arg21[%c0_144, %c0_145, %c0_146] : memref<3x512x48xbf16, #tpu.memory_space<vmem>>, vector<1x512x48xbf16>
    %166 = vector.shape_cast %165 : vector<1x512x48xbf16> to vector<512x48xbf16>
    %cst_147 = arith.constant dense<0.000000e+00> : vector<16x48xf32>
    %167 = tpu.matmul %164, %166, %cst_147 {dimension_numbers = #tpu.dot_dimension_numbers<[1], [0], [0], [1], [0, 0, 1, 1], [], []>} : vector<16x512xbf16>, vector<512x48xbf16>, vector<16x48xf32> -> vector<16x48xf32>
    %c1_148 = arith.constant 1 : index
    %c0_149 = arith.constant 0 : index
    %c0_150 = arith.constant 0 : index
    %168 = vector.load %arg20[%c1_148, %c0_149, %c0_150] : memref<3x16x16xbf16, #tpu.memory_space<vmem>>, vector<1x16x16xbf16>
    %169 = vector.shape_cast %168 : vector<1x16x16xbf16> to vector<16x16xbf16>
    %cst_151 = arith.constant dense<0.000000e+00> : vector<16x512xf32>
    %170 = tpu.matmul %169, %160, %cst_151 {dimension_numbers = #tpu.dot_dimension_numbers<[1], [0], [0], [1], [0, 0, 1, 1], [], []>} : vector<16x16xbf16>, vector<16x512xbf16>, vector<16x512xf32> -> vector<16x512xf32>
    %171 = arith.truncf %170 : vector<16x512xf32> to vector<16x512xbf16>
    %c1_152 = arith.constant 1 : index
    %c0_153 = arith.constant 0 : index
    %c0_154 = arith.constant 0 : index
    %172 = vector.load %arg21[%c1_152, %c0_153, %c0_154] : memref<3x512x48xbf16, #tpu.memory_space<vmem>>, vector<1x512x48xbf16>
    %173 = vector.shape_cast %172 : vector<1x512x48xbf16> to vector<512x48xbf16>
    %cst_155 = arith.constant dense<0.000000e+00> : vector<16x48xf32>
    %174 = tpu.matmul %171, %173, %cst_155 {dimension_numbers = #tpu.dot_dimension_numbers<[1], [0], [0], [1], [0, 0, 1, 1], [], []>} : vector<16x512xbf16>, vector<512x48xbf16>, vector<16x48xf32> -> vector<16x48xf32>
    %175 = arith.addf %167, %174 : vector<16x48xf32>
    %c2_156 = arith.constant 2 : index
    %c0_157 = arith.constant 0 : index
    %c0_158 = arith.constant 0 : index
    %176 = vector.load %arg20[%c2_156, %c0_157, %c0_158] : memref<3x16x16xbf16, #tpu.memory_space<vmem>>, vector<1x16x16xbf16>
    %177 = vector.shape_cast %176 : vector<1x16x16xbf16> to vector<16x16xbf16>
    %cst_159 = arith.constant dense<0.000000e+00> : vector<16x512xf32>
    %178 = tpu.matmul %177, %160, %cst_159 {dimension_numbers = #tpu.dot_dimension_numbers<[1], [0], [0], [1], [0, 0, 1, 1], [], []>} : vector<16x16xbf16>, vector<16x512xbf16>, vector<16x512xf32> -> vector<16x512xf32>
    %179 = arith.truncf %178 : vector<16x512xf32> to vector<16x512xbf16>
    %c2_160 = arith.constant 2 : index
    %c0_161 = arith.constant 0 : index
    %c0_162 = arith.constant 0 : index
    %180 = vector.load %arg21[%c2_160, %c0_161, %c0_162] : memref<3x512x48xbf16, #tpu.memory_space<vmem>>, vector<1x512x48xbf16>
    %181 = vector.shape_cast %180 : vector<1x512x48xbf16> to vector<512x48xbf16>
    %cst_163 = arith.constant dense<0.000000e+00> : vector<16x48xf32>
    %182 = tpu.matmul %179, %181, %cst_163 {dimension_numbers = #tpu.dot_dimension_numbers<[1], [0], [0], [1], [0, 0, 1, 1], [], []>} : vector<16x512xbf16>, vector<512x48xbf16>, vector<16x48xf32> -> vector<16x48xf32>
    %183 = arith.addf %175, %182 : vector<16x48xf32>
    %c0_164 = arith.constant 0 : index
    %c0_165 = arith.constant 0 : index
    %184 = vector.load %arg22[%c0_164, %c0_165] : memref<1x48xf32, #tpu.memory_space<vmem>>, vector<1x48xf32>
    %185 = vector.broadcast %184 : vector<1x48xf32> to vector<16x48xf32>
    %186 = arith.addf %183, %185 : vector<16x48xf32>
    %c0_166 = arith.constant 0 : index
    %c0_167 = arith.constant 0 : index
    %c0_168 = arith.constant 0 : index
    %187 = vector.load %arg23[%c0_166, %c0_167, %c0_168] : memref<1x16x48xf32, #tpu.memory_space<vmem>>, vector<1x16x48xf32>
    %188 = vector.shape_cast %187 : vector<1x16x48xf32> to vector<16x48xf32>
    %189 = vector.shape_cast %186 : vector<16x48xf32> to vector<1x16x48xf32>
    tpu.vector_store %arg23[%c0_166, %c0_167, %c0_168], %189 {strides = array<i32>} : memref<1x16x48xf32, #tpu.memory_space<vmem>>, vector<1x16x48xf32>,
    return
  }
  func.func @transform_0(%arg0: i32) -> (i32, i32, i32) {
    %c0_i32 = arith.constant 0 : i32
    %c0_i32_0 = arith.constant 0 : i32
    %c0_i32_1 = arith.constant 0 : i32
    return %arg0, %c0_i32, %c0_i32_0 : i32, i32, i32
  }
  func.func @transform_1(%arg0: i32) -> (i32, i32, i32) {
    %c0_i32 = arith.constant 0 : i32
    %c0_i32_0 = arith.constant 0 : i32
    %c0_i32_1 = arith.constant 0 : i32
    %c0_i32_2 = arith.constant 0 : i32
    return %c0_i32, %c0_i32_0, %c0_i32_1 : i32, i32, i32
  }
  func.func @transform_2(%arg0: i32) -> (i32, i32, i32) {
    %c0_i32 = arith.constant 0 : i32
    %c0_i32_0 = arith.constant 0 : i32
    %c0_i32_1 = arith.constant 0 : i32
    %c0_i32_2 = arith.constant 0 : i32
    return %c0_i32, %c0_i32_0, %c0_i32_1 : i32, i32, i32
  }
  func.func @transform_3(%arg0: i32) -> (i32, i32) {
    %c0_i32 = arith.constant 0 : i32
    %c0_i32_0 = arith.constant 0 : i32
    %c0_i32_1 = arith.constant 0 : i32
    return %c0_i32, %c0_i32_0 : i32, i32
  }
  func.func @transform_4(%arg0: i32) -> (i32, i32, i32) {
    %c0_i32 = arith.constant 0 : i32
    %c0_i32_0 = arith.constant 0 : i32
    %c0_i32_1 = arith.constant 0 : i32
    %c0_i32_2 = arith.constant 0 : i32
    return %c0_i32, %c0_i32_0, %c0_i32_1 : i32, i32, i32
  }
  func.func @transform_5(%arg0: i32) -> (i32, i32, i32) {
    %c0_i32 = arith.constant 0 : i32
    %c0_i32_0 = arith.constant 0 : i32
    %c0_i32_1 = arith.constant 0 : i32
    %c0_i32_2 = arith.constant 0 : i32
    return %c0_i32, %c0_i32_0, %c0_i32_1 : i32, i32, i32
  }
  func.func @transform_6(%arg0: i32) -> (i32, i32) {
    %c0_i32 = arith.constant 0 : i32
    %c0_i32_0 = arith.constant 0 : i32
    %c0_i32_1 = arith.constant 0 : i32
    return %c0_i32, %c0_i32_0 : i32, i32
  }
  func.func @transform_7(%arg0: i32) -> (i32, i32, i32) {
    %c0_i32 = arith.constant 0 : i32
    %c0_i32_0 = arith.constant 0 : i32
    %c0_i32_1 = arith.constant 0 : i32
    %c0_i32_2 = arith.constant 0 : i32
    return %c0_i32, %c0_i32_0, %c0_i32_1 : i32, i32, i32
  }
  func.func @transform_8(%arg0: i32) -> (i32, i32, i32) {
    %c0_i32 = arith.constant 0 : i32
    %c0_i32_0 = arith.constant 0 : i32
    %c0_i32_1 = arith.constant 0 : i32
    %c0_i32_2 = arith.constant 0 : i32
    return %c0_i32, %c0_i32_0, %c0_i32_1 : i32, i32, i32
  }
  func.func @transform_9(%arg0: i32) -> (i32, i32) {
    %c0_i32 = arith.constant 0 : i32
    %c0_i32_0 = arith.constant 0 : i32
    %c0_i32_1 = arith.constant 0 : i32
    return %c0_i32, %c0_i32_0 : i32, i32
  }
  func.func @transform_10(%arg0: i32) -> (i32, i32, i32) {
    %c0_i32 = arith.constant 0 : i32
    %c0_i32_0 = arith.constant 0 : i32
    %c0_i32_1 = arith.constant 0 : i32
    %c0_i32_2 = arith.constant 0 : i32
    return %c0_i32, %c0_i32_0, %c0_i32_1 : i32, i32, i32
  }
  func.func @transform_11(%arg0: i32) -> (i32, i32, i32) {
    %c0_i32 = arith.constant 0 : i32
    %c0_i32_0 = arith.constant 0 : i32
    %c0_i32_1 = arith.constant 0 : i32
    %c0_i32_2 = arith.constant 0 : i32
    return %c0_i32, %c0_i32_0, %c0_i32_1 : i32, i32, i32
  }
  func.func @transform_12(%arg0: i32) -> (i32, i32) {
    %c0_i32 = arith.constant 0 : i32
    %c0_i32_0 = arith.constant 0 : i32
    %c0_i32_1 = arith.constant 0 : i32
    return %c0_i32, %c0_i32_0 : i32, i32
  }
  func.func @transform_13(%arg0: i32) -> (i32, i32, i32) {
    %c0_i32 = arith.constant 0 : i32
    %c0_i32_0 = arith.constant 0 : i32
    %c0_i32_1 = arith.constant 0 : i32
    %c0_i32_2 = arith.constant 0 : i32
    return %c0_i32, %c0_i32_0, %c0_i32_1 : i32, i32, i32
  }
  func.func @transform_14(%arg0: i32) -> (i32, i32, i32) {
    %c0_i32 = arith.constant 0 : i32
    %c0_i32_0 = arith.constant 0 : i32
    %c0_i32_1 = arith.constant 0 : i32
    %c0_i32_2 = arith.constant 0 : i32
    return %c0_i32, %c0_i32_0, %c0_i32_1 : i32, i32, i32
  }
  func.func @transform_15(%arg0: i32) -> (i32, i32) {
    %c0_i32 = arith.constant 0 : i32
    %c0_i32_0 = arith.constant 0 : i32
    %c0_i32_1 = arith.constant 0 : i32
    return %c0_i32, %c0_i32_0 : i32, i32
  }
  func.func @transform_16(%arg0: i32) -> (i32, i32, i32) {
    %c0_i32 = arith.constant 0 : i32
    %c0_i32_0 = arith.constant 0 : i32
    %c0_i32_1 = arith.constant 0 : i32
    %c0_i32_2 = arith.constant 0 : i32
    return %c0_i32, %c0_i32_0, %c0_i32_1 : i32, i32, i32
  }
  func.func @transform_17(%arg0: i32) -> (i32, i32, i32) {
    %c0_i32 = arith.constant 0 : i32
    %c0_i32_0 = arith.constant 0 : i32
    %c0_i32_1 = arith.constant 0 : i32
    %c0_i32_2 = arith.constant 0 : i32
    return %c0_i32, %c0_i32_0, %c0_i32_1 : i32, i32, i32
  }
  func.func @transform_18(%arg0: i32) -> (i32, i32) {
    %c0_i32 = arith.constant 0 : i32
    %c0_i32_0 = arith.constant 0 : i32
    %c0_i32_1 = arith.constant 0 : i32
    return %c0_i32, %c0_i32_0 : i32, i32
  }
  func.func @transform_19(%arg0: i32) -> (i32, i32, i32) {
    %c0_i32 = arith.constant 0 : i32
    %c0_i32_0 = arith.constant 0 : i32
    %c0_i32_1 = arith.constant 0 : i32
    %c0_i32_2 = arith.constant 0 : i32
    return %c0_i32, %c0_i32_0, %c0_i32_1 : i32, i32, i32
  }
  func.func @transform_20(%arg0: i32) -> (i32, i32, i32) {
    %c0_i32 = arith.constant 0 : i32
    %c0_i32_0 = arith.constant 0 : i32
    %c0_i32_1 = arith.constant 0 : i32
    %c0_i32_2 = arith.constant 0 : i32
    return %c0_i32, %c0_i32_0, %c0_i32_1 : i32, i32, i32
  }
  func.func @transform_21(%arg0: i32) -> (i32, i32) {
    %c0_i32 = arith.constant 0 : i32
    %c0_i32_0 = arith.constant 0 : i32
    %c0_i32_1 = arith.constant 0 : i32
    return %c0_i32, %c0_i32_0 : i32, i32
  }
  func.func @transform_22(%arg0: i32) -> (i32, i32, i32) {
    %c0_i32 = arith.constant 0 : i32
    %c0_i32_0 = arith.constant 0 : i32
    %c0_i32_1 = arith.constant 0 : i32
    return %arg0, %c0_i32, %c0_i32_0 : i32, i32, i32
  }
}

</mosaic_0001>

<llo_original>
// kernel: unet_tiny_rf.1
$region0: #{unet_tiny_rf.1}
  #allocation0 [shape = 'u32[]', space=smem, size = 0x4, offset = 0x4, fixed_abs, tag = 'smem constant byte address 0x4 - core index']
  #allocation1 [shape = 'u32[144,128]{1,0:T(1,128)}', space=vmem, size = 0x12000, scoped, tag = 'internal scratch']
  %s0 = inlined_call_operand.vmem [shape: f32[2,16,48], index: 0, kind: input, shape index: {}]
  %s1 = inlined_call_operand.hbm [shape: bf16[3,8,16], index: 1, kind: input, shape index: {}]
  %s2 = inlined_call_operand.hbm [shape: bf16[3,48,256], index: 2, kind: input, shape index: {}]
  %s3 = inlined_call_operand.hbm [shape: f32[2,256], index: 3, kind: input, shape index: {}]
  %s4 = inlined_call_operand.hbm [shape: bf16[3,4,8], index: 4, kind: input, shape index: {}]
  %s5 = inlined_call_operand.vmem [shape: bf16[3,256,128], index: 5, kind: input, shape index: {}]
  %s6 = inlined_call_operand.hbm [shape: f32[2,128], index: 6, kind: input, shape index: {}]
  %s7 = inlined_call_operand.hbm [shape: bf16[3,2,4], index: 7, kind: input, shape index: {}]
  %s8 = inlined_call_operand.vmem [shape: bf16[3,128,64], index: 8, kind: input, shape index: {}]
  %s9 = inlined_call_operand.hbm [shape: f32[2,64], index: 9, kind: input, shape index: {}]
  %s10 = inlined_call_operand.vmem [shape: bf16[2,4,2], index: 10, kind: input, shape index: {}]
  %s11 = inlined_call_operand.hbm [shape: bf16[2,64,128], index: 11, kind: input, shape index: {}]
  %s12 = inlined_call_operand.vmem [shape: f32[1,128], index: 12, kind: input, shape index: {}]
  %s13 = inlined_call_operand.vmem [shape: bf16[2,8,4], index: 13, kind: input, shape index: {}]
  %s14 = inlined_call_operand.hbm [shape: bf16[2,128,256], index: 14, kind: input, shape index: {}]
  %s15 = inlined_call_operand.hbm [shape: f32[1,256], index: 15, kind: input, shape index: {}]
  %s16 = inlined_call_operand.vmem [shape: bf16[2,16,8], index: 16, kind: input, shape index: {}]
  %s17 = inlined_call_operand.vmem [shape: bf16[2,256,512], index: 17, kind: input, shape index: {}]
  %s18 = inlined_call_operand.hbm [shape: f32[1,512], index: 18, kind: input, shape index: {}]
  %s19 = inlined_call_operand.hbm [shape: bf16[3,16,16], index: 19, kind: input, shape index: {}]
  %s20 = inlined_call_operand.vmem [shape: bf16[3,512,48], index: 20, kind: input, shape index: {}]
  %s21 = inlined_call_operand.hbm [shape: f32[1,48], index: 21, kind: input, shape index: {}]
  %s22 = inlined_call_operand.vmem [shape: f32[2,16,48], index: 22, kind: output, shape index: {}]
  %s23 = sld [smem:[#allocation0]]
  $region173: #{unet_tiny_rf.1} parent=0
    _
  %s25 = ssub.s32 1, %s23
  %s26 = scalar_select 0, %s25, %s23
  $region1: #{unet_tiny_rf.1} parent=0
    #allocation2 [shape = 'u8[6144]{0}', space=vmem, size = 0x1800, scoped, tag = 'input window, operand 1, single buffered']
    #allocation3 [shape = 's32[2]{0}', space=sflag, size = 0x8, scoped, tag = 'scoped memory for unet_tiny_rf.1']
    #allocation4 [shape = 'u8[73728]{0}', space=vmem, size = 0x12000, scoped, tag = 'input window, operand 2, single buffered']
    #allocation5 [shape = 's32[1]{0}', space=sflag, size = 0x4, scoped, tag = 'scoped memory for unet_tiny_rf.1']
    #allocation6 [shape = 'u8[2048]{0}', space=vmem, size = 0x800, scoped, tag = 'input window, operand 3, single buffered']
    #allocation7 [shape = 'u8[3072]{0}', space=vmem, size = 0xc00, scoped, tag = 'input window, operand 4, single buffered']
    #allocation8 [shape = 's32[1]{0}', space=sflag, size = 0x4, scoped, tag = 'scoped memory for unet_tiny_rf.1']
    #allocation9 [shape = 'u8[1024]{0}', space=vmem, size = 0x400, scoped, tag = 'input window, operand 6, single buffered']
    #allocation10 [shape = 'u8[1536]{0}', space=vmem, size = 0x800, scoped, tag = 'input window, operand 7, single buffered']
    #allocation11 [shape = 's32[1]{0}', space=sflag, size = 0x4, scoped, tag = 'scoped memory for unet_tiny_rf.1']
    #allocation12 [shape = 'u8[1024]{0}', space=vmem, size = 0x400, scoped, tag = 'input window, operand 9, single buffered']
    #allocation13 [shape = 'u8[32768]{0}', space=vmem, size = 0x8000, scoped, tag = 'input window, operand 11, single buffered']
    #allocation14 [shape = 's32[1]{0}', space=sflag, size = 0x4, scoped, tag = 'scoped memory for unet_tiny_rf.1']
    #allocation15 [shape = 'u8[131072]{0}', space=vmem, size = 0x20000, scoped, tag = 'input window, operand 14, single buffered']
    #allocation16 [shape = 'u8[1024]{0}', space=vmem, size = 0x400, scoped, tag = 'input window, operand 15, single buffered']
    #allocation17 [shape = 's32[1]{0}', space=sflag, size = 0x4, scoped, tag = 'scoped memory for unet_tiny_rf.1']
    #allocation18 [shape = 'u8[2048]{0}', space=vmem, size = 0x800, scoped, tag = 'input window, operand 18, single buffered']
    #allocation19 [shape = 'u8[12288]{0}', space=vmem, size = 0x3000, scoped, tag = 'input window, operand 19, single buffered']
    #allocation20 [shape = 's32[1]{0}', space=sflag, size = 0x4, scoped, tag = 'scoped memory for unet_tiny_rf.1']
    #allocation21 [shape = 'u8[512]{0}', space=vmem, size = 0x400, scoped, tag = 'input window, operand 21, single buffered']
    %27 = vsyncpa [#allocation3], 0
    %28 = vsyncpa [#allocation5], 0
    %29 = vsyncpa [#allocation8], 0
    %30 = vsyncpa [#allocation11], 0
    %31 = vsyncpa [#allocation14], 0
    %32 = vsyncpa [#allocation17], 0
    %33 = vsyncpa [#allocation20], 0
    loop: start=0, step=1, limit=4
    $region2: #{unet_tiny_rf.1} parent=1 // loop_pre_header
      _
    $region3: #{unet_tiny_rf.1} parent=1 // loop_header
      %s35 = sphi 0, %s39
      %p36 = scmp.ge.s32.totalorder %s35, 4
      %s45 = sphi 0, %s47
      %s48 = sphi 0, %s45
      %s49 = sphi 0, %s48
      %s65 = sphi 0, %s49
      %s69 = sphi 0, %s69
      %s71 = sphi 0, %s69
      %s72 = sphi 0, %s71
      %s86 = sphi 0, %s72
      %s90 = sphi 0, %s90
      %s92 = sphi 0, %s90
      %s93 = sphi 0, %s92
      %s107 = sphi 0, %s93
      %s111 = sphi 0, %s111
      %s113 = sphi 0, %s111
      %s114 = sphi 0, %s113
      %s128 = sphi 0, %s114
      %s132 = sphi 0, %s132
      %s134 = sphi 0, %s132
      %s135 = sphi 0, %s134
      %s149 = sphi 0, %s135
      %s153 = sphi 0, %s153
      %s155 = sphi 0, %s153
      %s156 = sphi 0, %s155
      %s170 = sphi 0, %s156
      %s174 = sphi 0, %s174
      %s176 = sphi 0, %s174
      %s177 = sphi 0, %s176
      %s191 = sphi 0, %s177
      %s195 = sphi 0, %s195
      %s197 = sphi 0, %s195
      %s198 = sphi 0, %s197
      %s212 = sphi 0, %s198
      %s216 = sphi 0, %s216
      %s218 = sphi 0, %s216
      %s219 = sphi 0, %s218
      %s233 = sphi 0, %s219
      %s237 = sphi 0, %s237
      %s239 = sphi 0, %s237
      %s240 = sphi 0, %s239
      %s254 = sphi 0, %s240
      %s258 = sphi 0, %s258
      %s260 = sphi 0, %s258
      %s261 = sphi 0, %s260
      %s275 = sphi 0, %s261
      %s279 = sphi 0, %s279
      %s281 = sphi 0, %s279
      %s282 = sphi 0, %s281
      %s296 = sphi 0, %s282
      %s300 = sphi 0, %s300
      %s302 = sphi 0, %s300
      %s303 = sphi 0, %s302
      %s317 = sphi 0, %s303
      %s321 = sphi 0, %s321
      %s323 = sphi 0, %s321
      %s324 = sphi 0, %s323
      %s338 = sphi 0, %s324
      %s342 = sphi 0, %s342
      %s344 = sphi 0, %s342
      %s345 = sphi 0, %s344
      %s359 = sphi 0, %s345
      %s363 = sphi 0, %s363
      %s365 = sphi 0, %s363
      %s366 = sphi 0, %s365
      %s380 = sphi 0, %s366
      %s384 = sphi 0, %s384
      %s386 = sphi 0, %s384
      %s387 = sphi 0, %s386
      %s401 = sphi 0, %s387
      %s405 = sphi 0, %s405
      %s407 = sphi 0, %s405
      %s408 = sphi 0, %s407
      %s422 = sphi 0, %s408
      %s426 = sphi 0, %s426
      %s428 = sphi 0, %s426
      %s429 = sphi 0, %s428
      %s443 = sphi 0, %s429
      %s447 = sphi 0, %s447
      %s449 = sphi 0, %s447
      %s450 = sphi 0, %s449
      %s464 = sphi 0, %s450
      %s468 = sphi 0, %s468
      %s470 = sphi 0, %s468
      %s471 = sphi 0, %s470
      %s485 = sphi 0, %s471
      %s489 = sphi 0, %s489
      %s491 = sphi 0, %s489
      %s492 = sphi 0, %s491
      %s506 = sphi 0, %s492
      %s512 = sphi 0, %s514
      %s515 = sphi 0, %s512
      %s516 = sphi 0, %s515
      %s532 = sphi 0, %s516
    $region4: #{unet_tiny_rf.1} parent=1 // loop_header_branch
      %38 = sbr.rel (%p36) target = $region8
    $region5: #{unet_tiny_rf.1} parent=1 // loop_body
      %s40 = ssub.s32 %s35, 1
      %s41 = ssub.s32 %s35, 2
      %s42 = sadd.s32 %s35, 1
      %s43 = ssub.s32 %s35, %s42
      %p44 = scmp.eq.s32.totalorder %s43, 0
      %s46 = sadd.s32 %s45, 1
      %s47 = scalar_select %p44, %s45, %s46
      %p50 = pneg %p44
      %p51 = scmp.eq.s32.totalorder %s35, 1
      %p52 = por %p50, %p51
      %p53 = scmp.ne.s32.totalorder %s45, %s48
      %p54 = scmp.eq.s32.totalorder %s35, 0
      %p55 = por %p53, %p54
      %p56 = scmp.ne.s32.totalorder %s45, %s48
      %p57 = scmp.eq.s32.totalorder %s40, 1
      %p58 = por %p56, %p57
      %p59 = scmp.ne.s32.totalorder %s48, %s49
      %p60 = scmp.eq.s32.totalorder %s40, 0
      %p61 = por %p59, %p60
      %p62 = scmp.ne.s32.totalorder %s48, %s49
      %p63 = scmp.eq.s32.totalorder %s41, 1
      %p64 = por %p62, %p63
      %p66 = scmp.ne.s32.totalorder %s49, %s65
      %p67 = scmp.eq.s32.totalorder %s41, 0
      %p68 = por %p66, %p67
      %s70 = sadd.s32 %s69, 1
      %p73 = scmp.eq.s32.totalorder %s35, 1
      %p74 = scmp.ne.s32.totalorder %s69, %s71
      %p75 = scmp.eq.s32.totalorder %s35, 0
      %p76 = por %p74, %p75
      %p77 = scmp.ne.s32.totalorder %s69, %s71
      %p78 = scmp.eq.s32.totalorder %s40, 1
      %p79 = por %p77, %p78
      %p80 = scmp.ne.s32.totalorder %s71, %s72
      %p81 = scmp.eq.s32.totalorder %s40, 0
      %p82 = por %p80, %p81
      %p83 = scmp.ne.s32.totalorder %s71, %s72
      %p84 = scmp.eq.s32.totalorder %s41, 1
      %p85 = por %p83, %p84
      %p87 = scmp.ne.s32.totalorder %s72, %s86
      %p88 = scmp.eq.s32.totalorder %s41, 0
      %p89 = por %p87, %p88
      %s91 = sadd.s32 %s90, 1
      %p94 = scmp.eq.s32.totalorder %s35, 1
      %p95 = scmp.ne.s32.totalorder %s90, %s92
      %p96 = scmp.eq.s32.totalorder %s35, 0
      %p97 = por %p95, %p96
      %p98 = scmp.ne.s32.totalorder %s90, %s92
      %p99 = scmp.eq.s32.totalorder %s40, 1
      %p100 = por %p98, %p99
      %p101 = scmp.ne.s32.totalorder %s92, %s93
      %p102 = scmp.eq.s32.totalorder %s40, 0
      %p103 = por %p101, %p102
      %p104 = scmp.ne.s32.totalorder %s92, %s93
      %p105 = scmp.eq.s32.totalorder %s41, 1
      %p106 = por %p104, %p105
      %p108 = scmp.ne.s32.totalorder %s93, %s107
      %p109 = scmp.eq.s32.totalorder %s41, 0
      %p110 = por %p108, %p109
      %s112 = sadd.s32 %s111, 1
      %p115 = scmp.eq.s32.totalorder %s35, 1
      %p116 = scmp.ne.s32.totalorder %s111, %s113
      %p117 = scmp.eq.s32.totalorder %s35, 0
      %p118 = por %p116, %p117
      %p119 = scmp.ne.s32.totalorder %s111, %s113
      %p120 = scmp.eq.s32.totalorder %s40, 1
      %p121 = por %p119, %p120
      %p122 = scmp.ne.s32.totalorder %s113, %s114
      %p123 = scmp.eq.s32.totalorder %s40, 0
      %p124 = por %p122, %p123
      %p125 = scmp.ne.s32.totalorder %s113, %s114
      %p126 = scmp.eq.s32.totalorder %s41, 1
      %p127 = por %p125, %p126
      %p129 = scmp.ne.s32.totalorder %s114, %s128
      %p130 = scmp.eq.s32.totalorder %s41, 0
      %p131 = por %p129, %p130
      %s133 = sadd.s32 %s132, 1
      %p136 = scmp.eq.s32.totalorder %s35, 1
      %p137 = scmp.ne.s32.totalorder %s132, %s134
      %p138 = scmp.eq.s32.totalorder %s35, 0
      %p139 = por %p137, %p138
      %p140 = scmp.ne.s32.totalorder %s132, %s134
      %p141 = scmp.eq.s32.totalorder %s40, 1
      %p142 = por %p140, %p141
      %p143 = scmp.ne.s32.totalorder %s134, %s135
      %p144 = scmp.eq.s32.totalorder %s40, 0
      %p145 = por %p143, %p144
      %p146 = scmp.ne.s32.totalorder %s134, %s135
      %p147 = scmp.eq.s32.totalorder %s41, 1
      %p148 = por %p146, %p147
      %p150 = scmp.ne.s32.totalorder %s135, %s149
      %p151 = scmp.eq.s32.totalorder %s41, 0
      %p152 = por %p150, %p151
      %s154 = sadd.s32 %s153, 1
      %p157 = scmp.eq.s32.totalorder %s35, 1
      %p158 = scmp.ne.s32.totalorder %s153, %s155
      %p159 = scmp.eq.s32.totalorder %s35, 0
      %p160 = por %p158, %p159
      %p161 = scmp.ne.s32.totalorder %s153, %s155
      %p162 = scmp.eq.s32.totalorder %s40, 1
      %p163 = por %p161, %p162
      %p164 = scmp.ne.s32.totalorder %s155, %s156
      %p165 = scmp.eq.s32.totalorder %s40, 0
      %p166 = por %p164, %p165
      %p167 = scmp.ne.s32.totalorder %s155, %s156
      %p168 = scmp.eq.s32.totalorder %s41, 1
      %p169 = por %p167, %p168
      %p171 = scmp.ne.s32.totalorder %s156, %s170
      %p172 = scmp.eq.s32.totalorder %s41, 0
      %p173 = por %p171, %p172
      %s175 = sadd.s32 %s174, 1
      %p178 = scmp.eq.s32.totalorder %s35, 1
      %p179 = scmp.ne.s32.totalorder %s174, %s176
      %p180 = scmp.eq.s32.totalorder %s35, 0
      %p181 = por %p179, %p180
      %p182 = scmp.ne.s32.totalorder %s174, %s176
      %p183 = scmp.eq.s32.totalorder %s40, 1
      %p184 = por %p182, %p183
      %p185 = scmp.ne.s32.totalorder %s176, %s177
      %p186 = scmp.eq.s32.totalorder %s40, 0
      %p187 = por %p185, %p186
      %p188 = scmp.ne.s32.totalorder %s176, %s177
      %p189 = scmp.eq.s32.totalorder %s41, 1
      %p190 = por %p188, %p189
      %p192 = scmp.ne.s32.totalorder %s177, %s191
      %p193 = scmp.eq.s32.totalorder %s41, 0
      %p194 = por %p192, %p193
      %s196 = sadd.s32 %s195, 1
      %p199 = scmp.eq.s32.totalorder %s35, 1
      %p200 = scmp.ne.s32.totalorder %s195, %s197
      %p201 = scmp.eq.s32.totalorder %s35, 0
      %p202 = por %p200, %p201
      %p203 = scmp.ne.s32.totalorder %s195, %s197
      %p204 = scmp.eq.s32.totalorder %s40, 1
      %p205 = por %p203, %p204
      %p206 = scmp.ne.s32.totalorder %s197, %s198
      %p207 = scmp.eq.s32.totalorder %s40, 0
      %p208 = por %p206, %p207
      %p209 = scmp.ne.s32.totalorder %s197, %s198
      %p210 = scmp.eq.s32.totalorder %s41, 1
      %p211 = por %p209, %p210
      %p213 = scmp.ne.s32.totalorder %s198, %s212
      %p214 = scmp.eq.s32.totalorder %s41, 0
      %p215 = por %p213, %p214
      %s217 = sadd.s32 %s216, 1
      %p220 = scmp.eq.s32.totalorder %s35, 1
      %p221 = scmp.ne.s32.totalorder %s216, %s218
      %p222 = scmp.eq.s32.totalorder %s35, 0
      %p223 = por %p221, %p222
      %p224 = scmp.ne.s32.totalorder %s216, %s218
      %p225 = scmp.eq.s32.totalorder %s40, 1
      %p226 = por %p224, %p225
      %p227 = scmp.ne.s32.totalorder %s218, %s219
      %p228 = scmp.eq.s32.totalorder %s40, 0
      %p229 = por %p227, %p228
      %p230 = scmp.ne.s32.totalorder %s218, %s219
      %p231 = scmp.eq.s32.totalorder %s41, 1
      %p232 = por %p230, %p231
      %p234 = scmp.ne.s32.totalorder %s219, %s233
      %p235 = scmp.eq.s32.totalorder %s41, 0
      %p236 = por %p234, %p235
      %s238 = sadd.s32 %s237, 1
      %p241 = scmp.eq.s32.totalorder %s35, 1
      %p242 = scmp.ne.s32.totalorder %s237, %s239
      %p243 = scmp.eq.s32.totalorder %s35, 0
      %p244 = por %p242, %p243
      %p245 = scmp.ne.s32.totalorder %s237, %s239
      %p246 = scmp.eq.s32.totalorder %s40, 1
      %p247 = por %p245, %p246
      %p248 = scmp.ne.s32.totalorder %s239, %s240
      %p249 = scmp.eq.s32.totalorder %s40, 0
      %p250 = por %p248, %p249
      %p251 = scmp.ne.s32.totalorder %s239, %s240
      %p252 = scmp.eq.s32.totalorder %s41, 1
      %p253 = por %p251, %p252
      %p255 = scmp.ne.s32.totalorder %s240, %s254
      %p256 = scmp.eq.s32.totalorder %s41, 0
      %p257 = por %p255, %p256
      %s259 = sadd.s32 %s258, 1
      %p262 = scmp.eq.s32.totalorder %s35, 1
      %p263 = scmp.ne.s32.totalorder %s258, %s260
      %p264 = scmp.eq.s32.totalorder %s35, 0
      %p265 = por %p263, %p264
      %p266 = scmp.ne.s32.totalorder %s258, %s260
      %p267 = scmp.eq.s32.totalorder %s40, 1
      %p268 = por %p266, %p267
      %p269 = scmp.ne.s32.totalorder %s260, %s261
      %p270 = scmp.eq.s32.totalorder %s40, 0
      %p271 = por %p269, %p270
      %p272 = scmp.ne.s32.totalorder %s260, %s261
      %p273 = scmp.eq.s32.totalorder %s41, 1
      %p274 = por %p272, %p273
      %p276 = scmp.ne.s32.totalorder %s261, %s275
      %p277 = scmp.eq.s32.totalorder %s41, 0
      %p278 = por %p276, %p277
      %s280 = sadd.s32 %s279, 1
      %p283 = scmp.eq.s32.totalorder %s35, 1
      %p284 = scmp.ne.s32.totalorder %s279, %s281
      %p285 = scmp.eq.s32.totalorder %s35, 0
      %p286 = por %p284, %p285
      %p287 = scmp.ne.s32.totalorder %s279, %s281
      %p288 = scmp.eq.s32.totalorder %s40, 1
      %p289 = por %p287, %p288
      %p290 = scmp.ne.s32.totalorder %s281, %s282
      %p291 = scmp.eq.s32.totalorder %s40, 0
      %p292 = por %p290, %p291
      %p293 = scmp.ne.s32.totalorder %s281, %s282
      %p294 = scmp.eq.s32.totalorder %s41, 1
      %p295 = por %p293, %p294
      %p297 = scmp.ne.s32.totalorder %s282, %s296
      %p298 = scmp.eq.s32.totalorder %s41, 0
      %p299 = por %p297, %p298
      %s301 = sadd.s32 %s300, 1
      %p304 = scmp.eq.s32.totalorder %s35, 1
      %p305 = scmp.ne.s32.totalorder %s300, %s302
      %p306 = scmp.eq.s32.totalorder %s35, 0
      %p307 = por %p305, %p306
      %p308 = scmp.ne.s32.totalorder %s300, %s302
      %p309 = scmp.eq.s32.totalorder %s40, 1
      %p310 = por %p308, %p309
      %p311 = scmp.ne.s32.totalorder %s302, %s303
      %p312 = scmp.eq.s32.totalorder %s40, 0
      %p313 = por %p311, %p312
      %p314 = scmp.ne.s32.totalorder %s302, %s303
      %p315 = scmp.eq.s32.totalorder %s41, 1
      %p316 = por %p314, %p315
      %p318 = scmp.ne.s32.totalorder %s303, %s317
      %p319 = scmp.eq.s32.totalorder %s41, 0
      %p320 = por %p318, %p319
      %s322 = sadd.s32 %s321, 1
      %p325 = scmp.eq.s32.totalorder %s35, 1
      %p326 = scmp.ne.s32.totalorder %s321, %s323
      %p327 = scmp.eq.s32.totalorder %s35, 0
      %p328 = por %p326, %p327
      %p329 = scmp.ne.s32.totalorder %s321, %s323
      %p330 = scmp.eq.s32.totalorder %s40, 1
      %p331 = por %p329, %p330
      %p332 = scmp.ne.s32.totalorder %s323, %s324
      %p333 = scmp.eq.s32.totalorder %s40, 0
      %p334 = por %p332, %p333
      %p335 = scmp.ne.s32.totalorder %s323, %s324
      %p336 = scmp.eq.s32.totalorder %s41, 1
      %p337 = por %p335, %p336
      %p339 = scmp.ne.s32.totalorder %s324, %s338
      %p340 = scmp.eq.s32.totalorder %s41, 0
      %p341 = por %p339, %p340
      %s343 = sadd.s32 %s342, 1
      %p346 = scmp.eq.s32.totalorder %s35, 1
      %p347 = scmp.ne.s32.totalorder %s342, %s344
      %p348 = scmp.eq.s32.totalorder %s35, 0
      %p349 = por %p347, %p348
      %p350 = scmp.ne.s32.totalorder %s342, %s344
      %p351 = scmp.eq.s32.totalorder %s40, 1
      %p352 = por %p350, %p351
      %p353 = scmp.ne.s32.totalorder %s344, %s345
      %p354 = scmp.eq.s32.totalorder %s40, 0
      %p355 = por %p353, %p354
      %p356 = scmp.ne.s32.totalorder %s344, %s345
      %p357 = scmp.eq.s32.totalorder %s41, 1
      %p358 = por %p356, %p357
      %p360 = scmp.ne.s32.totalorder %s345, %s359
      %p361 = scmp.eq.s32.totalorder %s41, 0
      %p362 = por %p360, %p361
      %s364 = sadd.s32 %s363, 1
      %p367 = scmp.eq.s32.totalorder %s35, 1
      %p368 = scmp.ne.s32.totalorder %s363, %s365
      %p369 = scmp.eq.s32.totalorder %s35, 0
      %p370 = por %p368, %p369
      %p371 = scmp.ne.s32.totalorder %s363, %s365
      %p372 = scmp.eq.s32.totalorder %s40, 1
      %p373 = por %p371, %p372
      %p374 = scmp.ne.s32.totalorder %s365, %s366
      %p375 = scmp.eq.s32.totalorder %s40, 0
      %p376 = por %p374, %p375
      %p377 = scmp.ne.s32.totalorder %s365, %s366
      %p378 = scmp.eq.s32.totalorder %s41, 1
      %p379 = por %p377, %p378
      %p381 = scmp.ne.s32.totalorder %s366, %s380
      %p382 = scmp.eq.s32.totalorder %s41, 0
      %p383 = por %p381, %p382
      %s385 = sadd.s32 %s384, 1
      %p388 = scmp.eq.s32.totalorder %s35, 1
      %p389 = scmp.ne.s32.totalorder %s384, %s386
      %p390 = scmp.eq.s32.totalorder %s35, 0
      %p391 = por %p389, %p390
      %p392 = scmp.ne.s32.totalorder %s384, %s386
      %p393 = scmp.eq.s32.totalorder %s40, 1
      %p394 = por %p392, %p393
      %p395 = scmp.ne.s32.totalorder %s386, %s387
      %p396 = scmp.eq.s32.totalorder %s40, 0
      %p397 = por %p395, %p396
      %p398 = scmp.ne.s32.totalorder %s386, %s387
      %p399 = scmp.eq.s32.totalorder %s41, 1
      %p400 = por %p398, %p399
      %p402 = scmp.ne.s32.totalorder %s387, %s401
      %p403 = scmp.eq.s32.totalorder %s41, 0
      %p404 = por %p402, %p403
      %s406 = sadd.s32 %s405, 1
      %p409 = scmp.eq.s32.totalorder %s35, 1
      %p410 = scmp.ne.s32.totalorder %s405, %s407
      %p411 = scmp.eq.s32.totalorder %s35, 0
      %p412 = por %p410, %p411
      %p413 = scmp.ne.s32.totalorder %s405, %s407
      %p414 = scmp.eq.s32.totalorder %s40, 1
      %p415 = por %p413, %p414
      %p416 = scmp.ne.s32.totalorder %s407, %s408
      %p417 = scmp.eq.s32.totalorder %s40, 0
      %p418 = por %p416, %p417
      %p419 = scmp.ne.s32.totalorder %s407, %s408
      %p420 = scmp.eq.s32.totalorder %s41, 1
      %p421 = por %p419, %p420
      %p423 = scmp.ne.s32.totalorder %s408, %s422
      %p424 = scmp.eq.s32.totalorder %s41, 0
      %p425 = por %p423, %p424
      %s427 = sadd.s32 %s426, 1
      %p430 = scmp.eq.s32.totalorder %s35, 1
      %p431 = scmp.ne.s32.totalorder %s426, %s428
      %p432 = scmp.eq.s32.totalorder %s35, 0
      %p433 = por %p431, %p432
      %p434 = scmp.ne.s32.totalorder %s426, %s428
      %p435 = scmp.eq.s32.totalorder %s40, 1
      %p436 = por %p434, %p435
      %p437 = scmp.ne.s32.totalorder %s428, %s429
      %p438 = scmp.eq.s32.totalorder %s40, 0
      %p439 = por %p437, %p438
      %p440 = scmp.ne.s32.totalorder %s428, %s429
      %p441 = scmp.eq.s32.totalorder %s41, 1
      %p442 = por %p440, %p441
      %p444 = scmp.ne.s32.totalorder %s429, %s443
      %p445 = scmp.eq.s32.totalorder %s41, 0
      %p446 = por %p444, %p445
      %s448 = sadd.s32 %s447, 1
      %p451 = scmp.eq.s32.totalorder %s35, 1
      %p452 = scmp.ne.s32.totalorder %s447, %s449
      %p453 = scmp.eq.s32.totalorder %s35, 0
      %p454 = por %p452, %p453
      %p455 = scmp.ne.s32.totalorder %s447, %s449
      %p456 = scmp.eq.s32.totalorder %s40, 1
      %p457 = por %p455, %p456
      %p458 = scmp.ne.s32.totalorder %s449, %s450
      %p459 = scmp.eq.s32.totalorder %s40, 0
      %p460 = por %p458, %p459
      %p461 = scmp.ne.s32.totalorder %s449, %s450
      %p462 = scmp.eq.s32.totalorder %s41, 1
      %p463 = por %p461, %p462
      %p465 = scmp.ne.s32.totalorder %s450, %s464
      %p466 = scmp.eq.s32.totalorder %s41, 0
      %p467 = por %p465, %p466
      %s469 = sadd.s32 %s468, 1
      %p472 = scmp.eq.s32.totalorder %s35, 1
      %p473 = scmp.ne.s32.totalorder %s468, %s470
      %p474 = scmp.eq.s32.totalorder %s35, 0
      %p475 = por %p473, %p474
      %p476 = scmp.ne.s32.totalorder %s468, %s470
      %p477 = scmp.eq.s32.totalorder %s40, 1
      %p478 = por %p476, %p477
      %p479 = scmp.ne.s32.totalorder %s470, %s471
      %p480 = scmp.eq.s32.totalorder %s40, 0
      %p481 = por %p479, %p480
      %p482 = scmp.ne.s32.totalorder %s470, %s471
      %p483 = scmp.eq.s32.totalorder %s41, 1
      %p484 = por %p482, %p483
      %p486 = scmp.ne.s32.totalorder %s471, %s485
      %p487 = scmp.eq.s32.totalorder %s41, 0
      %p488 = por %p486, %p487
      %s490 = sadd.s32 %s489, 1
      %p493 = scmp.eq.s32.totalorder %s35, 1
      %p494 = scmp.ne.s32.totalorder %s489, %s491
      %p495 = scmp.eq.s32.totalorder %s35, 0
      %p496 = por %p494, %p495
      %p497 = scmp.ne.s32.totalorder %s489, %s491
      %p498 = scmp.eq.s32.totalorder %s40, 1
      %p499 = por %p497, %p498
      %p500 = scmp.ne.s32.totalorder %s491, %s492
      %p501 = scmp.eq.s32.totalorder %s40, 0
      %p502 = por %p500, %p501
      %p503 = scmp.ne.s32.totalorder %s491, %s492
      %p504 = scmp.eq.s32.totalorder %s41, 1
      %p505 = por %p503, %p504
      %p507 = scmp.ne.s32.totalorder %s492, %s506
      %p508 = scmp.eq.s32.totalorder %s41, 0
      %p509 = por %p507, %p508
      %s510 = ssub.s32 %s35, %s42
      %p511 = scmp.eq.s32.totalorder %s510, 0
      %s513 = sadd.s32 %s512, 1
      %s514 = scalar_select %p511, %s512, %s513
      %p517 = pneg %p511
      %p518 = scmp.eq.s32.totalorder %s35, 1
      %p519 = por %p517, %p518
      %p520 = scmp.ne.s32.totalorder %s512, %s515
      %p521 = scmp.eq.s32.totalorder %s35, 0
      %p522 = por %p520, %p521
      %p523 = scmp.ne.s32.totalorder %s512, %s515
      %p524 = scmp.eq.s32.totalorder %s40, 1
      %p525 = por %p523, %p524
      %p526 = scmp.ne.s32.totalorder %s515, %s516
      %p527 = scmp.eq.s32.totalorder %s40, 0
      %p528 = por %p526, %p527
      %p529 = scmp.ne.s32.totalorder %s515, %s516
      %p530 = scmp.eq.s32.totalorder %s41, 1
      %p531 = por %p529, %p530
      %p533 = scmp.ne.s32.totalorder %s516, %s532
      %p534 = scmp.eq.s32.totalorder %s41, 0
      %p535 = por %p533, %p534
      %p536 = scmp.le.s32.totalorder 1, %s35
      %p537 = scmp.lt.s32.totalorder %s35, 3
      %p538 = pnand %p536, %p537
      %p539 = pneg %p538
      // Predicated region
      $region9: #{unet_tiny_rf.1} parent=5 // pred_check
        _
      $region10: #{unet_tiny_rf.1} parent=5 // pred_check_branch
        %541 = sbr.rel (%p538) target = $region12
      $region11: #{unet_tiny_rf.1} parent=5 // pred_region
        %s542 = ssub.s32 %s35, 1
        // Predicated region
        $region13: #{unet_tiny_rf.1} parent=11 // pred_check
          %p543 = pneg %p82
        $region14: #{unet_tiny_rf.1} parent=11 // pred_check_branch
          %545 = sbr.rel (%p543) target = $region16
        $region15: #{unet_tiny_rf.1} parent=11 // pred_region
          %s547 = ssub.s32 192, 192
          %548 = vsyncadd [#allocation3], %s547
          %s549 = sshll.u32 [#allocation2], 4
          %s550 = int_to_ptr.vmem [resolvable:$true] %s549
          %555 = dma.hbm_to_vmem [thread:$0]  %s1, 192, %s550, [#allocation3], 64, 64, 4
        $region16: #{unet_tiny_rf.1} parent=11 // pred_fallthru
          _
        // Predicated region
        $region17: #{unet_tiny_rf.1} parent=11 // pred_check
          %p556 = pneg %p103
        $region18: #{unet_tiny_rf.1} parent=11 // pred_check_branch
          %558 = sbr.rel (%p556) target = $region20
        $region19: #{unet_tiny_rf.1} parent=11 // pred_region
          %s560 = ssub.s32 2304, 2304
          %561 = vsyncadd [#allocation5], %s560
          %s562 = sshll.u32 [#allocation4], 4
          %s563 = int_to_ptr.vmem [resolvable:$true] %s562
          %568 = dma.hbm_to_vmem [thread:$0]  %s2, 2304, %s563, [#allocation5], 128, 128, 8
        $region20: #{unet_tiny_rf.1} parent=11 // pred_fallthru
          _
        // Predicated region
        $region21: #{unet_tiny_rf.1} parent=11 // pred_check
          %p569 = pneg %p124
        $region22: #{unet_tiny_rf.1} parent=11 // pred_check_branch
          %571 = sbr.rel (%p569) target = $region24
        $region23: #{unet_tiny_rf.1} parent=11 // pred_region
          %s573 = ssub.s32 64, 64
          %574 = vsyncadd [#allocation5], %s573
          %s576 = sshll.u32 [#allocation6], 4
          %s577 = int_to_ptr.vmem [resolvable:$true] %s576
          %579 = dma.hbm_to_vmem [thread:$0]  %s3, 64, %s577, [#allocation5]
        $region24: #{unet_tiny_rf.1} parent=11 // pred_fallthru
          _
        // Predicated region
        $region25: #{unet_tiny_rf.1} parent=11 // pred_check
          %p580 = pneg %p145
        $region26: #{unet_tiny_rf.1} parent=11 // pred_check_branch
          %582 = sbr.rel (%p580) target = $region28
        $region27: #{unet_tiny_rf.1} parent=11 // pred_region
          %s584 = ssub.s32 96, 96
          %585 = vsyncadd [#allocation8], %s584
          %s586 = sshll.u32 [#allocation7], 4
          %s587 = int_to_ptr.vmem [resolvable:$true] %s586
          %592 = dma.hbm_to_vmem [thread:$0]  %s4, 96, %s587, [#allocation8], 32, 32, 2
        $region28: #{unet_tiny_rf.1} parent=11 // pred_fallthru
          _
        // Predicated region
        $region29: #{unet_tiny_rf.1} parent=11 // pred_check
          %p593 = pneg %p166
        $region30: #{unet_tiny_rf.1} parent=11 // pred_check_branch
          %595 = sbr.rel (%p593) target = $region32
        $region31: #{unet_tiny_rf.1} parent=11 // pred_region
          _
        $region32: #{unet_tiny_rf.1} parent=11 // pred_fallthru
          _
        // Predicated region
        $region33: #{unet_tiny_rf.1} parent=11 // pred_check
          %p596 = pneg %p187
        $region34: #{unet_tiny_rf.1} parent=11 // pred_check_branch
          %598 = sbr.rel (%p596) target = $region36
        $region35: #{unet_tiny_rf.1} parent=11 // pred_region
          %s600 = ssub.s32 32, 32
          %601 = vsyncadd [#allocation8], %s600
          %s603 = sshll.u32 [#allocation9], 4
          %s604 = int_to_ptr.vmem [resolvable:$true] %s603
          %606 = dma.hbm_to_vmem [thread:$0]  %s6, 32, %s604, [#allocation8]
        $region36: #{unet_tiny_rf.1} parent=11 // pred_fallthru
          _
        // Predicated region
        $region37: #{unet_tiny_rf.1} parent=11 // pred_check
          %p607 = pneg %p208
        $region38: #{unet_tiny_rf.1} parent=11 // pred_check_branch
          %609 = sbr.rel (%p607) target = $region40
        $region39: #{unet_tiny_rf.1} parent=11 // pred_region
          %s611 = ssub.s32 48, 48
          %612 = vsyncadd [#allocation11], %s611
          %s613 = sshll.u32 [#allocation10], 4
          %s614 = int_to_ptr.vmem [resolvable:$true] %s613
          %619 = dma.hbm_to_vmem [thread:$0]  %s7, 48, %s614, [#allocation11], 16, 16, 1
        $region40: #{unet_tiny_rf.1} parent=11 // pred_fallthru
          _
        // Predicated region
        $region41: #{unet_tiny_rf.1} parent=11 // pred_check
          %p620 = pneg %p229
        $region42: #{unet_tiny_rf.1} parent=11 // pred_check_branch
          %622 = sbr.rel (%p620) target = $region44
        $region43: #{unet_tiny_rf.1} parent=11 // pred_region
          _
        $region44: #{unet_tiny_rf.1} parent=11 // pred_fallthru
          _
        // Predicated region
        $region45: #{unet_tiny_rf.1} parent=11 // pred_check
          %p623 = pneg %p250
        $region46: #{unet_tiny_rf.1} parent=11 // pred_check_branch
          %625 = sbr.rel (%p623) target = $region48
        $region47: #{unet_tiny_rf.1} parent=11 // pred_region
          %s627 = ssub.s32 32, 32
          %628 = vsyncadd [#allocation11], %s627
          %s630 = sshll.u32 [#allocation12], 4
          %s631 = int_to_ptr.vmem [resolvable:$true] %s630
          %633 = dma.hbm_to_vmem [thread:$0]  %s9, 32, %s631, [#allocation11]
        $region48: #{unet_tiny_rf.1} parent=11 // pred_fallthru
          _
        // Predicated region
        $region49: #{unet_tiny_rf.1} parent=11 // pred_check
          %p634 = pneg %p271
        $region50: #{unet_tiny_rf.1} parent=11 // pred_check_branch
          %636 = sbr.rel (%p634) target = $region52
        $region51: #{unet_tiny_rf.1} parent=11 // pred_region
          _
        $region52: #{unet_tiny_rf.1} parent=11 // pred_fallthru
          _
        // Predicated region
        $region53: #{unet_tiny_rf.1} parent=11 // pred_check
          %p637 = pneg %p292
        $region54: #{unet_tiny_rf.1} parent=11 // pred_check_branch
          %639 = sbr.rel (%p637) target = $region56
        $region55: #{unet_tiny_rf.1} parent=11 // pred_region
          %s641 = ssub.s32 1024, 1024
          %642 = vsyncadd [#allocation14], %s641
          %s643 = sshll.u32 [#allocation13], 4
          %s644 = int_to_ptr.vmem [resolvable:$true] %s643
          %649 = dma.hbm_to_vmem [thread:$0]  %s11, 1024, %s644, [#allocation14], 64, 64, 4
        $region56: #{unet_tiny_rf.1} parent=11 // pred_fallthru
          _
        // Predicated region
        $region57: #{unet_tiny_rf.1} parent=11 // pred_check
          %p650 = pneg %p313
        $region58: #{unet_tiny_rf.1} parent=11 // pred_check_branch
          %652 = sbr.rel (%p650) target = $region60
        $region59: #{unet_tiny_rf.1} parent=11 // pred_region
          _
        $region60: #{unet_tiny_rf.1} parent=11 // pred_fallthru
          _
        // Predicated region
        $region61: #{unet_tiny_rf.1} parent=11 // pred_check
          %p653 = pneg %p334
        $region62: #{unet_tiny_rf.1} parent=11 // pred_check_branch
          %655 = sbr.rel (%p653) target = $region64
        $region63: #{unet_tiny_rf.1} parent=11 // pred_region
          _
        $region64: #{unet_tiny_rf.1} parent=11 // pred_fallthru
          _
        // Predicated region
        $region65: #{unet_tiny_rf.1} parent=11 // pred_check
          %p656 = pneg %p355
        $region66: #{unet_tiny_rf.1} parent=11 // pred_check_branch
          %658 = sbr.rel (%p656) target = $region68
        $region67: #{unet_tiny_rf.1} parent=11 // pred_region
          %s660 = ssub.s32 4096, 4096
          %661 = vsyncadd [#allocation14], %s660
          %s662 = sshll.u32 [#allocation15], 4
          %s663 = int_to_ptr.vmem [resolvable:$true] %s662
          %668 = dma.hbm_to_vmem [thread:$0]  %s14, 4096, %s663, [#allocation14], 128, 128, 8
        $region68: #{unet_tiny_rf.1} parent=11 // pred_fallthru
          _
        // Predicated region
        $region69: #{unet_tiny_rf.1} parent=11 // pred_check
          %p669 = pneg %p376
        $region70: #{unet_tiny_rf.1} parent=11 // pred_check_branch
          %671 = sbr.rel (%p669) target = $region72
        $region71: #{unet_tiny_rf.1} parent=11 // pred_region
          %s673 = ssub.s32 32, 32
          %674 = vsyncadd [#allocation17], %s673
          %s676 = sshll.u32 [#allocation16], 4
          %s677 = int_to_ptr.vmem [resolvable:$true] %s676
          %679 = dma.hbm_to_vmem [thread:$0]  %s15, 32, %s677, [#allocation17]
        $region72: #{unet_tiny_rf.1} parent=11 // pred_fallthru
          _
        // Predicated region
        $region73: #{unet_tiny_rf.1} parent=11 // pred_check
          %p680 = pneg %p397
        $region74: #{unet_tiny_rf.1} parent=11 // pred_check_branch
          %682 = sbr.rel (%p680) target = $region76
        $region75: #{unet_tiny_rf.1} parent=11 // pred_region
          _
        $region76: #{unet_tiny_rf.1} parent=11 // pred_fallthru
          _
        // Predicated region
        $region77: #{unet_tiny_rf.1} parent=11 // pred_check
          %p683 = pneg %p418
        $region78: #{unet_tiny_rf.1} parent=11 // pred_check_branch
          %685 = sbr.rel (%p683) target = $region80
        $region79: #{unet_tiny_rf.1} parent=11 // pred_region
          _
        $region80: #{unet_tiny_rf.1} parent=11 // pred_fallthru
          _
        // Predicated region
        $region81: #{unet_tiny_rf.1} parent=11 // pred_check
          %p686 = pneg %p439
        $region82: #{unet_tiny_rf.1} parent=11 // pred_check_branch
          %688 = sbr.rel (%p686) target = $region84
        $region83: #{unet_tiny_rf.1} parent=11 // pred_region
          %s690 = ssub.s32 64, 64
          %691 = vsyncadd [#allocation17], %s690
          %s693 = sshll.u32 [#allocation18], 4
          %s694 = int_to_ptr.vmem [resolvable:$true] %s693
          %696 = dma.hbm_to_vmem [thread:$0]  %s18, 64, %s694, [#allocation17]
        $region84: #{unet_tiny_rf.1} parent=11 // pred_fallthru
          _
        // Predicated region
        $region85: #{unet_tiny_rf.1} parent=11 // pred_check
          %p697 = pneg %p460
        $region86: #{unet_tiny_rf.1} parent=11 // pred_check_branch
          %699 = sbr.rel (%p697) target = $region88
        $region87: #{unet_tiny_rf.1} parent=11 // pred_region
          %s701 = ssub.s32 384, 384
          %702 = vsyncadd [#allocation20], %s701
          %s703 = sshll.u32 [#allocation19], 4
          %s704 = int_to_ptr.vmem [resolvable:$true] %s703
          %709 = dma.hbm_to_vmem [thread:$0]  %s19, 384, %s704, [#allocation20], 64, 64, 4
        $region88: #{unet_tiny_rf.1} parent=11 // pred_fallthru
          _
        // Predicated region
        $region89: #{unet_tiny_rf.1} parent=11 // pred_check
          %p710 = pneg %p481
        $region90: #{unet_tiny_rf.1} parent=11 // pred_check_branch
          %712 = sbr.rel (%p710) target = $region92
        $region91: #{unet_tiny_rf.1} parent=11 // pred_region
          _
        $region92: #{unet_tiny_rf.1} parent=11 // pred_fallthru
          _
        // Predicated region
        $region93: #{unet_tiny_rf.1} parent=11 // pred_check
          %p713 = pneg %p502
        $region94: #{unet_tiny_rf.1} parent=11 // pred_check_branch
          %715 = sbr.rel (%p713) target = $region96
        $region95: #{unet_tiny_rf.1} parent=11 // pred_region
          %s717 = ssub.s32 16, 16
          %718 = vsyncadd [#allocation20], %s717
          %s720 = sshll.u32 [#allocation21], 4
          %s721 = int_to_ptr.vmem [resolvable:$true] %s720
          %723 = dma.hbm_to_vmem [thread:$0]  %s21, 16, %s721, [#allocation20]
        $region96: #{unet_tiny_rf.1} parent=11 // pred_fallthru
          _
      $region12: #{unet_tiny_rf.1} parent=5 // pred_fallthru
        _
      %p724 = scmp.lt.s32.totalorder %s35, 2
      // Predicated region
      $region97: #{unet_tiny_rf.1} parent=5 // pred_check
        %p725 = pneg %p724
      $region98: #{unet_tiny_rf.1} parent=5 // pred_check_branch
        %727 = sbr.rel (%p725) target = $region100
      $region99: #{unet_tiny_rf.1} parent=5 // pred_region
        // Predicated region
        $region101: #{unet_tiny_rf.1} parent=99 // pred_check
          %p728 = pneg %p55
        $region102: #{unet_tiny_rf.1} parent=99 // pred_check_branch
          %730 = sbr.rel (%p728) target = $region104
        $region103: #{unet_tiny_rf.1} parent=99 // pred_region
          %p731 = scmp.lt.s32.totalorder %s35, 1
          %s732 = scalar_select %p731, %s35, 1
          %s733 = smul.addr %s732, 2
          %s734 = smul.addr %s733, 8
          %s735 = scalar_lea.vmem %s0, %s734
        $region104: #{unet_tiny_rf.1} parent=99 // pred_fallthru
          _
      $region100: #{unet_tiny_rf.1} parent=5 // pred_fallthru
        _
      %p736 = scmp.le.s32.totalorder 1, %s35
      %p737 = scmp.lt.s32.totalorder %s35, 3
      %p738 = pnand %p736, %p737
      %p739 = pneg %p738
      // Predicated region
      $region105: #{unet_tiny_rf.1} parent=5 // pred_check
        _
      $region106: #{unet_tiny_rf.1} parent=5 // pred_check_branch
        %741 = sbr.rel (%p738) target = $region108
      $region107: #{unet_tiny_rf.1} parent=5 // pred_region
        %s742 = ssub.s32 %s35, 1
        // Predicated region
        $region109: #{unet_tiny_rf.1} parent=107 // pred_check
          %p743 = pneg %p82
        $region110: #{unet_tiny_rf.1} parent=107 // pred_check_branch
          %745 = sbr.rel (%p743) target = $region112
        $region111: #{unet_tiny_rf.1} parent=107 // pred_region
          %746 = dma.done [#allocation3], 192
        $region112: #{unet_tiny_rf.1} parent=107 // pred_fallthru
          _
        // Predicated region
        $region113: #{unet_tiny_rf.1} parent=107 // pred_check
          %p747 = pneg %p103
        $region114: #{unet_tiny_rf.1} parent=107 // pred_check_branch
          %749 = sbr.rel (%p747) target = $region116
        $region115: #{unet_tiny_rf.1} parent=107 // pred_region
          %750 = dma.done [#allocation5], 2304
        $region116: #{unet_tiny_rf.1} parent=107 // pred_fallthru
          _
        // Predicated region
        $region117: #{unet_tiny_rf.1} parent=107 // pred_check
          %p751 = pneg %p124
        $region118: #{unet_tiny_rf.1} parent=107 // pred_check_branch
          %753 = sbr.rel (%p751) target = $region120
        $region119: #{unet_tiny_rf.1} parent=107 // pred_region
          %754 = dma.done [#allocation5], 64
        $region120: #{unet_tiny_rf.1} parent=107 // pred_fallthru
          _
        // Predicated region
        $region121: #{unet_tiny_rf.1} parent=107 // pred_check
          %p755 = pneg %p145
        $region122: #{unet_tiny_rf.1} parent=107 // pred_check_branch
          %757 = sbr.rel (%p755) target = $region124
        $region123: #{unet_tiny_rf.1} parent=107 // pred_region
          %758 = dma.done [#allocation8], 96
        $region124: #{unet_tiny_rf.1} parent=107 // pred_fallthru
          _
        // Predicated region
        $region125: #{unet_tiny_rf.1} parent=107 // pred_check
          %p759 = pneg %p187
        $region126: #{unet_tiny_rf.1} parent=107 // pred_check_branch
          %761 = sbr.rel (%p759) target = $region128
        $region127: #{unet_tiny_rf.1} parent=107 // pred_region
          %762 = dma.done [#allocation8], 32
        $region128: #{unet_tiny_rf.1} parent=107 // pred_fallthru
          _
        // Predicated region
        $region129: #{unet_tiny_rf.1} parent=107 // pred_check
          %p763 = pneg %p208
        $region130: #{unet_tiny_rf.1} parent=107 // pred_check_branch
          %765 = sbr.rel (%p763) target = $region132
        $region131: #{unet_tiny_rf.1} parent=107 // pred_region
          %766 = dma.done [#allocation11], 48
        $region132: #{unet_tiny_rf.1} parent=107 // pred_fallthru
          _
        // Predicated region
        $region133: #{unet_tiny_rf.1} parent=107 // pred_check
          %p767 = pneg %p250
        $region134: #{unet_tiny_rf.1} parent=107 // pred_check_branch
          %769 = sbr.rel (%p767) target = $region136
        $region135: #{unet_tiny_rf.1} parent=107 // pred_region
          %770 = dma.done [#allocation11], 32
        $region136: #{unet_tiny_rf.1} parent=107 // pred_fallthru
          _
        // Predicated region
        $region137: #{unet_tiny_rf.1} parent=107 // pred_check
          %p771 = pneg %p292
        $region138: #{unet_tiny_rf.1} parent=107 // pred_check_branch
          %773 = sbr.rel (%p771) target = $region140
        $region139: #{unet_tiny_rf.1} parent=107 // pred_region
          %774 = dma.done [#allocation14], 1024
        $region140: #{unet_tiny_rf.1} parent=107 // pred_fallthru
          _
        // Predicated region
        $region141: #{unet_tiny_rf.1} parent=107 // pred_check
          %p775 = pneg %p355
        $region142: #{unet_tiny_rf.1} parent=107 // pred_check_branch
          %777 = sbr.rel (%p775) target = $region144
        $region143: #{unet_tiny_rf.1} parent=107 // pred_region
          %778 = dma.done [#allocation14], 4096
        $region144: #{unet_tiny_rf.1} parent=107 // pred_fallthru
          _
        // Predicated region
        $region145: #{unet_tiny_rf.1} parent=107 // pred_check
          %p779 = pneg %p376
        $region146: #{unet_tiny_rf.1} parent=107 // pred_check_branch
          %781 = sbr.rel (%p779) target = $region148
        $region147: #{unet_tiny_rf.1} parent=107 // pred_region
          %782 = dma.done [#allocation17], 32
        $region148: #{unet_tiny_rf.1} parent=107 // pred_fallthru
          _
        // Predicated region
        $region149: #{unet_tiny_rf.1} parent=107 // pred_check
          %p783 = pneg %p439
        $region150: #{unet_tiny_rf.1} parent=107 // pred_check_branch
          %785 = sbr.rel (%p783) target = $region152
        $region151: #{unet_tiny_rf.1} parent=107 // pred_region
          %786 = dma.done [#allocation17], 64
        $region152: #{unet_tiny_rf.1} parent=107 // pred_fallthru
          _
        // Predicated region
        $region153: #{unet_tiny_rf.1} parent=107 // pred_check
          %p787 = pneg %p460
        $region154: #{unet_tiny_rf.1} parent=107 // pred_check_branch
          %789 = sbr.rel (%p787) target = $region156
        $region155: #{unet_tiny_rf.1} parent=107 // pred_region
          %790 = dma.done [#allocation20], 384
        $region156: #{unet_tiny_rf.1} parent=107 // pred_fallthru
          _
        // Predicated region
        $region157: #{unet_tiny_rf.1} parent=107 // pred_check
          %p791 = pneg %p502
        $region158: #{unet_tiny_rf.1} parent=107 // pred_check_branch
          %793 = sbr.rel (%p791) target = $region160
        $region159: #{unet_tiny_rf.1} parent=107 // pred_region
          %794 = dma.done [#allocation20], 16
        $region160: #{unet_tiny_rf.1} parent=107 // pred_fallthru
          _
        %p795 = scmp.lt.s32.totalorder %s40, 1
        %s796 = scalar_select %p795, %s40, 1
        %s797 = smul.addr %s796, 2
        %s798 = smul.addr %s797, 8
        %s799 = scalar_lea.vmem %s0, %s798
        %p800 = pneg %p61
        %p801 = pneg %p58
        %p802 = pneg %p82
        %p803 = pneg %p79
        %p804 = pneg %p103
        %p805 = pneg %p100
        %p806 = pneg %p124
        %p807 = pneg %p121
        %p808 = pneg %p145
        %p809 = pneg %p142
        %p810 = pneg %p166
        %p811 = pneg %p163
        %p812 = pneg %p187
        %p813 = pneg %p184
        %p814 = pneg %p208
        %p815 = pneg %p205
        %p816 = pneg %p229
        %p817 = pneg %p226
        %p818 = pneg %p250
        %p819 = pneg %p247
        %p820 = pneg %p271
        %p821 = pneg %p268
        %p822 = pneg %p292
        %p823 = pneg %p289
        %p824 = pneg %p313
        %p825 = pneg %p310
        %p826 = pneg %p334
        %p827 = pneg %p331
        %p828 = pneg %p355
        %p829 = pneg %p352
        %p830 = pneg %p376
        %p831 = pneg %p373
        %p832 = pneg %p397
        %p833 = pneg %p394
        %p834 = pneg %p418
        %p835 = pneg %p415
        %p836 = pneg %p439
        %p837 = pneg %p436
        %p838 = pneg %p460
        %p839 = pneg %p457
        %p840 = pneg %p481
        %p841 = pneg %p478
        %p842 = pneg %p502
        %p843 = pneg %p499
        %p844 = pneg %p528
        %p845 = pneg %p525
        %p846 = scmp.lt.s32.totalorder %s40, 1
        %s847 = scalar_select %p846, %s40, 1
        %s848 = smul.addr %s847, 2
        %s849 = smul.addr %s848, 8
        %s850 = scalar_lea.vmem %s22, %s849
        %p851 = scmp.lt.s32.totalorder %s40, 1
        %s852 = scalar_select %p851, %s40, 1
        %s853 = smul.addr %s852, 2
        %s854 = smul.addr %s853, 8
        %s855 = scalar_lea.vmem %s0, %s854
        %p856 = scmp.lt.s32.totalorder %s40, 1
        %s857 = scalar_select %p856, %s40, 1
        %s858 = smul.addr %s857, 2
        %s859 = smul.addr %s858, 8
        %s860 = scalar_lea.vmem %s22, %s859
        %v862 = vld [vmem:[%s855] sm:$0xff]
        %v863 = vld [vmem:[%s855 + $0x8] sm:$0xff]
        %v864 = vpack.c.bf16 %v863, %v862
        %v865 = vld [vmem:[#allocation2] sm:$0xf]
        %vm866 = vcmask 130048
        %v868 = vsel %vm866, %v865, 0
        %870 = vmatprep.subr.bf16.mxu0 0
        %871 = vmatpush1.bf16.msra.mxu0 %v864
        %872 = vmatprep.subr.bf16.mxu0 0
        %873 = vmatpush1.bf16.msra.mxu0 0
        %874 = vmatprep.subr.bf16.mxu0 0
        %875 = vmatpush1.bf16.msra.mxu0 0
        %876 = vmatprep.subr.bf16.mxu0 0
        %877 = vmatpush1.bf16.msra.mxu0 0
        %878 = vmatprep.subr.bf16.mxu0 0
        %879 = vmatpush1.bf16.msra.mxu0 0
        %880 = vmatprep.subr.bf16.mxu0 0
        %881 = vmatpush1.bf16.msra.mxu0 0
        %882 = vmatprep.subr.bf16.mxu0 0
        %883 = vmatpush1.bf16.msra.mxu0 0
        %884 = vmatprep.subr.bf16.mxu0 0
        %885 = vmatpush1.bf16.msra.mxu0 0
        %886 = vmatprep.subr.bf16.mxu0 0
        %887 = vmatpush1.bf16.msra.mxu0 0
        %888 = vmatprep.subr.bf16.mxu0 0
        %889 = vmatpush1.bf16.msra.mxu0 0
        %890 = vmatprep.subr.bf16.mxu0 0
        %891 = vmatpush1.bf16.msra.mxu0 0
        %892 = vmatprep.subr.bf16.mxu0 0
        %893 = vmatpush1.bf16.msra.mxu0 0
        %894 = vmatprep.subr.bf16.mxu0 0
        %895 = vmatpush1.bf16.msra.mxu0 0
        %896 = vmatprep.subr.bf16.mxu0 0
        %897 = vmatpush1.bf16.msra.mxu0 0
        %898 = vmatprep.subr.bf16.mxu0 0
        %899 = vmatpush1.bf16.msra.mxu0 0
        %900 = vmatprep.subr.bf16.mxu0 0
        %901 = vmatpush1.bf16.msra.mxu0 0
        %902 = vmatprep.mubr.bf16.mxu0 0
        %903 = vmatmul.mubr.bf16.gmra.mrb[0].mxu0 %v868
        %v904 = vpop.f32.mrb[0].mxu0
        %v905 = vadd.f32 0.0, %v904
        %v906 = vpop.f32.mrb[0].mxu0
        %v907 = vpop.f32.mrb[0].mxu0
        %v908 = vpop.f32.mrb[0].mxu0
        %909 = vdwg.mxu0
        %v910 = vpack.c.bf16 %v905, %v905
        %v911 = vld [vmem:[#allocation4] sm:$0xff]
        %v912 = vld [vmem:[#allocation4 + $0x8] sm:$0xff]
        %v913 = vld [vmem:[#allocation4 + $0x10] sm:$0xff]
        %v914 = vld [vmem:[#allocation4 + $0x18] sm:$0xff]
        %v915 = vld [vmem:[#allocation4 + $0x20] sm:$0xff]
        %v916 = vld [vmem:[#allocation4 + $0x28] sm:$0xff]
        %s917 = scalar_lea.vmem [#allocation2], 4
        %v918 = vld [vmem:[%s917] sm:$0xf]
        %v920 = vsel %vm866, %v918, 0
        %922 = vmatprep.subr.bf16.mxu0 0
        %923 = vmatpush1.bf16.msra.mxu0 %v864
        %924 = vmatprep.subr.bf16.mxu0 0
        %925 = vmatpush1.bf16.msra.mxu0 0
        %926 = vmatprep.subr.bf16.mxu0 0
        %927 = vmatpush1.bf16.msra.mxu0 0
        %928 = vmatprep.subr.bf16.mxu0 0
        %929 = vmatpush1.bf16.msra.mxu0 0
        %930 = vmatprep.subr.bf16.mxu0 0
        %931 = vmatpush1.bf16.msra.mxu0 0
        %932 = vmatprep.subr.bf16.mxu0 0
        %933 = vmatpush1.bf16.msra.mxu0 0
        %934 = vmatprep.subr.bf16.mxu0 0
        %935 = vmatpush1.bf16.msra.mxu0 0
        %936 = vmatprep.subr.bf16.mxu0 0
        %937 = vmatpush1.bf16.msra.mxu0 0
        %938 = vmatprep.subr.bf16.mxu0 0
        %939 = vmatpush1.bf16.msra.mxu0 0
        %940 = vmatprep.subr.bf16.mxu0 0
        %941 = vmatpush1.bf16.msra.mxu0 0
        %942 = vmatprep.subr.bf16.mxu0 0
        %943 = vmatpush1.bf16.msra.mxu0 0
        %944 = vmatprep.subr.bf16.mxu0 0
        %945 = vmatpush1.bf16.msra.mxu0 0
        %946 = vmatprep.subr.bf16.mxu0 0
        %947 = vmatpush1.bf16.msra.mxu0 0
        %948 = vmatprep.subr.bf16.mxu0 0
        %949 = vmatpush1.bf16.msra.mxu0 0
        %950 = vmatprep.subr.bf16.mxu0 0
        %951 = vmatpush1.bf16.msra.mxu0 0
        %952 = vmatprep.subr.bf16.mxu0 0
        %953 = vmatpush1.bf16.msra.mxu0 0
        %954 = vmatprep.mubr.bf16.mxu0 0
        %955 = vmatmul.mubr.bf16.gmra.mrb[0].mxu0 %v920
        %v956 = vpop.f32.mrb[0].mxu0
        %v957 = vadd.f32 0.0, %v956
        %v958 = vpop.f32.mrb[0].mxu0
        %v959 = vpop.f32.mrb[0].mxu0
        %v960 = vpop.f32.mrb[0].mxu0
        %961 = vdwg.mxu0
        %v962 = vpack.c.bf16 %v957, %v957
        %s963 = scalar_lea.vmem [#allocation4], 48
        %v964 = vld [vmem:[%s963] sm:$0xff]
        %v965 = vld [vmem:[%s963 + $0x8] sm:$0xff]
        %v966 = vld [vmem:[%s963 + $0x10] sm:$0xff]
        %v967 = vld [vmem:[%s963 + $0x18] sm:$0xff]
        %v968 = vld [vmem:[%s963 + $0x20] sm:$0xff]
        %v969 = vld [vmem:[%s963 + $0x28] sm:$0xff]
        %v976 = vunpack.c.l.b16 %v964
        %v977 = vunpack.c.h.b16 %v964
        %v978 = vunpack.c.l.b16 %v965
        %v979 = vunpack.c.h.b16 %v965
        %v980 = vunpack.c.l.b16 %v966
        %v981 = vunpack.c.h.b16 %v966
        %v982 = vunpack.c.l.b16 %v967
        %v983 = vunpack.c.h.b16 %v967
        %v984 = vunpack.c.l.b16 %v968
        %v985 = vunpack.c.h.b16 %v968
        %v986 = vunpack.c.l.b16 %v969
        %v987 = vunpack.c.h.b16 %v969
        %v988 = vpack.c.b16 %v978, %v976
        %v989 = vpack.c.b16 %v979, %v977
        %v990 = vpack.c.b16 %v982, %v980
        %v991 = vpack.c.b16 %v983, %v981
        %v992 = vpack.c.b16 %v986, %v984
        %v993 = vpack.c.b16 %v987, %v985
        %vm1000 = vcmask 392192
        %v1002 = vsel %vm1000, %v962, 0
        %1004 = vmatprep.subr.bf16.mxu0 %v989
        %1005 = vmatpush1.bf16.msra.mxu0 %v988
        %1006 = vmatprep.subr.bf16.mxu0 %v991
        %1007 = vmatpush1.bf16.msra.mxu0 %v990
        %1008 = vmatprep.subr.bf16.mxu0 %v993
        %1009 = vmatpush1.bf16.msra.mxu0 %v992
        %1010 = vmatprep.subr.bf16.mxu0 0
        %1011 = vmatpush1.bf16.msra.mxu0 0
        %1012 = vmatprep.subr.bf16.mxu0 0
        %1013 = vmatpush1.bf16.msra.mxu0 0
        %1014 = vmatprep.subr.bf16.mxu0 0
        %1015 = vmatpush1.bf16.msra.mxu0 0
        %1016 = vmatprep.subr.bf16.mxu0 0
        %1017 = vmatpush1.bf16.msra.mxu0 0
        %1018 = vmatprep.subr.bf16.mxu0 0
        %1019 = vmatpush1.bf16.msra.mxu0 0
        %1020 = vmatprep.subr.bf16.mxu0 0
        %1021 = vmatpush1.bf16.msra.mxu0 0
        %1022 = vmatprep.subr.bf16.mxu0 0
        %1023 = vmatpush1.bf16.msra.mxu0 0
        %1024 = vmatprep.subr.bf16.mxu0 0
        %1025 = vmatpush1.bf16.msra.mxu0 0
        %1026 = vmatprep.subr.bf16.mxu0 0
        %1027 = vmatpush1.bf16.msra.mxu0 0
        %1028 = vmatprep.subr.bf16.mxu0 0
        %1029 = vmatpush1.bf16.msra.mxu0 0
        %1030 = vmatprep.subr.bf16.mxu0 0
        %1031 = vmatpush1.bf16.msra.mxu0 0
        %1032 = vmatprep.subr.bf16.mxu0 0
        %1033 = vmatpush1.bf16.msra.mxu0 0
        %1034 = vmatprep.subr.bf16.mxu0 0
        %1035 = vmatpush1.bf16.msra.mxu0 0
        %1036 = vmatprep.mubr.bf16.mxu0 0
        %1037 = vmatmul.mubr.bf16.gmra.mrb[0].mxu0 %v1002
        %v1038 = vpop.f32.mrb[0].mxu0
        %v1039 = vadd.f32 0.0, %v1038
        %v1040 = vpop.f32.mrb[0].mxu0
        %v1041 = vadd.f32 0.0, %v1040
        %v1042 = vpop.f32.mrb[0].mxu0
        %v1043 = vpop.f32.mrb[0].mxu0
        %1044 = vdwg.mxu0
        %v1051 = vunpack.c.l.b16 %v911
        %v1052 = vunpack.c.h.b16 %v911
        %v1053 = vunpack.c.l.b16 %v912
        %v1054 = vunpack.c.h.b16 %v912
        %v1055 = vunpack.c.l.b16 %v913
        %v1056 = vunpack.c.h.b16 %v913
        %v1057 = vunpack.c.l.b16 %v914
        %v1058 = vunpack.c.h.b16 %v914
        %v1059 = vunpack.c.l.b16 %v915
        %v1060 = vunpack.c.h.b16 %v915
        %v1061 = vunpack.c.l.b16 %v916
        %v1062 = vunpack.c.h.b16 %v916
        %v1063 = vpack.c.b16 %v1053, %v1051
        %v1064 = vpack.c.b16 %v1054, %v1052
        %v1065 = vpack.c.b16 %v1057, %v1055
        %v1066 = vpack.c.b16 %v1058, %v1056
        %v1067 = vpack.c.b16 %v1061, %v1059
        %v1068 = vpack.c.b16 %v1062, %v1060
        %v1076 = vsel %vm1000, %v910, 0
        %1078 = vmatprep.subr.bf16.mxu0 %v1064
        %1079 = vmatpush1.bf16.msra.mxu0 %v1063
        %1080 = vmatprep.subr.bf16.mxu0 %v1066
        %1081 = vmatpush1.bf16.msra.mxu0 %v1065
        %1082 = vmatprep.subr.bf16.mxu0 %v1068
        %1083 = vmatpush1.bf16.msra.mxu0 %v1067
        %1084 = vmatprep.subr.bf16.mxu0 0
        %1085 = vmatpush1.bf16.msra.mxu0 0
        %1086 = vmatprep.subr.bf16.mxu0 0
        %1087 = vmatpush1.bf16.msra.mxu0 0
        %1088 = vmatprep.subr.bf16.mxu0 0
        %1089 = vmatpush1.bf16.msra.mxu0 0
        %1090 = vmatprep.subr.bf16.mxu0 0
        %1091 = vmatpush1.bf16.msra.mxu0 0
        %1092 = vmatprep.subr.bf16.mxu0 0
        %1093 = vmatpush1.bf16.msra.mxu0 0
        %1094 = vmatprep.subr.bf16.mxu0 0
        %1095 = vmatpush1.bf16.msra.mxu0 0
        %1096 = vmatprep.subr.bf16.mxu0 0
        %1097 = vmatpush1.bf16.msra.mxu0 0
        %1098 = vmatprep.subr.bf16.mxu0 0
        %1099 = vmatpush1.bf16.msra.mxu0 0
        %1100 = vmatprep.subr.bf16.mxu0 0
        %1101 = vmatpush1.bf16.msra.mxu0 0
        %1102 = vmatprep.subr.bf16.mxu0 0
        %1103 = vmatpush1.bf16.msra.mxu0 0
        %1104 = vmatprep.subr.bf16.mxu0 0
        %1105 = vmatpush1.bf16.msra.mxu0 0
        %1106 = vmatprep.subr.bf16.mxu0 0
        %1107 = vmatpush1.bf16.msra.mxu0 0
        %1108 = vmatprep.subr.bf16.mxu0 0
        %1109 = vmatpush1.bf16.msra.mxu0 0
        %1110 = vmatprep.mubr.bf16.mxu0 0
        %1111 = vmatmul.mubr.bf16.gmra.mrb[0].mxu0 %v1076
        %v1112 = vpop.f32.mrb[0].mxu0
        %v1113 = vadd.f32 %v1039, %v1112
        %v1114 = vpop.f32.mrb[0].mxu0
        %v1115 = vadd.f32 %v1041, %v1114
        %v1116 = vpop.f32.mrb[0].mxu0
        %v1117 = vpop.f32.mrb[0].mxu0
        %1118 = vdwg.mxu0
        %s1119 = scalar_lea.vmem [#allocation2], 8
        %v1120 = vld [vmem:[%s1119] sm:$0xf]
        %v1122 = vsel %vm866, %v1120, 0
        %1124 = vmatprep.subr.bf16.mxu0 0
        %1125 = vmatpush1.bf16.msra.mxu0 %v864
        %1126 = vmatprep.subr.bf16.mxu0 0
        %1127 = vmatpush1.bf16.msra.mxu0 0
        %1128 = vmatprep.subr.bf16.mxu0 0
        %1129 = vmatpush1.bf16.msra.mxu0 0
        %1130 = vmatprep.subr.bf16.mxu0 0
        %1131 = vmatpush1.bf16.msra.mxu0 0
        %1132 = vmatprep.subr.bf16.mxu0 0
        %1133 = vmatpush1.bf16.msra.mxu0 0
        %1134 = vmatprep.subr.bf16.mxu0 0
        %1135 = vmatpush1.bf16.msra.mxu0 0
        %1136 = vmatprep.subr.bf16.mxu0 0
        %1137 = vmatpush1.bf16.msra.mxu0 0
        %1138 = vmatprep.subr.bf16.mxu0 0
        %1139 = vmatpush1.bf16.msra.mxu0 0
        %1140 = vmatprep.subr.bf16.mxu0 0
        %1141 = vmatpush1.bf16.msra.mxu0 0
        %1142 = vmatprep.subr.bf16.mxu0 0
        %1143 = vmatpush1.bf16.msra.mxu0 0
        %1144 = vmatprep.subr.bf16.mxu0 0
        %1145 = vmatpush1.bf16.msra.mxu0 0
        %1146 = vmatprep.subr.bf16.mxu0 0
        %1147 = vmatpush1.bf16.msra.mxu0 0
        %1148 = vmatprep.subr.bf16.mxu0 0
        %1149 = vmatpush1.bf16.msra.mxu0 0
        %1150 = vmatprep.subr.bf16.mxu0 0
        %1151 = vmatpush1.bf16.msra.mxu0 0
        %1152 = vmatprep.subr.bf16.mxu0 0
        %1153 = vmatpush1.bf16.msra.mxu0 0
        %1154 = vmatprep.subr.bf16.mxu0 0
        %1155 = vmatpush1.bf16.msra.mxu0 0
        %1156 = vmatprep.mubr.bf16.mxu0 0
        %1157 = vmatmul.mubr.bf16.gmra.mrb[0].mxu0 %v1122
        %v1158 = vpop.f32.mrb[0].mxu0
        %v1159 = vadd.f32 0.0, %v1158
        %v1160 = vpop.f32.mrb[0].mxu0
        %v1161 = vpop.f32.mrb[0].mxu0
        %v1162 = vpop.f32.mrb[0].mxu0
        %1163 = vdwg.mxu0
        %v1164 = vpack.c.bf16 %v1159, %v1159
        %s1165 = scalar_lea.vmem [#allocation4], 96
        %v1166 = vld [vmem:[%s1165] sm:$0xff]
        %v1167 = vld [vmem:[%s1165 + $0x8] sm:$0xff]
        %v1168 = vld [vmem:[%s1165 + $0x10] sm:$0xff]
        %v1169 = vld [vmem:[%s1165 + $0x18] sm:$0xff]
        %v1170 = vld [vmem:[%s1165 + $0x20] sm:$0xff]
        %v1171 = vld [vmem:[%s1165 + $0x28] sm:$0xff]
        %v1178 = vunpack.c.l.b16 %v1166
        %v1179 = vunpack.c.h.b16 %v1166
        %v1180 = vunpack.c.l.b16 %v1167
        %v1181 = vunpack.c.h.b16 %v1167
        %v1182 = vunpack.c.l.b16 %v1168
        %v1183 = vunpack.c.h.b16 %v1168
        %v1184 = vunpack.c.l.b16 %v1169
        %v1185 = vunpack.c.h.b16 %v1169
        %v1186 = vunpack.c.l.b16 %v1170
        %v1187 = vunpack.c.h.b16 %v1170
        %v1188 = vunpack.c.l.b16 %v1171
        %v1189 = vunpack.c.h.b16 %v1171
        %v1190 = vpack.c.b16 %v1180, %v1178
        %v1191 = vpack.c.b16 %v1181, %v1179
        %v1192 = vpack.c.b16 %v1184, %v1182
        %v1193 = vpack.c.b16 %v1185, %v1183
        %v1194 = vpack.c.b16 %v1188, %v1186
        %v1195 = vpack.c.b16 %v1189, %v1187
        %v1203 = vsel %vm1000, %v1164, 0
        %1205 = vmatprep.subr.bf16.mxu0 %v1191
        %1206 = vmatpush1.bf16.msra.mxu0 %v1190
        %1207 = vmatprep.subr.bf16.mxu0 %v1193
        %1208 = vmatpush1.bf16.msra.mxu0 %v1192
        %1209 = vmatprep.subr.bf16.mxu0 %v1195
        %1210 = vmatpush1.bf16.msra.mxu0 %v1194
        %1211 = vmatprep.subr.bf16.mxu0 0
        %1212 = vmatpush1.bf16.msra.mxu0 0
        %1213 = vmatprep.subr.bf16.mxu0 0
        %1214 = vmatpush1.bf16.msra.mxu0 0
        %1215 = vmatprep.subr.bf16.mxu0 0
        %1216 = vmatpush1.bf16.msra.mxu0 0
        %1217 = vmatprep.subr.bf16.mxu0 0
        %1218 = vmatpush1.bf16.msra.mxu0 0
        %1219 = vmatprep.subr.bf16.mxu0 0
        %1220 = vmatpush1.bf16.msra.mxu0 0
        %1221 = vmatprep.subr.bf16.mxu0 0
        %1222 = vmatpush1.bf16.msra.mxu0 0
        %1223 = vmatprep.subr.bf16.mxu0 0
        %1224 = vmatpush1.bf16.msra.mxu0 0
        %1225 = vmatprep.subr.bf16.mxu0 0
        %1226 = vmatpush1.bf16.msra.mxu0 0
        %1227 = vmatprep.subr.bf16.mxu0 0
        %1228 = vmatpush1.bf16.msra.mxu0 0
        %1229 = vmatprep.subr.bf16.mxu0 0
        %1230 = vmatpush1.bf16.msra.mxu0 0
        %1231 = vmatprep.subr.bf16.mxu0 0
        %1232 = vmatpush1.bf16.msra.mxu0 0
        %1233 = vmatprep.subr.bf16.mxu0 0
        %1234 = vmatpush1.bf16.msra.mxu0 0
        %1235 = vmatprep.subr.bf16.mxu0 0
        %1236 = vmatpush1.bf16.msra.mxu0 0
        %1237 = vmatprep.mubr.bf16.mxu0 0
        %1238 = vmatmul.mubr.bf16.gmra.mrb[0].mxu0 %v1203
        %v1239 = vpop.f32.mrb[0].mxu0
        %v1240 = vadd.f32 0.0, %v1239
        %v1241 = vpop.f32.mrb[0].mxu0
        %v1242 = vadd.f32 0.0, %v1241
        %v1243 = vpop.f32.mrb[0].mxu0
        %v1244 = vpop.f32.mrb[0].mxu0
        %1245 = vdwg.mxu0
        %v1246 = vadd.f32 %v1113, %v1240
        %v1247 = vadd.f32 %v1115, %v1242
        %v1248 = vld [vmem:[#allocation6] ss:$2 sm:$0x3]
        %v1250 = vlaneseq
        %v1251 = vshrl.u32 %v1250, 7
        %v1252 = vsub.s32 0, %v1251
        %v1253 = vrot.slane %v1248, %v1252
        %v1254 = vlaneseq
        %v1255 = vshrl.u32 %v1254, 7
        %v1256 = vsub.s32 1, %v1255
        %v1257 = vrot.slane %v1248, %v1256
        %v1260 = vadd.f32 %v1246, %v1253
        %v1261 = vadd.f32 %v1247, %v1257
        %s1262 = scalar_lea.vmem [#allocation6], 1
        %v1263 = vld [vmem:[%s1262] ss:$2 sm:$0x3]
        %vm1264 = vcmp.gt.f32.partialorder %v1260, 0.0
        %vm1265 = vcmp.gt.f32.partialorder %v1261, 0.0
        %v1267 = vlaneseq
        %v1268 = vshrl.u32 %v1267, 7
        %v1269 = vsub.s32 0, %v1268
        %v1270 = vrot.slane %v1263, %v1269
        %v1271 = vlaneseq
        %v1272 = vshrl.u32 %v1271, 7
        %v1273 = vsub.s32 1, %v1272
        %v1274 = vrot.slane %v1263, %v1273
        %v1277 = vmul.f32 %v1260, %v1270
        %v1278 = vmul.f32 %v1261, %v1274
        %v1279 = vsel %vm1264, %v1260, %v1277
        %v1280 = vsel %vm1265, %v1261, %v1278
        %v1281 = vpack.c.bf16 %v1279, %v1279
        %v1282 = vpack.c.bf16 %v1280, %v1280
        %v1283 = vld [vmem:[#allocation7] sm:$0x3]
        %vm1284 = vcmask 64512
        %v1286 = vsel %vm1284, %v1283, 0
        %vm1288 = vcmask 1043456
        %v1290 = vsel %vm1288, %v1281, 0
        %v1293 = vsel %vm1288, %v1282, 0
        %1295 = vmatprep.subr.bf16.mxu0 %v1293
        %1296 = vmatpush1.bf16.msra.mxu0 %v1290
        %1297 = vmatprep.subr.bf16.mxu0 0
        %1298 = vmatpush1.bf16.msra.mxu0 0
        %1299 = vmatprep.subr.bf16.mxu0 0
        %1300 = vmatpush1.bf16.msra.mxu0 0
        %1301 = vmatprep.subr.bf16.mxu0 0
        %1302 = vmatpush1.bf16.msra.mxu0 0
        %1303 = vmatprep.subr.bf16.mxu0 0
        %1304 = vmatpush1.bf16.msra.mxu0 0
        %1305 = vmatprep.subr.bf16.mxu0 0
        %1306 = vmatpush1.bf16.msra.mxu0 0
        %1307 = vmatprep.subr.bf16.mxu0 0
        %1308 = vmatpush1.bf16.msra.mxu0 0
        %1309 = vmatprep.subr.bf16.mxu0 0
        %1310 = vmatpush1.bf16.msra.mxu0 0
        %1311 = vmatprep.subr.bf16.mxu0 0
        %1312 = vmatpush1.bf16.msra.mxu0 0
        %1313 = vmatprep.subr.bf16.mxu0 0
        %1314 = vmatpush1.bf16.msra.mxu0 0
        %1315 = vmatprep.subr.bf16.mxu0 0
        %1316 = vmatpush1.bf16.msra.mxu0 0
        %1317 = vmatprep.subr.bf16.mxu0 0
        %1318 = vmatpush1.bf16.msra.mxu0 0
        %1319 = vmatprep.subr.bf16.mxu0 0
        %1320 = vmatpush1.bf16.msra.mxu0 0
        %1321 = vmatprep.subr.bf16.mxu0 0
        %1322 = vmatpush1.bf16.msra.mxu0 0
        %1323 = vmatprep.subr.bf16.mxu0 0
        %1324 = vmatpush1.bf16.msra.mxu0 0
        %1325 = vmatprep.subr.bf16.mxu0 0
        %1326 = vmatpush1.bf16.msra.mxu0 0
        %1327 = vmatprep.mubr.bf16.mxu0 0
        %1328 = vmatmul.mubr.bf16.gmra.mrb[0].mxu0 %v1286
        %v1329 = vpop.f32.mrb[0].mxu0
        %v1330 = vadd.f32 0.0, %v1329
        %v1331 = vpop.f32.mrb[0].mxu0
        %v1332 = vadd.f32 0.0, %v1331
        %v1333 = vpop.f32.mrb[0].mxu0
        %v1334 = vpop.f32.mrb[0].mxu0
        %1335 = vdwg.mxu0
        %v1336 = vpack.c.bf16 %v1330, %v1330
        %v1337 = vpack.c.bf16 %v1332, %v1332
        %v1338 = vld [vmem:[%s5] sm:$0xf]
        %v1339 = vld [vmem:[%s5 + $0x4] sm:$0xf]
        %v1340 = vld [vmem:[%s5 + $0x8] sm:$0xf]
        %v1341 = vld [vmem:[%s5 + $0xc] sm:$0xf]
        %v1342 = vld [vmem:[%s5 + $0x10] sm:$0xf]
        %v1343 = vld [vmem:[%s5 + $0x14] sm:$0xf]
        %v1344 = vld [vmem:[%s5 + $0x18] sm:$0xf]
        %v1345 = vld [vmem:[%s5 + $0x1c] sm:$0xf]
        %v1346 = vld [vmem:[%s5 + $0x20] sm:$0xf]
        %v1347 = vld [vmem:[%s5 + $0x24] sm:$0xf]
        %v1348 = vld [vmem:[%s5 + $0x28] sm:$0xf]
        %v1349 = vld [vmem:[%s5 + $0x2c] sm:$0xf]
        %v1350 = vld [vmem:[%s5 + $0x30] sm:$0xf]
        %v1351 = vld [vmem:[%s5 + $0x34] sm:$0xf]
        %v1352 = vld [vmem:[%s5 + $0x38] sm:$0xf]
        %v1353 = vld [vmem:[%s5 + $0x3c] sm:$0xf]
        %v1354 = vld [vmem:[%s5 + $0x40] sm:$0xf]
        %v1355 = vld [vmem:[%s5 + $0x44] sm:$0xf]
        %v1356 = vld [vmem:[%s5 + $0x48] sm:$0xf]
        %v1357 = vld [vmem:[%s5 + $0x4c] sm:$0xf]
        %v1358 = vld [vmem:[%s5 + $0x50] sm:$0xf]
        %v1359 = vld [vmem:[%s5 + $0x54] sm:$0xf]
        %v1360 = vld [vmem:[%s5 + $0x58] sm:$0xf]
        %v1361 = vld [vmem:[%s5 + $0x5c] sm:$0xf]
        %v1362 = vld [vmem:[%s5 + $0x60] sm:$0xf]
        %v1363 = vld [vmem:[%s5 + $0x64] sm:$0xf]
        %v1364 = vld [vmem:[%s5 + $0x68] sm:$0xf]
        %v1365 = vld [vmem:[%s5 + $0x6c] sm:$0xf]
        %v1366 = vld [vmem:[%s5 + $0x70] sm:$0xf]
        %v1367 = vld [vmem:[%s5 + $0x74] sm:$0xf]
        %v1368 = vld [vmem:[%s5 + $0x78] sm:$0xf]
        %v1369 = vld [vmem:[%s5 + $0x7c] sm:$0xf]
        %s1370 = scalar_lea.vmem [#allocation7], 2
        %v1371 = vld [vmem:[%s1370] sm:$0x3]
        %v1373 = vsel %vm1284, %v1371, 0
        %1375 = vmatprep.subr.bf16.mxu0 %v1293
        %1376 = vmatpush1.bf16.msra.mxu0 %v1290
        %1377 = vmatprep.subr.bf16.mxu0 0
        %1378 = vmatpush1.bf16.msra.mxu0 0
        %1379 = vmatprep.subr.bf16.mxu0 0
        %1380 = vmatpush1.bf16.msra.mxu0 0
        %1381 = vmatprep.subr.bf16.mxu0 0
        %1382 = vmatpush1.bf16.msra.mxu0 0
        %1383 = vmatprep.subr.bf16.mxu0 0
        %1384 = vmatpush1.bf16.msra.mxu0 0
        %1385 = vmatprep.subr.bf16.mxu0 0
        %1386 = vmatpush1.bf16.msra.mxu0 0
        %1387 = vmatprep.subr.bf16.mxu0 0
        %1388 = vmatpush1.bf16.msra.mxu0 0
        %1389 = vmatprep.subr.bf16.mxu0 0
        %1390 = vmatpush1.bf16.msra.mxu0 0
        %1391 = vmatprep.subr.bf16.mxu0 0
        %1392 = vmatpush1.bf16.msra.mxu0 0
        %1393 = vmatprep.subr.bf16.mxu0 0
        %1394 = vmatpush1.bf16.msra.mxu0 0
        %1395 = vmatprep.subr.bf16.mxu0 0
        %1396 = vmatpush1.bf16.msra.mxu0 0
        %1397 = vmatprep.subr.bf16.mxu0 0
        %1398 = vmatpush1.bf16.msra.mxu0 0
        %1399 = vmatprep.subr.bf16.mxu0 0
        %1400 = vmatpush1.bf16.msra.mxu0 0
        %1401 = vmatprep.subr.bf16.mxu0 0
        %1402 = vmatpush1.bf16.msra.mxu0 0
        %1403 = vmatprep.subr.bf16.mxu0 0
        %1404 = vmatpush1.bf16.msra.mxu0 0
        %1405 = vmatprep.subr.bf16.mxu0 0
        %1406 = vmatpush1.bf16.msra.mxu0 0
        %1407 = vmatprep.mubr.bf16.mxu0 0
        %1408 = vmatmul.mubr.bf16.gmra.mrb[0].mxu0 %v1373
        %v1409 = vpop.f32.mrb[0].mxu0
        %v1410 = vadd.f32 0.0, %v1409
        %v1411 = vpop.f32.mrb[0].mxu0
        %v1412 = vadd.f32 0.0, %v1411
        %v1413 = vpop.f32.mrb[0].mxu0
        %v1414 = vpop.f32.mrb[0].mxu0
        %1415 = vdwg.mxu0
        %v1416 = vpack.c.bf16 %v1410, %v1410
        %v1417 = vpack.c.bf16 %v1412, %v1412
        %s1418 = scalar_lea.vmem %s5, 128
        %v1419 = vld [vmem:[%s1418] sm:$0xf]
        %v1420 = vld [vmem:[%s1418 + $0x4] sm:$0xf]
        %v1421 = vld [vmem:[%s1418 + $0x8] sm:$0xf]
        %v1422 = vld [vmem:[%s1418 + $0xc] sm:$0xf]
        %v1423 = vld [vmem:[%s1418 + $0x10] sm:$0xf]
        %v1424 = vld [vmem:[%s1418 + $0x14] sm:$0xf]
        %v1425 = vld [vmem:[%s1418 + $0x18] sm:$0xf]
        %v1426 = vld [vmem:[%s1418 + $0x1c] sm:$0xf]
        %v1427 = vld [vmem:[%s1418 + $0x20] sm:$0xf]
        %v1428 = vld [vmem:[%s1418 + $0x24] sm:$0xf]
        %v1429 = vld [vmem:[%s1418 + $0x28] sm:$0xf]
        %v1430 = vld [vmem:[%s1418 + $0x2c] sm:$0xf]
        %v1431 = vld [vmem:[%s1418 + $0x30] sm:$0xf]
        %v1432 = vld [vmem:[%s1418 + $0x34] sm:$0xf]
        %v1433 = vld [vmem:[%s1418 + $0x38] sm:$0xf]
        %v1434 = vld [vmem:[%s1418 + $0x3c] sm:$0xf]
        %v1435 = vld [vmem:[%s1418 + $0x40] sm:$0xf]
        %v1436 = vld [vmem:[%s1418 + $0x44] sm:$0xf]
        %v1437 = vld [vmem:[%s1418 + $0x48] sm:$0xf]
        %v1438 = vld [vmem:[%s1418 + $0x4c] sm:$0xf]
        %v1439 = vld [vmem:[%s1418 + $0x50] sm:$0xf]
        %v1440 = vld [vmem:[%s1418 + $0x54] sm:$0xf]
        %v1441 = vld [vmem:[%s1418 + $0x58] sm:$0xf]
        %v1442 = vld [vmem:[%s1418 + $0x5c] sm:$0xf]
        %v1443 = vld [vmem:[%s1418 + $0x60] sm:$0xf]
        %v1444 = vld [vmem:[%s1418 + $0x64] sm:$0xf]
        %v1445 = vld [vmem:[%s1418 + $0x68] sm:$0xf]
        %v1446 = vld [vmem:[%s1418 + $0x6c] sm:$0xf]
        %v1447 = vld [vmem:[%s1418 + $0x70] sm:$0xf]
        %v1448 = vld [vmem:[%s1418 + $0x74] sm:$0xf]
        %v1449 = vld [vmem:[%s1418 + $0x78] sm:$0xf]
        %v1450 = vld [vmem:[%s1418 + $0x7c] sm:$0xf]
        %v1483 = vunpack.c.l.b16 %v1419
        %v1484 = vunpack.c.l.b16 %v1420
        %v1485 = vunpack.c.l.b16 %v1421
        %v1486 = vunpack.c.l.b16 %v1422
        %v1487 = vunpack.c.l.b16 %v1423
        %v1488 = vunpack.c.l.b16 %v1424
        %v1489 = vunpack.c.l.b16 %v1425
        %v1490 = vunpack.c.l.b16 %v1426
        %v1491 = vunpack.c.l.b16 %v1427
        %v1492 = vunpack.c.l.b16 %v1428
        %v1493 = vunpack.c.l.b16 %v1429
        %v1494 = vunpack.c.l.b16 %v1430
        %v1495 = vunpack.c.l.b16 %v1431
        %v1496 = vunpack.c.l.b16 %v1432
        %v1497 = vunpack.c.l.b16 %v1433
        %v1498 = vunpack.c.l.b16 %v1434
        %v1499 = vunpack.c.l.b16 %v1435
        %v1500 = vunpack.c.l.b16 %v1436
        %v1501 = vunpack.c.l.b16 %v1437
        %v1502 = vunpack.c.l.b16 %v1438
        %v1503 = vunpack.c.l.b16 %v1439
        %v1504 = vunpack.c.l.b16 %v1440
        %v1505 = vunpack.c.l.b16 %v1441
        %v1506 = vunpack.c.l.b16 %v1442
        %v1507 = vunpack.c.l.b16 %v1443
        %v1508 = vunpack.c.l.b16 %v1444
        %v1509 = vunpack.c.l.b16 %v1445
        %v1510 = vunpack.c.l.b16 %v1446
        %v1511 = vunpack.c.l.b16 %v1447
        %v1512 = vunpack.c.l.b16 %v1448
        %v1513 = vunpack.c.l.b16 %v1449
        %v1514 = vunpack.c.l.b16 %v1450
        %v1515 = vpack.c.b16 %v1484, %v1483
        %v1516 = vpack.c.b16 %v1486, %v1485
        %v1517 = vpack.c.b16 %v1488, %v1487
        %v1518 = vpack.c.b16 %v1490, %v1489
        %v1519 = vpack.c.b16 %v1492, %v1491
        %v1520 = vpack.c.b16 %v1494, %v1493
        %v1521 = vpack.c.b16 %v1496, %v1495
        %v1522 = vpack.c.b16 %v1498, %v1497
        %v1523 = vpack.c.b16 %v1500, %v1499
        %v1524 = vpack.c.b16 %v1502, %v1501
        %v1525 = vpack.c.b16 %v1504, %v1503
        %v1526 = vpack.c.b16 %v1506, %v1505
        %v1527 = vpack.c.b16 %v1508, %v1507
        %v1528 = vpack.c.b16 %v1510, %v1509
        %v1529 = vpack.c.b16 %v1512, %v1511
        %v1530 = vpack.c.b16 %v1514, %v1513
        %1547 = vmatprep.subr.bf16.mxu0 0
        %1548 = vmatpush1.bf16.msra.mxu0 %v1515
        %1549 = vmatprep.subr.bf16.mxu0 0
        %1550 = vmatpush1.bf16.msra.mxu0 %v1516
        %1551 = vmatprep.subr.bf16.mxu0 0
        %1552 = vmatpush1.bf16.msra.mxu0 %v1517
        %1553 = vmatprep.subr.bf16.mxu0 0
        %1554 = vmatpush1.bf16.msra.mxu0 %v1518
        %1555 = vmatprep.subr.bf16.mxu0 0
        %1556 = vmatpush1.bf16.msra.mxu0 %v1519
        %1557 = vmatprep.subr.bf16.mxu0 0
        %1558 = vmatpush1.bf16.msra.mxu0 %v1520
        %1559 = vmatprep.subr.bf16.mxu0 0
        %1560 = vmatpush1.bf16.msra.mxu0 %v1521
        %1561 = vmatprep.subr.bf16.mxu0 0
        %1562 = vmatpush1.bf16.msra.mxu0 %v1522
        %1563 = vmatprep.subr.bf16.mxu0 0
        %1564 = vmatpush1.bf16.msra.mxu0 %v1523
        %1565 = vmatprep.subr.bf16.mxu0 0
        %1566 = vmatpush1.bf16.msra.mxu0 %v1524
        %1567 = vmatprep.subr.bf16.mxu0 0
        %1568 = vmatpush1.bf16.msra.mxu0 %v1525
        %1569 = vmatprep.subr.bf16.mxu0 0
        %1570 = vmatpush1.bf16.msra.mxu0 %v1526
        %1571 = vmatprep.subr.bf16.mxu0 0
        %1572 = vmatpush1.bf16.msra.mxu0 %v1527
        %1573 = vmatprep.subr.bf16.mxu0 0
        %1574 = vmatpush1.bf16.msra.mxu0 %v1528
        %1575 = vmatprep.subr.bf16.mxu0 0
        %1576 = vmatpush1.bf16.msra.mxu0 %v1529
        %1577 = vmatprep.subr.bf16.mxu0 0
        %1578 = vmatpush1.bf16.msra.mxu0 %v1530
        %1579 = vmatprep.mubr.bf16.mxu0 %v1417
        %1580 = vmatmul.mubr.bf16.gmra.mrb[0].mxu0 %v1416
        %v1581 = vpop.f32.mrb[0].mxu0
        %v1582 = vadd.f32 0.0, %v1581
        %v1583 = vpop.f32.mrb[0].mxu0
        %v1584 = vpop.f32.mrb[0].mxu0
        %v1585 = vpop.f32.mrb[0].mxu0
        %1586 = vdwg.mxu0
        %v1619 = vunpack.c.l.b16 %v1338
        %v1620 = vunpack.c.l.b16 %v1339
        %v1621 = vunpack.c.l.b16 %v1340
        %v1622 = vunpack.c.l.b16 %v1341
        %v1623 = vunpack.c.l.b16 %v1342
        %v1624 = vunpack.c.l.b16 %v1343
        %v1625 = vunpack.c.l.b16 %v1344
        %v1626 = vunpack.c.l.b16 %v1345
        %v1627 = vunpack.c.l.b16 %v1346
        %v1628 = vunpack.c.l.b16 %v1347
        %v1629 = vunpack.c.l.b16 %v1348
        %v1630 = vunpack.c.l.b16 %v1349
        %v1631 = vunpack.c.l.b16 %v1350
        %v1632 = vunpack.c.l.b16 %v1351
        %v1633 = vunpack.c.l.b16 %v1352
        %v1634 = vunpack.c.l.b16 %v1353
        %v1635 = vunpack.c.l.b16 %v1354
        %v1636 = vunpack.c.l.b16 %v1355
        %v1637 = vunpack.c.l.b16 %v1356
        %v1638 = vunpack.c.l.b16 %v1357
        %v1639 = vunpack.c.l.b16 %v1358
        %v1640 = vunpack.c.l.b16 %v1359
        %v1641 = vunpack.c.l.b16 %v1360
        %v1642 = vunpack.c.l.b16 %v1361
        %v1643 = vunpack.c.l.b16 %v1362
        %v1644 = vunpack.c.l.b16 %v1363
        %v1645 = vunpack.c.l.b16 %v1364
        %v1646 = vunpack.c.l.b16 %v1365
        %v1647 = vunpack.c.l.b16 %v1366
        %v1648 = vunpack.c.l.b16 %v1367
        %v1649 = vunpack.c.l.b16 %v1368
        %v1650 = vunpack.c.l.b16 %v1369
        %v1651 = vpack.c.b16 %v1620, %v1619
        %v1652 = vpack.c.b16 %v1622, %v1621
        %v1653 = vpack.c.b16 %v1624, %v1623
        %v1654 = vpack.c.b16 %v1626, %v1625
        %v1655 = vpack.c.b16 %v1628, %v1627
        %v1656 = vpack.c.b16 %v1630, %v1629
        %v1657 = vpack.c.b16 %v1632, %v1631
        %v1658 = vpack.c.b16 %v1634, %v1633
        %v1659 = vpack.c.b16 %v1636, %v1635
        %v1660 = vpack.c.b16 %v1638, %v1637
        %v1661 = vpack.c.b16 %v1640, %v1639
        %v1662 = vpack.c.b16 %v1642, %v1641
        %v1663 = vpack.c.b16 %v1644, %v1643
        %v1664 = vpack.c.b16 %v1646, %v1645
        %v1665 = vpack.c.b16 %v1648, %v1647
        %v1666 = vpack.c.b16 %v1650, %v1649
        %1683 = vmatprep.subr.bf16.mxu0 0
        %1684 = vmatpush1.bf16.msra.mxu0 %v1651
        %1685 = vmatprep.subr.bf16.mxu0 0
        %1686 = vmatpush1.bf16.msra.mxu0 %v1652
        %1687 = vmatprep.subr.bf16.mxu0 0
        %1688 = vmatpush1.bf16.msra.mxu0 %v1653
        %1689 = vmatprep.subr.bf16.mxu0 0
        %1690 = vmatpush1.bf16.msra.mxu0 %v1654
        %1691 = vmatprep.subr.bf16.mxu0 0
        %1692 = vmatpush1.bf16.msra.mxu0 %v1655
        %1693 = vmatprep.subr.bf16.mxu0 0
        %1694 = vmatpush1.bf16.msra.mxu0 %v1656
        %1695 = vmatprep.subr.bf16.mxu0 0
        %1696 = vmatpush1.bf16.msra.mxu0 %v1657
        %1697 = vmatprep.subr.bf16.mxu0 0
        %1698 = vmatpush1.bf16.msra.mxu0 %v1658
        %1699 = vmatprep.subr.bf16.mxu0 0
        %1700 = vmatpush1.bf16.msra.mxu0 %v1659
        %1701 = vmatprep.subr.bf16.mxu0 0
        %1702 = vmatpush1.bf16.msra.mxu0 %v1660
        %1703 = vmatprep.subr.bf16.mxu0 0
        %1704 = vmatpush1.bf16.msra.mxu0 %v1661
        %1705 = vmatprep.subr.bf16.mxu0 0
        %1706 = vmatpush1.bf16.msra.mxu0 %v1662
        %1707 = vmatprep.subr.bf16.mxu0 0
        %1708 = vmatpush1.bf16.msra.mxu0 %v1663
        %1709 = vmatprep.subr.bf16.mxu0 0
        %1710 = vmatpush1.bf16.msra.mxu0 %v1664
        %1711 = vmatprep.subr.bf16.mxu0 0
        %1712 = vmatpush1.bf16.msra.mxu0 %v1665
        %1713 = vmatprep.subr.bf16.mxu0 0
        %1714 = vmatpush1.bf16.msra.mxu0 %v1666
        %1715 = vmatprep.mubr.bf16.mxu0 %v1337
        %1716 = vmatmul.mubr.bf16.gmra.mrb[0].mxu0 %v1336
        %v1717 = vpop.f32.mrb[0].mxu0
        %v1718 = vadd.f32 %v1582, %v1717
        %v1719 = vpop.f32.mrb[0].mxu0
        %v1720 = vpop.f32.mrb[0].mxu0
        %v1721 = vpop.f32.mrb[0].mxu0
        %1722 = vdwg.mxu0
        %s1723 = scalar_lea.vmem [#allocation7], 4
        %v1724 = vld [vmem:[%s1723] sm:$0x3]
        %v1726 = vsel %vm1284, %v1724, 0
        %1728 = vmatprep.subr.bf16.mxu0 %v1293
        %1729 = vmatpush1.bf16.msra.mxu0 %v1290
        %1730 = vmatprep.subr.bf16.mxu0 0
        %1731 = vmatpush1.bf16.msra.mxu0 0
        %1732 = vmatprep.subr.bf16.mxu0 0
        %1733 = vmatpush1.bf16.msra.mxu0 0
        %1734 = vmatprep.subr.bf16.mxu0 0
        %1735 = vmatpush1.bf16.msra.mxu0 0
        %1736 = vmatprep.subr.bf16.mxu0 0
        %1737 = vmatpush1.bf16.msra.mxu0 0
        %1738 = vmatprep.subr.bf16.mxu0 0
        %1739 = vmatpush1.bf16.msra.mxu0 0
        %1740 = vmatprep.subr.bf16.mxu0 0
        %1741 = vmatpush1.bf16.msra.mxu0 0
        %1742 = vmatprep.subr.bf16.mxu0 0
        %1743 = vmatpush1.bf16.msra.mxu0 0
        %1744 = vmatprep.subr.bf16.mxu0 0
        %1745 = vmatpush1.bf16.msra.mxu0 0
        %1746 = vmatprep.subr.bf16.mxu0 0
        %1747 = vmatpush1.bf16.msra.mxu0 0
        %1748 = vmatprep.subr.bf16.mxu0 0
        %1749 = vmatpush1.bf16.msra.mxu0 0
        %1750 = vmatprep.subr.bf16.mxu0 0
        %1751 = vmatpush1.bf16.msra.mxu0 0
        %1752 = vmatprep.subr.bf16.mxu0 0
        %1753 = vmatpush1.bf16.msra.mxu0 0
        %1754 = vmatprep.subr.bf16.mxu0 0
        %1755 = vmatpush1.bf16.msra.mxu0 0
        %1756 = vmatprep.subr.bf16.mxu0 0
        %1757 = vmatpush1.bf16.msra.mxu0 0
        %1758 = vmatprep.subr.bf16.mxu0 0
        %1759 = vmatpush1.bf16.msra.mxu0 0
        %1760 = vmatprep.mubr.bf16.mxu0 0
        %1761 = vmatmul.mubr.bf16.gmra.mrb[0].mxu0 %v1726
        %v1762 = vpop.f32.mrb[0].mxu0
        %v1763 = vadd.f32 0.0, %v1762
        %v1764 = vpop.f32.mrb[0].mxu0
        %v1765 = vadd.f32 0.0, %v1764
        %v1766 = vpop.f32.mrb[0].mxu0
        %v1767 = vpop.f32.mrb[0].mxu0
        %1768 = vdwg.mxu0
        %v1769 = vpack.c.bf16 %v1763, %v1763
        %v1770 = vpack.c.bf16 %v1765, %v1765
        %s1771 = scalar_lea.vmem %s5, 256
        %v1772 = vld [vmem:[%s1771] sm:$0xf]
        %v1773 = vld [vmem:[%s1771 + $0x4] sm:$0xf]
        %v1774 = vld [vmem:[%s1771 + $0x8] sm:$0xf]
        %v1775 = vld [vmem:[%s1771 + $0xc] sm:$0xf]
        %v1776 = vld [vmem:[%s1771 + $0x10] sm:$0xf]
        %v1777 = vld [vmem:[%s1771 + $0x14] sm:$0xf]
        %v1778 = vld [vmem:[%s1771 + $0x18] sm:$0xf]
        %v1779 = vld [vmem:[%s1771 + $0x1c] sm:$0xf]
        %v1780 = vld [vmem:[%s1771 + $0x20] sm:$0xf]
        %v1781 = vld [vmem:[%s1771 + $0x24] sm:$0xf]
        %v1782 = vld [vmem:[%s1771 + $0x28] sm:$0xf]
        %v1783 = vld [vmem:[%s1771 + $0x2c] sm:$0xf]
        %v1784 = vld [vmem:[%s1771 + $0x30] sm:$0xf]
        %v1785 = vld [vmem:[%s1771 + $0x34] sm:$0xf]
        %v1786 = vld [vmem:[%s1771 + $0x38] sm:$0xf]
        %v1787 = vld [vmem:[%s1771 + $0x3c] sm:$0xf]
        %v1788 = vld [vmem:[%s1771 + $0x40] sm:$0xf]
        %v1789 = vld [vmem:[%s1771 + $0x44] sm:$0xf]
        %v1790 = vld [vmem:[%s1771 + $0x48] sm:$0xf]
        %v1791 = vld [vmem:[%s1771 + $0x4c] sm:$0xf]
        %v1792 = vld [vmem:[%s1771 + $0x50] sm:$0xf]
        %v1793 = vld [vmem:[%s1771 + $0x54] sm:$0xf]
        %v1794 = vld [vmem:[%s1771 + $0x58] sm:$0xf]
        %v1795 = vld [vmem:[%s1771 + $0x5c] sm:$0xf]
        %v1796 = vld [vmem:[%s1771 + $0x60] sm:$0xf]
        %v1797 = vld [vmem:[%s1771 + $0x64] sm:$0xf]
        %v1798 = vld [vmem:[%s1771 + $0x68] sm:$0xf]
        %v1799 = vld [vmem:[%s1771 + $0x6c] sm:$0xf]
        %v1800 = vld [vmem:[%s1771 + $0x70] sm:$0xf]
        %v1801 = vld [vmem:[%s1771 + $0x74] sm:$0xf]
        %v1802 = vld [vmem:[%s1771 + $0x78] sm:$0xf]
        %v1803 = vld [vmem:[%s1771 + $0x7c] sm:$0xf]
        %v1836 = vunpack.c.l.b16 %v1772
        %v1837 = vunpack.c.l.b16 %v1773
        %v1838 = vunpack.c.l.b16 %v1774
        %v1839 = vunpack.c.l.b16 %v1775
        %v1840 = vunpack.c.l.b16 %v1776
        %v1841 = vunpack.c.l.b16 %v1777
        %v1842 = vunpack.c.l.b16 %v1778
        %v1843 = vunpack.c.l.b16 %v1779
        %v1844 = vunpack.c.l.b16 %v1780
        %v1845 = vunpack.c.l.b16 %v1781
        %v1846 = vunpack.c.l.b16 %v1782
        %v1847 = vunpack.c.l.b16 %v1783
        %v1848 = vunpack.c.l.b16 %v1784
        %v1849 = vunpack.c.l.b16 %v1785
        %v1850 = vunpack.c.l.b16 %v1786
        %v1851 = vunpack.c.l.b16 %v1787
        %v1852 = vunpack.c.l.b16 %v1788
        %v1853 = vunpack.c.l.b16 %v1789
        %v1854 = vunpack.c.l.b16 %v1790
        %v1855 = vunpack.c.l.b16 %v1791
        %v1856 = vunpack.c.l.b16 %v1792
        %v1857 = vunpack.c.l.b16 %v1793
        %v1858 = vunpack.c.l.b16 %v1794
        %v1859 = vunpack.c.l.b16 %v1795
        %v1860 = vunpack.c.l.b16 %v1796
        %v1861 = vunpack.c.l.b16 %v1797
        %v1862 = vunpack.c.l.b16 %v1798
        %v1863 = vunpack.c.l.b16 %v1799
        %v1864 = vunpack.c.l.b16 %v1800
        %v1865 = vunpack.c.l.b16 %v1801
        %v1866 = vunpack.c.l.b16 %v1802
        %v1867 = vunpack.c.l.b16 %v1803
        %v1868 = vpack.c.b16 %v1837, %v1836
        %v1869 = vpack.c.b16 %v1839, %v1838
        %v1870 = vpack.c.b16 %v1841, %v1840
        %v1871 = vpack.c.b16 %v1843, %v1842
        %v1872 = vpack.c.b16 %v1845, %v1844
        %v1873 = vpack.c.b16 %v1847, %v1846
        %v1874 = vpack.c.b16 %v1849, %v1848
        %v1875 = vpack.c.b16 %v1851, %v1850
        %v1876 = vpack.c.b16 %v1853, %v1852
        %v1877 = vpack.c.b16 %v1855, %v1854
        %v1878 = vpack.c.b16 %v1857, %v1856
        %v1879 = vpack.c.b16 %v1859, %v1858
        %v1880 = vpack.c.b16 %v1861, %v1860
        %v1881 = vpack.c.b16 %v1863, %v1862
        %v1882 = vpack.c.b16 %v1865, %v1864
        %v1883 = vpack.c.b16 %v1867, %v1866
        %1900 = vmatprep.subr.bf16.mxu0 0
        %1901 = vmatpush1.bf16.msra.mxu0 %v1868
        %1902 = vmatprep.subr.bf16.mxu0 0
        %1903 = vmatpush1.bf16.msra.mxu0 %v1869
        %1904 = vmatprep.subr.bf16.mxu0 0
        %1905 = vmatpush1.bf16.msra.mxu0 %v1870
        %1906 = vmatprep.subr.bf16.mxu0 0
        %1907 = vmatpush1.bf16.msra.mxu0 %v1871
        %1908 = vmatprep.subr.bf16.mxu0 0
        %1909 = vmatpush1.bf16.msra.mxu0 %v1872
        %1910 = vmatprep.subr.bf16.mxu0 0
        %1911 = vmatpush1.bf16.msra.mxu0 %v1873
        %1912 = vmatprep.subr.bf16.mxu0 0
        %1913 = vmatpush1.bf16.msra.mxu0 %v1874
        %1914 = vmatprep.subr.bf16.mxu0 0
        %1915 = vmatpush1.bf16.msra.mxu0 %v1875
        %1916 = vmatprep.subr.bf16.mxu0 0
        %1917 = vmatpush1.bf16.msra.mxu0 %v1876
        %1918 = vmatprep.subr.bf16.mxu0 0
        %1919 = vmatpush1.bf16.msra.mxu0 %v1877
        %1920 = vmatprep.subr.bf16.mxu0 0
        %1921 = vmatpush1.bf16.msra.mxu0 %v1878
        %1922 = vmatprep.subr.bf16.mxu0 0
        %1923 = vmatpush1.bf16.msra.mxu0 %v1879
        %1924 = vmatprep.subr.bf16.mxu0 0
        %1925 = vmatpush1.bf16.msra.mxu0 %v1880
        %1926 = vmatprep.subr.bf16.mxu0 0
        %1927 = vmatpush1.bf16.msra.mxu0 %v1881
        %1928 = vmatprep.subr.bf16.mxu0 0
        %1929 = vmatpush1.bf16.msra.mxu0 %v1882
        %1930 = vmatprep.subr.bf16.mxu0 0
        %1931 = vmatpush1.bf16.msra.mxu0 %v1883
        %1932 = vmatprep.mubr.bf16.mxu0 %v1770
        %1933 = vmatmul.mubr.bf16.gmra.mrb[0].mxu0 %v1769
        %v1934 = vpop.f32.mrb[0].mxu0
        %v1935 = vadd.f32 0.0, %v1934
        %v1936 = vpop.f32.mrb[0].mxu0
        %v1937 = vpop.f32.mrb[0].mxu0
        %v1938 = vpop.f32.mrb[0].mxu0
        %1939 = vdwg.mxu0
        %v1940 = vadd.f32 %v1718, %v1935
        %v1941 = vld [vmem:[#allocation9] sm:$0x1]
        %v1942 = vlaneseq
        %v1943 = vshrl.u32 %v1942, 7
        %v1944 = vsub.s32 0, %v1943
        %v1945 = vrot.slane %v1941, %v1944
        %v1946 = vadd.f32 %v1940, %v1945
        %v1947 = vld [vmem:[#allocation9 + $0x1] sm:$0x1]
        %vm1948 = vcmp.gt.f32.partialorder %v1946, 0.0
        %v1949 = vlaneseq
        %v1950 = vshrl.u32 %v1949, 7
        %v1951 = vsub.s32 0, %v1950
        %v1952 = vrot.slane %v1947, %v1951
        %v1953 = vmul.f32 %v1946, %v1952
        %v1954 = vsel %vm1948, %v1946, %v1953
        %v1955 = vpack.c.bf16 %v1954, %v1954
        %v1956 = vld [vmem:[#allocation10] sm:$0x1]
        %vm1957 = vcmask 31744
        %v1959 = vsel %vm1957, %v1956, 0
        %vm1961 = vcmask 1041408
        %v1963 = vsel %vm1961, %v1955, 0
        %1965 = vmatprep.subr.bf16.mxu0 0
        %1966 = vmatpush1.bf16.msra.mxu0 %v1963
        %1967 = vmatprep.subr.bf16.mxu0 0
        %1968 = vmatpush1.bf16.msra.mxu0 0
        %1969 = vmatprep.subr.bf16.mxu0 0
        %1970 = vmatpush1.bf16.msra.mxu0 0
        %1971 = vmatprep.subr.bf16.mxu0 0
        %1972 = vmatpush1.bf16.msra.mxu0 0
        %1973 = vmatprep.subr.bf16.mxu0 0
        %1974 = vmatpush1.bf16.msra.mxu0 0
        %1975 = vmatprep.subr.bf16.mxu0 0
        %1976 = vmatpush1.bf16.msra.mxu0 0
        %1977 = vmatprep.subr.bf16.mxu0 0
        %1978 = vmatpush1.bf16.msra.mxu0 0
        %1979 = vmatprep.subr.bf16.mxu0 0
        %1980 = vmatpush1.bf16.msra.mxu0 0
        %1981 = vmatprep.subr.bf16.mxu0 0
        %1982 = vmatpush1.bf16.msra.mxu0 0
        %1983 = vmatprep.subr.bf16.mxu0 0
        %1984 = vmatpush1.bf16.msra.mxu0 0
        %1985 = vmatprep.subr.bf16.mxu0 0
        %1986 = vmatpush1.bf16.msra.mxu0 0
        %1987 = vmatprep.subr.bf16.mxu0 0
        %1988 = vmatpush1.bf16.msra.mxu0 0
        %1989 = vmatprep.subr.bf16.mxu0 0
        %1990 = vmatpush1.bf16.msra.mxu0 0
        %1991 = vmatprep.subr.bf16.mxu0 0
        %1992 = vmatpush1.bf16.msra.mxu0 0
        %1993 = vmatprep.subr.bf16.mxu0 0
        %1994 = vmatpush1.bf16.msra.mxu0 0
        %1995 = vmatprep.subr.bf16.mxu0 0
        %1996 = vmatpush1.bf16.msra.mxu0 0
        %1997 = vmatprep.mubr.bf16.mxu0 0
        %1998 = vmatmul.mubr.bf16.gmra.mrb[0].mxu0 %v1959
        %v1999 = vpop.f32.mrb[0].mxu0
        %v2000 = vadd.f32 0.0, %v1999
        %v2001 = vpop.f32.mrb[0].mxu0
        %v2002 = vpop.f32.mrb[0].mxu0
        %v2003 = vpop.f32.mrb[0].mxu0
        %2004 = vdwg.mxu0
        %v2005 = vpack.c.bf16 %v2000, %v2000
        %v2006 = vld [vmem:[%s8] sm:$0xf]
        %v2007 = vld [vmem:[%s8 + $0x4] sm:$0xf]
        %v2008 = vld [vmem:[%s8 + $0x8] sm:$0xf]
        %v2009 = vld [vmem:[%s8 + $0xc] sm:$0xf]
        %v2010 = vld [vmem:[%s8 + $0x10] sm:$0xf]
        %v2011 = vld [vmem:[%s8 + $0x14] sm:$0xf]
        %v2012 = vld [vmem:[%s8 + $0x18] sm:$0xf]
        %v2013 = vld [vmem:[%s8 + $0x1c] sm:$0xf]
        %v2014 = vld [vmem:[%s8 + $0x20] sm:$0xf]
        %v2015 = vld [vmem:[%s8 + $0x24] sm:$0xf]
        %v2016 = vld [vmem:[%s8 + $0x28] sm:$0xf]
        %v2017 = vld [vmem:[%s8 + $0x2c] sm:$0xf]
        %v2018 = vld [vmem:[%s8 + $0x30] sm:$0xf]
        %v2019 = vld [vmem:[%s8 + $0x34] sm:$0xf]
        %v2020 = vld [vmem:[%s8 + $0x38] sm:$0xf]
        %v2021 = vld [vmem:[%s8 + $0x3c] sm:$0xf]
        %s2022 = scalar_lea.vmem [#allocation10], 1
        %v2023 = vld [vmem:[%s2022] sm:$0x1]
        %v2025 = vsel %vm1957, %v2023, 0
        %2027 = vmatprep.subr.bf16.mxu0 0
        %2028 = vmatpush1.bf16.msra.mxu0 %v1963
        %2029 = vmatprep.subr.bf16.mxu0 0
        %2030 = vmatpush1.bf16.msra.mxu0 0
        %2031 = vmatprep.subr.bf16.mxu0 0
        %2032 = vmatpush1.bf16.msra.mxu0 0
        %2033 = vmatprep.subr.bf16.mxu0 0
        %2034 = vmatpush1.bf16.msra.mxu0 0
        %2035 = vmatprep.subr.bf16.mxu0 0
        %2036 = vmatpush1.bf16.msra.mxu0 0
        %2037 = vmatprep.subr.bf16.mxu0 0
        %2038 = vmatpush1.bf16.msra.mxu0 0
        %2039 = vmatprep.subr.bf16.mxu0 0
        %2040 = vmatpush1.bf16.msra.mxu0 0
        %2041 = vmatprep.subr.bf16.mxu0 0
        %2042 = vmatpush1.bf16.msra.mxu0 0
        %2043 = vmatprep.subr.bf16.mxu0 0
        %2044 = vmatpush1.bf16.msra.mxu0 0
        %2045 = vmatprep.subr.bf16.mxu0 0
        %2046 = vmatpush1.bf16.msra.mxu0 0
        %2047 = vmatprep.subr.bf16.mxu0 0
        %2048 = vmatpush1.bf16.msra.mxu0 0
        %2049 = vmatprep.subr.bf16.mxu0 0
        %2050 = vmatpush1.bf16.msra.mxu0 0
        %2051 = vmatprep.subr.bf16.mxu0 0
        %2052 = vmatpush1.bf16.msra.mxu0 0
        %2053 = vmatprep.subr.bf16.mxu0 0
        %2054 = vmatpush1.bf16.msra.mxu0 0
        %2055 = vmatprep.subr.bf16.mxu0 0
        %2056 = vmatpush1.bf16.msra.mxu0 0
        %2057 = vmatprep.subr.bf16.mxu0 0
        %2058 = vmatpush1.bf16.msra.mxu0 0
        %2059 = vmatprep.mubr.bf16.mxu0 0
        %2060 = vmatmul.mubr.bf16.gmra.mrb[0].mxu0 %v2025
        %v2061 = vpop.f32.mrb[0].mxu0
        %v2062 = vadd.f32 0.0, %v2061
        %v2063 = vpop.f32.mrb[0].mxu0
        %v2064 = vpop.f32.mrb[0].mxu0
        %v2065 = vpop.f32.mrb[0].mxu0
        %2066 = vdwg.mxu0
        %v2067 = vpack.c.bf16 %v2062, %v2062
        %s2068 = scalar_lea.vmem %s8, 64
        %v2069 = vld [vmem:[%s2068] sm:$0xf]
        %v2070 = vld [vmem:[%s2068 + $0x4] sm:$0xf]
        %v2071 = vld [vmem:[%s2068 + $0x8] sm:$0xf]
        %v2072 = vld [vmem:[%s2068 + $0xc] sm:$0xf]
        %v2073 = vld [vmem:[%s2068 + $0x10] sm:$0xf]
        %v2074 = vld [vmem:[%s2068 + $0x14] sm:$0xf]
        %v2075 = vld [vmem:[%s2068 + $0x18] sm:$0xf]
        %v2076 = vld [vmem:[%s2068 + $0x1c] sm:$0xf]
        %v2077 = vld [vmem:[%s2068 + $0x20] sm:$0xf]
        %v2078 = vld [vmem:[%s2068 + $0x24] sm:$0xf]
        %v2079 = vld [vmem:[%s2068 + $0x28] sm:$0xf]
        %v2080 = vld [vmem:[%s2068 + $0x2c] sm:$0xf]
        %v2081 = vld [vmem:[%s2068 + $0x30] sm:$0xf]
        %v2082 = vld [vmem:[%s2068 + $0x34] sm:$0xf]
        %v2083 = vld [vmem:[%s2068 + $0x38] sm:$0xf]
        %v2084 = vld [vmem:[%s2068 + $0x3c] sm:$0xf]
        %v2101 = vunpack.c.l.b16 %v2069
        %v2102 = vunpack.c.l.b16 %v2070
        %v2103 = vunpack.c.l.b16 %v2071
        %v2104 = vunpack.c.l.b16 %v2072
        %v2105 = vunpack.c.l.b16 %v2073
        %v2106 = vunpack.c.l.b16 %v2074
        %v2107 = vunpack.c.l.b16 %v2075
        %v2108 = vunpack.c.l.b16 %v2076
        %v2109 = vunpack.c.l.b16 %v2077
        %v2110 = vunpack.c.l.b16 %v2078
        %v2111 = vunpack.c.l.b16 %v2079
        %v2112 = vunpack.c.l.b16 %v2080
        %v2113 = vunpack.c.l.b16 %v2081
        %v2114 = vunpack.c.l.b16 %v2082
        %v2115 = vunpack.c.l.b16 %v2083
        %v2116 = vunpack.c.l.b16 %v2084
        %v2117 = vpack.c.b16 %v2102, %v2101
        %v2118 = vpack.c.b16 %v2104, %v2103
        %v2119 = vpack.c.b16 %v2106, %v2105
        %v2120 = vpack.c.b16 %v2108, %v2107
        %v2121 = vpack.c.b16 %v2110, %v2109
        %v2122 = vpack.c.b16 %v2112, %v2111
        %v2123 = vpack.c.b16 %v2114, %v2113
        %v2124 = vpack.c.b16 %v2116, %v2115
        %2133 = vmatprep.subr.bf16.mxu0 0
        %2134 = vmatpush1.bf16.msra.mxu0 %v2117
        %2135 = vmatprep.subr.bf16.mxu0 0
        %2136 = vmatpush1.bf16.msra.mxu0 %v2118
        %2137 = vmatprep.subr.bf16.mxu0 0
        %2138 = vmatpush1.bf16.msra.mxu0 %v2119
        %2139 = vmatprep.subr.bf16.mxu0 0
        %2140 = vmatpush1.bf16.msra.mxu0 %v2120
        %2141 = vmatprep.subr.bf16.mxu0 0
        %2142 = vmatpush1.bf16.msra.mxu0 %v2121
        %2143 = vmatprep.subr.bf16.mxu0 0
        %2144 = vmatpush1.bf16.msra.mxu0 %v2122
        %2145 = vmatprep.subr.bf16.mxu0 0
        %2146 = vmatpush1.bf16.msra.mxu0 %v2123
        %2147 = vmatprep.subr.bf16.mxu0 0
        %2148 = vmatpush1.bf16.msra.mxu0 %v2124
        %2149 = vmatprep.subr.bf16.mxu0 0
        %2150 = vmatpush1.bf16.msra.mxu0 0
        %2151 = vmatprep.subr.bf16.mxu0 0
        %2152 = vmatpush1.bf16.msra.mxu0 0
        %2153 = vmatprep.subr.bf16.mxu0 0
        %2154 = vmatpush1.bf16.msra.mxu0 0
        %2155 = vmatprep.subr.bf16.mxu0 0
        %2156 = vmatpush1.bf16.msra.mxu0 0
        %2157 = vmatprep.subr.bf16.mxu0 0
        %2158 = vmatpush1.bf16.msra.mxu0 0
        %2159 = vmatprep.subr.bf16.mxu0 0
        %2160 = vmatpush1.bf16.msra.mxu0 0
        %2161 = vmatprep.subr.bf16.mxu0 0
        %2162 = vmatpush1.bf16.msra.mxu0 0
        %2163 = vmatprep.subr.bf16.mxu0 0
        %2164 = vmatpush1.bf16.msra.mxu0 0
        %2165 = vmatprep.mubr.bf16.mxu0 0
        %2166 = vmatmul.mubr.bf16.gmra.mrb[0].mxu0 %v2067
        %v2167 = vpop.f32.mrb[0].mxu0
        %v2168 = vadd.f32 0.0, %v2167
        %v2169 = vpop.f32.mrb[0].mxu0
        %v2170 = vpop.f32.mrb[0].mxu0
        %v2171 = vpop.f32.mrb[0].mxu0
        %2172 = vdwg.mxu0
        %v2189 = vunpack.c.l.b16 %v2006
        %v2190 = vunpack.c.l.b16 %v2007
        %v2191 = vunpack.c.l.b16 %v2008
        %v2192 = vunpack.c.l.b16 %v2009
        %v2193 = vunpack.c.l.b16 %v2010
        %v2194 = vunpack.c.l.b16 %v2011
        %v2195 = vunpack.c.l.b16 %v2012
        %v2196 = vunpack.c.l.b16 %v2013
        %v2197 = vunpack.c.l.b16 %v2014
        %v2198 = vunpack.c.l.b16 %v2015
        %v2199 = vunpack.c.l.b16 %v2016
        %v2200 = vunpack.c.l.b16 %v2017
        %v2201 = vunpack.c.l.b16 %v2018
        %v2202 = vunpack.c.l.b16 %v2019
        %v2203 = vunpack.c.l.b16 %v2020
        %v2204 = vunpack.c.l.b16 %v2021
        %v2205 = vpack.c.b16 %v2190, %v2189
        %v2206 = vpack.c.b16 %v2192, %v2191
        %v2207 = vpack.c.b16 %v2194, %v2193
        %v2208 = vpack.c.b16 %v2196, %v2195
        %v2209 = vpack.c.b16 %v2198, %v2197
        %v2210 = vpack.c.b16 %v2200, %v2199
        %v2211 = vpack.c.b16 %v2202, %v2201
        %v2212 = vpack.c.b16 %v2204, %v2203
        %2221 = vmatprep.subr.bf16.mxu0 0
        %2222 = vmatpush1.bf16.msra.mxu0 %v2205
        %2223 = vmatprep.subr.bf16.mxu0 0
        %2224 = vmatpush1.bf16.msra.mxu0 %v2206
        %2225 = vmatprep.subr.bf16.mxu0 0
        %2226 = vmatpush1.bf16.msra.mxu0 %v2207
        %2227 = vmatprep.subr.bf16.mxu0 0
        %2228 = vmatpush1.bf16.msra.mxu0 %v2208
        %2229 = vmatprep.subr.bf16.mxu0 0
        %2230 = vmatpush1.bf16.msra.mxu0 %v2209
        %2231 = vmatprep.subr.bf16.mxu0 0
        %2232 = vmatpush1.bf16.msra.mxu0 %v2210
        %2233 = vmatprep.subr.bf16.mxu0 0
        %2234 = vmatpush1.bf16.msra.mxu0 %v2211
        %2235 = vmatprep.subr.bf16.mxu0 0
        %2236 = vmatpush1.bf16.msra.mxu0 %v2212
        %2237 = vmatprep.subr.bf16.mxu0 0
        %2238 = vmatpush1.bf16.msra.mxu0 0
        %2239 = vmatprep.subr.bf16.mxu0 0
        %2240 = vmatpush1.bf16.msra.mxu0 0
        %2241 = vmatprep.subr.bf16.mxu0 0
        %2242 = vmatpush1.bf16.msra.mxu0 0
        %2243 = vmatprep.subr.bf16.mxu0 0
        %2244 = vmatpush1.bf16.msra.mxu0 0
        %2245 = vmatprep.subr.bf16.mxu0 0
        %2246 = vmatpush1.bf16.msra.mxu0 0
        %2247 = vmatprep.subr.bf16.mxu0 0
        %2248 = vmatpush1.bf16.msra.mxu0 0
        %2249 = vmatprep.subr.bf16.mxu0 0
        %2250 = vmatpush1.bf16.msra.mxu0 0
        %2251 = vmatprep.subr.bf16.mxu0 0
        %2252 = vmatpush1.bf16.msra.mxu0 0
        %2253 = vmatprep.mubr.bf16.mxu0 0
        %2254 = vmatmul.mubr.bf16.gmra.mrb[0].mxu0 %v2005
        %v2255 = vpop.f32.mrb[0].mxu0
        %v2256 = vadd.f32 %v2168, %v2255
        %v2257 = vpop.f32.mrb[0].mxu0
        %v2258 = vpop.f32.mrb[0].mxu0
        %v2259 = vpop.f32.mrb[0].mxu0
        %2260 = vdwg.mxu0
        %s2261 = scalar_lea.vmem [#allocation10], 2
        %v2262 = vld [vmem:[%s2261] sm:$0x1]
        %v2264 = vsel %vm1957, %v2262, 0
        %2266 = vmatprep.subr.bf16.mxu0 0
        %2267 = vmatpush1.bf16.msra.mxu0 %v1963
        %2268 = vmatprep.subr.bf16.mxu0 0
        %2269 = vmatpush1.bf16.msra.mxu0 0
        %2270 = vmatprep.subr.bf16.mxu0 0
        %2271 = vmatpush1.bf16.msra.mxu0 0
        %2272 = vmatprep.subr.bf16.mxu0 0
        %2273 = vmatpush1.bf16.msra.mxu0 0
        %2274 = vmatprep.subr.bf16.mxu0 0
        %2275 = vmatpush1.bf16.msra.mxu0 0
        %2276 = vmatprep.subr.bf16.mxu0 0
        %2277 = vmatpush1.bf16.msra.mxu0 0
        %2278 = vmatprep.subr.bf16.mxu0 0
        %2279 = vmatpush1.bf16.msra.mxu0 0
        %2280 = vmatprep.subr.bf16.mxu0 0
        %2281 = vmatpush1.bf16.msra.mxu0 0
        %2282 = vmatprep.subr.bf16.mxu0 0
        %2283 = vmatpush1.bf16.msra.mxu0 0
        %2284 = vmatprep.subr.bf16.mxu0 0
        %2285 = vmatpush1.bf16.msra.mxu0 0
        %2286 = vmatprep.subr.bf16.mxu0 0
        %2287 = vmatpush1.bf16.msra.mxu0 0
        %2288 = vmatprep.subr.bf16.mxu0 0
        %2289 = vmatpush1.bf16.msra.mxu0 0
        %2290 = vmatprep.subr.bf16.mxu0 0
        %2291 = vmatpush1.bf16.msra.mxu0 0
        %2292 = vmatprep.subr.bf16.mxu0 0
        %2293 = vmatpush1.bf16.msra.mxu0 0
        %2294 = vmatprep.subr.bf16.mxu0 0
        %2295 = vmatpush1.bf16.msra.mxu0 0
        %2296 = vmatprep.subr.bf16.mxu0 0
        %2297 = vmatpush1.bf16.msra.mxu0 0
        %2298 = vmatprep.mubr.bf16.mxu0 0
        %2299 = vmatmul.mubr.bf16.gmra.mrb[0].mxu0 %v2264
        %v2300 = vpop.f32.mrb[0].mxu0
        %v2301 = vadd.f32 0.0, %v2300
        %v2302 = vpop.f32.mrb[0].mxu0
        %v2303 = vpop.f32.mrb[0].mxu0
        %v2304 = vpop.f32.mrb[0].mxu0
        %2305 = vdwg.mxu0
        %v2306 = vpack.c.bf16 %v2301, %v2301
        %s2307 = scalar_lea.vmem %s8, 128
        %v2308 = vld [vmem:[%s2307] sm:$0xf]
        %v2309 = vld [vmem:[%s2307 + $0x4] sm:$0xf]
        %v2310 = vld [vmem:[%s2307 + $0x8] sm:$0xf]
        %v2311 = vld [vmem:[%s2307 + $0xc] sm:$0xf]
        %v2312 = vld [vmem:[%s2307 + $0x10] sm:$0xf]
        %v2313 = vld [vmem:[%s2307 + $0x14] sm:$0xf]
        %v2314 = vld [vmem:[%s2307 + $0x18] sm:$0xf]
        %v2315 = vld [vmem:[%s2307 + $0x1c] sm:$0xf]
        %v2316 = vld [vmem:[%s2307 + $0x20] sm:$0xf]
        %v2317 = vld [vmem:[%s2307 + $0x24] sm:$0xf]
        %v2318 = vld [vmem:[%s2307 + $0x28] sm:$0xf]
        %v2319 = vld [vmem:[%s2307 + $0x2c] sm:$0xf]
        %v2320 = vld [vmem:[%s2307 + $0x30] sm:$0xf]
        %v2321 = vld [vmem:[%s2307 + $0x34] sm:$0xf]
        %v2322 = vld [vmem:[%s2307 + $0x38] sm:$0xf]
        %v2323 = vld [vmem:[%s2307 + $0x3c] sm:$0xf]
        %v2340 = vunpack.c.l.b16 %v2308
        %v2341 = vunpack.c.l.b16 %v2309
        %v2342 = vunpack.c.l.b16 %v2310
        %v2343 = vunpack.c.l.b16 %v2311
        %v2344 = vunpack.c.l.b16 %v2312
        %v2345 = vunpack.c.l.b16 %v2313
        %v2346 = vunpack.c.l.b16 %v2314
        %v2347 = vunpack.c.l.b16 %v2315
        %v2348 = vunpack.c.l.b16 %v2316
        %v2349 = vunpack.c.l.b16 %v2317
        %v2350 = vunpack.c.l.b16 %v2318
        %v2351 = vunpack.c.l.b16 %v2319
        %v2352 = vunpack.c.l.b16 %v2320
        %v2353 = vunpack.c.l.b16 %v2321
        %v2354 = vunpack.c.l.b16 %v2322
        %v2355 = vunpack.c.l.b16 %v2323
        %v2356 = vpack.c.b16 %v2341, %v2340
        %v2357 = vpack.c.b16 %v2343, %v2342
        %v2358 = vpack.c.b16 %v2345, %v2344
        %v2359 = vpack.c.b16 %v2347, %v2346
        %v2360 = vpack.c.b16 %v2349, %v2348
        %v2361 = vpack.c.b16 %v2351, %v2350
        %v2362 = vpack.c.b16 %v2353, %v2352
        %v2363 = vpack.c.b16 %v2355, %v2354
        %2372 = vmatprep.subr.bf16.mxu0 0
        %2373 = vmatpush1.bf16.msra.mxu0 %v2356
        %2374 = vmatprep.subr.bf16.mxu0 0
        %2375 = vmatpush1.bf16.msra.mxu0 %v2357
        %2376 = vmatprep.subr.bf16.mxu0 0
        %2377 = vmatpush1.bf16.msra.mxu0 %v2358
        %2378 = vmatprep.subr.bf16.mxu0 0
        %2379 = vmatpush1.bf16.msra.mxu0 %v2359
        %2380 = vmatprep.subr.bf16.mxu0 0
        %2381 = vmatpush1.bf16.msra.mxu0 %v2360
        %2382 = vmatprep.subr.bf16.mxu0 0
        %2383 = vmatpush1.bf16.msra.mxu0 %v2361
        %2384 = vmatprep.subr.bf16.mxu0 0
        %2385 = vmatpush1.bf16.msra.mxu0 %v2362
        %2386 = vmatprep.subr.bf16.mxu0 0
        %2387 = vmatpush1.bf16.msra.mxu0 %v2363
        %2388 = vmatprep.subr.bf16.mxu0 0
        %2389 = vmatpush1.bf16.msra.mxu0 0
        %2390 = vmatprep.subr.bf16.mxu0 0
        %2391 = vmatpush1.bf16.msra.mxu0 0
        %2392 = vmatprep.subr.bf16.mxu0 0
        %2393 = vmatpush1.bf16.msra.mxu0 0
        %2394 = vmatprep.subr.bf16.mxu0 0
        %2395 = vmatpush1.bf16.msra.mxu0 0
        %2396 = vmatprep.subr.bf16.mxu0 0
        %2397 = vmatpush1.bf16.msra.mxu0 0
        %2398 = vmatprep.subr.bf16.mxu0 0
        %2399 = vmatpush1.bf16.msra.mxu0 0
        %2400 = vmatprep.subr.bf16.mxu0 0
        %2401 = vmatpush1.bf16.msra.mxu0 0
        %2402 = vmatprep.subr.bf16.mxu0 0
        %2403 = vmatpush1.bf16.msra.mxu0 0
        %2404 = vmatprep.mubr.bf16.mxu0 0
        %2405 = vmatmul.mubr.bf16.gmra.mrb[0].mxu0 %v2306
        %v2406 = vpop.f32.mrb[0].mxu0
        %v2407 = vadd.f32 0.0, %v2406
        %v2408 = vpop.f32.mrb[0].mxu0
        %v2409 = vpop.f32.mrb[0].mxu0
        %v2410 = vpop.f32.mrb[0].mxu0
        %2411 = vdwg.mxu0
        %v2412 = vadd.f32 %v2256, %v2407
        %v2413 = vld [vmem:[#allocation12] sm:$0x1]
        %v2414 = vlaneseq
        %v2415 = vshrl.u32 %v2414, 7
        %v2416 = vsub.s32 0, %v2415
        %v2417 = vrot.slane %v2413, %v2416
        %v2418 = vadd.f32 %v2412, %v2417
        %v2419 = vld [vmem:[#allocation12 + $0x1] sm:$0x1]
        %vm2420 = vcmp.gt.f32.partialorder %v2418, 0.0
        %v2421 = vlaneseq
        %v2422 = vshrl.u32 %v2421, 7
        %v2423 = vsub.s32 0, %v2422
        %v2424 = vrot.slane %v2419, %v2423
        %v2425 = vmul.f32 %v2418, %v2424
        %v2426 = vsel %vm2420, %v2418, %v2425
        %v2427 = vpack.c.bf16 %v2426, %v2426
        %v2428 = vld [vmem:[#allocation13] sm:$0xf]
        %v2429 = vld [vmem:[#allocation13 + $0x4] sm:$0xf]
        %v2430 = vld [vmem:[#allocation13 + $0x8] sm:$0xf]
        %v2431 = vld [vmem:[#allocation13 + $0xc] sm:$0xf]
        %v2432 = vld [vmem:[#allocation13 + $0x10] sm:$0xf]
        %v2433 = vld [vmem:[#allocation13 + $0x14] sm:$0xf]
        %v2434 = vld [vmem:[#allocation13 + $0x18] sm:$0xf]
        %v2435 = vld [vmem:[#allocation13 + $0x1c] sm:$0xf]
        %v2444 = vunpack.c.l.b16 %v2428
        %v2445 = vunpack.c.l.b16 %v2429
        %v2446 = vunpack.c.l.b16 %v2430
        %v2447 = vunpack.c.l.b16 %v2431
        %v2448 = vunpack.c.l.b16 %v2432
        %v2449 = vunpack.c.l.b16 %v2433
        %v2450 = vunpack.c.l.b16 %v2434
        %v2451 = vunpack.c.l.b16 %v2435
        %v2452 = vpack.c.b16 %v2445, %v2444
        %v2453 = vpack.c.b16 %v2447, %v2446
        %v2454 = vpack.c.b16 %v2449, %v2448
        %v2455 = vpack.c.b16 %v2451, %v2450
        %vm2460 = vcmask 523264
        %v2462 = vsel %vm2460, %v2427, 0
        %2464 = vmatprep.subr.bf16.mxu0 0
        %2465 = vmatpush1.bf16.msra.mxu0 %v2452
        %2466 = vmatprep.subr.bf16.mxu0 0
        %2467 = vmatpush1.bf16.msra.mxu0 %v2453
        %2468 = vmatprep.subr.bf16.mxu0 0
        %2469 = vmatpush1.bf16.msra.mxu0 %v2454
        %2470 = vmatprep.subr.bf16.mxu0 0
        %2471 = vmatpush1.bf16.msra.mxu0 %v2455
        %2472 = vmatprep.subr.bf16.mxu0 0
        %2473 = vmatpush1.bf16.msra.mxu0 0
        %2474 = vmatprep.subr.bf16.mxu0 0
        %2475 = vmatpush1.bf16.msra.mxu0 0
        %2476 = vmatprep.subr.bf16.mxu0 0
        %2477 = vmatpush1.bf16.msra.mxu0 0
        %2478 = vmatprep.subr.bf16.mxu0 0
        %2479 = vmatpush1.bf16.msra.mxu0 0
        %2480 = vmatprep.subr.bf16.mxu0 0
        %2481 = vmatpush1.bf16.msra.mxu0 0
        %2482 = vmatprep.subr.bf16.mxu0 0
        %2483 = vmatpush1.bf16.msra.mxu0 0
        %2484 = vmatprep.subr.bf16.mxu0 0
        %2485 = vmatpush1.bf16.msra.mxu0 0
        %2486 = vmatprep.subr.bf16.mxu0 0
        %2487 = vmatpush1.bf16.msra.mxu0 0
        %2488 = vmatprep.subr.bf16.mxu0 0
        %2489 = vmatpush1.bf16.msra.mxu0 0
        %2490 = vmatprep.subr.bf16.mxu0 0
        %2491 = vmatpush1.bf16.msra.mxu0 0
        %2492 = vmatprep.subr.bf16.mxu0 0
        %2493 = vmatpush1.bf16.msra.mxu0 0
        %2494 = vmatprep.subr.bf16.mxu0 0
        %2495 = vmatpush1.bf16.msra.mxu0 0
        %2496 = vmatprep.mubr.bf16.mxu0 0
        %2497 = vmatmul.mubr.bf16.gmra.mrb[0].mxu0 %v2462
        %v2498 = vpop.f32.mrb[0].mxu0
        %v2499 = vadd.f32 0.0, %v2498
        %v2500 = vpop.f32.mrb[0].mxu0
        %v2501 = vpop.f32.mrb[0].mxu0
        %v2502 = vpop.f32.mrb[0].mxu0
        %2503 = vdwg.mxu0
        %v2504 = vld [vmem:[%s10] sm:$0x3]
        %v2505 = vpack.c.bf16 %v2499, %v2499
        %s2506 = scalar_lea.vmem [#allocation13], 32
        %v2507 = vld [vmem:[%s2506] sm:$0xf]
        %v2508 = vld [vmem:[%s2506 + $0x4] sm:$0xf]
        %v2509 = vld [vmem:[%s2506 + $0x8] sm:$0xf]
        %v2510 = vld [vmem:[%s2506 + $0xc] sm:$0xf]
        %v2511 = vld [vmem:[%s2506 + $0x10] sm:$0xf]
        %v2512 = vld [vmem:[%s2506 + $0x14] sm:$0xf]
        %v2513 = vld [vmem:[%s2506 + $0x18] sm:$0xf]
        %v2514 = vld [vmem:[%s2506 + $0x1c] sm:$0xf]
        %v2523 = vunpack.c.l.b16 %v2507
        %v2524 = vunpack.c.l.b16 %v2508
        %v2525 = vunpack.c.l.b16 %v2509
        %v2526 = vunpack.c.l.b16 %v2510
        %v2527 = vunpack.c.l.b16 %v2511
        %v2528 = vunpack.c.l.b16 %v2512
        %v2529 = vunpack.c.l.b16 %v2513
        %v2530 = vunpack.c.l.b16 %v2514
        %v2531 = vpack.c.b16 %v2524, %v2523
        %v2532 = vpack.c.b16 %v2526, %v2525
        %v2533 = vpack.c.b16 %v2528, %v2527
        %v2534 = vpack.c.b16 %v2530, %v2529
        %2539 = vmatprep.subr.bf16.mxu0 0
        %2540 = vmatpush1.bf16.msra.mxu0 %v2531
        %2541 = vmatprep.subr.bf16.mxu0 0
        %2542 = vmatpush1.bf16.msra.mxu0 %v2532
        %2543 = vmatprep.subr.bf16.mxu0 0
        %2544 = vmatpush1.bf16.msra.mxu0 %v2533
        %2545 = vmatprep.subr.bf16.mxu0 0
        %2546 = vmatpush1.bf16.msra.mxu0 %v2534
        %2547 = vmatprep.subr.bf16.mxu0 0
        %2548 = vmatpush1.bf16.msra.mxu0 0
        %2549 = vmatprep.subr.bf16.mxu0 0
        %2550 = vmatpush1.bf16.msra.mxu0 0
        %2551 = vmatprep.subr.bf16.mxu0 0
        %2552 = vmatpush1.bf16.msra.mxu0 0
        %2553 = vmatprep.subr.bf16.mxu0 0
        %2554 = vmatpush1.bf16.msra.mxu0 0
        %2555 = vmatprep.subr.bf16.mxu0 0
        %2556 = vmatpush1.bf16.msra.mxu0 0
        %2557 = vmatprep.subr.bf16.mxu0 0
        %2558 = vmatpush1.bf16.msra.mxu0 0
        %2559 = vmatprep.subr.bf16.mxu0 0
        %2560 = vmatpush1.bf16.msra.mxu0 0
        %2561 = vmatprep.subr.bf16.mxu0 0
        %2562 = vmatpush1.bf16.msra.mxu0 0
        %2563 = vmatprep.subr.bf16.mxu0 0
        %2564 = vmatpush1.bf16.msra.mxu0 0
        %2565 = vmatprep.subr.bf16.mxu0 0
        %2566 = vmatpush1.bf16.msra.mxu0 0
        %2567 = vmatprep.subr.bf16.mxu0 0
        %2568 = vmatpush1.bf16.msra.mxu0 0
        %2569 = vmatprep.subr.bf16.mxu0 0
        %2570 = vmatpush1.bf16.msra.mxu0 0
        %2571 = vmatprep.mubr.bf16.mxu0 0
        %2572 = vmatmul.mubr.bf16.gmra.mrb[0].mxu0 %v2462
        %v2573 = vpop.f32.mrb[0].mxu0
        %v2574 = vadd.f32 0.0, %v2573
        %v2575 = vpop.f32.mrb[0].mxu0
        %v2576 = vpop.f32.mrb[0].mxu0
        %v2577 = vpop.f32.mrb[0].mxu0
        %2578 = vdwg.mxu0
        %s2579 = scalar_lea.vmem %s10, 2
        %v2580 = vld [vmem:[%s2579] sm:$0x3]
        %v2581 = vpack.c.bf16 %v2574, %v2574
        %vm2582 = vcmask 15360
        %v2584 = vsel %vm2582, %v2580, 0
        %vm2586 = vcmask 1040384
        %v2588 = vsel %vm2586, %v2581, 0
        %2590 = vmatprep.subr.bf16.mxu0 0
        %2591 = vmatpush1.bf16.msra.mxu0 %v2588
        %2592 = vmatprep.subr.bf16.mxu0 0
        %2593 = vmatpush1.bf16.msra.mxu0 0
        %2594 = vmatprep.subr.bf16.mxu0 0
        %2595 = vmatpush1.bf16.msra.mxu0 0
        %2596 = vmatprep.subr.bf16.mxu0 0
        %2597 = vmatpush1.bf16.msra.mxu0 0
        %2598 = vmatprep.subr.bf16.mxu0 0
        %2599 = vmatpush1.bf16.msra.mxu0 0
        %2600 = vmatprep.subr.bf16.mxu0 0
        %2601 = vmatpush1.bf16.msra.mxu0 0
        %2602 = vmatprep.subr.bf16.mxu0 0
        %2603 = vmatpush1.bf16.msra.mxu0 0
        %2604 = vmatprep.subr.bf16.mxu0 0
        %2605 = vmatpush1.bf16.msra.mxu0 0
        %2606 = vmatprep.subr.bf16.mxu0 0
        %2607 = vmatpush1.bf16.msra.mxu0 0
        %2608 = vmatprep.subr.bf16.mxu0 0
        %2609 = vmatpush1.bf16.msra.mxu0 0
        %2610 = vmatprep.subr.bf16.mxu0 0
        %2611 = vmatpush1.bf16.msra.mxu0 0
        %2612 = vmatprep.subr.bf16.mxu0 0
        %2613 = vmatpush1.bf16.msra.mxu0 0
        %2614 = vmatprep.subr.bf16.mxu0 0
        %2615 = vmatpush1.bf16.msra.mxu0 0
        %2616 = vmatprep.subr.bf16.mxu0 0
        %2617 = vmatpush1.bf16.msra.mxu0 0
        %2618 = vmatprep.subr.bf16.mxu0 0
        %2619 = vmatpush1.bf16.msra.mxu0 0
        %2620 = vmatprep.subr.bf16.mxu0 0
        %2621 = vmatpush1.bf16.msra.mxu0 0
        %2622 = vmatprep.mubr.bf16.mxu0 0
        %2623 = vmatmul.mubr.bf16.gmra.mrb[0].mxu0 %v2584
        %v2624 = vpop.f32.mrb[0].mxu0
        %v2625 = vadd.f32 0.0, %v2624
        %v2626 = vpop.f32.mrb[0].mxu0
        %v2627 = vpop.f32.mrb[0].mxu0
        %v2628 = vpop.f32.mrb[0].mxu0
        %2629 = vdwg.mxu0
        %v2631 = vsel %vm2582, %v2504, 0
        %v2634 = vsel %vm2586, %v2505, 0
        %2636 = vmatprep.subr.bf16.mxu0 0
        %2637 = vmatpush1.bf16.msra.mxu0 %v2634
        %2638 = vmatprep.subr.bf16.mxu0 0
        %2639 = vmatpush1.bf16.msra.mxu0 0
        %2640 = vmatprep.subr.bf16.mxu0 0
        %2641 = vmatpush1.bf16.msra.mxu0 0
        %2642 = vmatprep.subr.bf16.mxu0 0
        %2643 = vmatpush1.bf16.msra.mxu0 0
        %2644 = vmatprep.subr.bf16.mxu0 0
        %2645 = vmatpush1.bf16.msra.mxu0 0
        %2646 = vmatprep.subr.bf16.mxu0 0
        %2647 = vmatpush1.bf16.msra.mxu0 0
        %2648 = vmatprep.subr.bf16.mxu0 0
        %2649 = vmatpush1.bf16.msra.mxu0 0
        %2650 = vmatprep.subr.bf16.mxu0 0
        %2651 = vmatpush1.bf16.msra.mxu0 0
        %2652 = vmatprep.subr.bf16.mxu0 0
        %2653 = vmatpush1.bf16.msra.mxu0 0
        %2654 = vmatprep.subr.bf16.mxu0 0
        %2655 = vmatpush1.bf16.msra.mxu0 0
        %2656 = vmatprep.subr.bf16.mxu0 0
        %2657 = vmatpush1.bf16.msra.mxu0 0
        %2658 = vmatprep.subr.bf16.mxu0 0
        %2659 = vmatpush1.bf16.msra.mxu0 0
        %2660 = vmatprep.subr.bf16.mxu0 0
        %2661 = vmatpush1.bf16.msra.mxu0 0
        %2662 = vmatprep.subr.bf16.mxu0 0
        %2663 = vmatpush1.bf16.msra.mxu0 0
        %2664 = vmatprep.subr.bf16.mxu0 0
        %2665 = vmatpush1.bf16.msra.mxu0 0
        %2666 = vmatprep.subr.bf16.mxu0 0
        %2667 = vmatpush1.bf16.msra.mxu0 0
        %2668 = vmatprep.mubr.bf16.mxu0 0
        %2669 = vmatmul.mubr.bf16.gmra.mrb[0].mxu0 %v2631
        %v2670 = vpop.f32.mrb[0].mxu0
        %v2671 = vadd.f32 %v2625, %v2670
        %v2672 = vpop.f32.mrb[0].mxu0
        %v2673 = vpop.f32.mrb[0].mxu0
        %v2674 = vpop.f32.mrb[0].mxu0
        %2675 = vdwg.mxu0
        %v2676 = vld [vmem:[%s12] sm:$0x1]
        %v2678 = vlaneseq
        %v2679 = vshrl.u32 %v2678, 7
        %v2680 = vsub.s32 0, %v2679
        %v2681 = vrot.slane %v2676, %v2680
        %v2683 = vadd.f32 %v2671, %v2681
        %v2684 = vadd.f32 %v2683, %v1954
        %v2685 = vpack.c.bf16 %v2684, %v2684
        %v2686 = vld [vmem:[#allocation15] sm:$0xff]
        %v2687 = vld [vmem:[#allocation15 + $0x8] sm:$0xff]
        %v2688 = vld [vmem:[#allocation15 + $0x10] sm:$0xff]
        %v2689 = vld [vmem:[#allocation15 + $0x18] sm:$0xff]
        %v2690 = vld [vmem:[#allocation15 + $0x20] sm:$0xff]
        %v2691 = vld [vmem:[#allocation15 + $0x28] sm:$0xff]
        %v2692 = vld [vmem:[#allocation15 + $0x30] sm:$0xff]
        %v2693 = vld [vmem:[#allocation15 + $0x38] sm:$0xff]
        %v2694 = vld [vmem:[#allocation15 + $0x40] sm:$0xff]
        %v2695 = vld [vmem:[#allocation15 + $0x48] sm:$0xff]
        %v2696 = vld [vmem:[#allocation15 + $0x50] sm:$0xff]
        %v2697 = vld [vmem:[#allocation15 + $0x58] sm:$0xff]
        %v2698 = vld [vmem:[#allocation15 + $0x60] sm:$0xff]
        %v2699 = vld [vmem:[#allocation15 + $0x68] sm:$0xff]
        %v2700 = vld [vmem:[#allocation15 + $0x70] sm:$0xff]
        %v2701 = vld [vmem:[#allocation15 + $0x78] sm:$0xff]
        %v2718 = vunpack.c.l.b16 %v2686
        %v2719 = vunpack.c.h.b16 %v2686
        %v2720 = vunpack.c.l.b16 %v2687
        %v2721 = vunpack.c.h.b16 %v2687
        %v2722 = vunpack.c.l.b16 %v2688
        %v2723 = vunpack.c.h.b16 %v2688
        %v2724 = vunpack.c.l.b16 %v2689
        %v2725 = vunpack.c.h.b16 %v2689
        %v2726 = vunpack.c.l.b16 %v2690
        %v2727 = vunpack.c.h.b16 %v2690
        %v2728 = vunpack.c.l.b16 %v2691
        %v2729 = vunpack.c.h.b16 %v2691
        %v2730 = vunpack.c.l.b16 %v2692
        %v2731 = vunpack.c.h.b16 %v2692
        %v2732 = vunpack.c.l.b16 %v2693
        %v2733 = vunpack.c.h.b16 %v2693
        %v2734 = vunpack.c.l.b16 %v2694
        %v2735 = vunpack.c.h.b16 %v2694
        %v2736 = vunpack.c.l.b16 %v2695
        %v2737 = vunpack.c.h.b16 %v2695
        %v2738 = vunpack.c.l.b16 %v2696
        %v2739 = vunpack.c.h.b16 %v2696
        %v2740 = vunpack.c.l.b16 %v2697
        %v2741 = vunpack.c.h.b16 %v2697
        %v2742 = vunpack.c.l.b16 %v2698
        %v2743 = vunpack.c.h.b16 %v2698
        %v2744 = vunpack.c.l.b16 %v2699
        %v2745 = vunpack.c.h.b16 %v2699
        %v2746 = vunpack.c.l.b16 %v2700
        %v2747 = vunpack.c.h.b16 %v2700
        %v2748 = vunpack.c.l.b16 %v2701
        %v2749 = vunpack.c.h.b16 %v2701
        %v2750 = vpack.c.b16 %v2720, %v2718
        %v2751 = vpack.c.b16 %v2721, %v2719
        %v2752 = vpack.c.b16 %v2724, %v2722
        %v2753 = vpack.c.b16 %v2725, %v2723
        %v2754 = vpack.c.b16 %v2728, %v2726
        %v2755 = vpack.c.b16 %v2729, %v2727
        %v2756 = vpack.c.b16 %v2732, %v2730
        %v2757 = vpack.c.b16 %v2733, %v2731
        %v2758 = vpack.c.b16 %v2736, %v2734
        %v2759 = vpack.c.b16 %v2737, %v2735
        %v2760 = vpack.c.b16 %v2740, %v2738
        %v2761 = vpack.c.b16 %v2741, %v2739
        %v2762 = vpack.c.b16 %v2744, %v2742
        %v2763 = vpack.c.b16 %v2745, %v2743
        %v2764 = vpack.c.b16 %v2748, %v2746
        %v2765 = vpack.c.b16 %v2749, %v2747
        %2782 = vmatprep.subr.bf16.mxu0 %v2751
        %2783 = vmatpush1.bf16.msra.mxu0 %v2750
        %2784 = vmatprep.subr.bf16.mxu0 %v2753
        %2785 = vmatpush1.bf16.msra.mxu0 %v2752
        %2786 = vmatprep.subr.bf16.mxu0 %v2755
        %2787 = vmatpush1.bf16.msra.mxu0 %v2754
        %2788 = vmatprep.subr.bf16.mxu0 %v2757
        %2789 = vmatpush1.bf16.msra.mxu0 %v2756
        %2790 = vmatprep.subr.bf16.mxu0 %v2759
        %2791 = vmatpush1.bf16.msra.mxu0 %v2758
        %2792 = vmatprep.subr.bf16.mxu0 %v2761
        %2793 = vmatpush1.bf16.msra.mxu0 %v2760
        %2794 = vmatprep.subr.bf16.mxu0 %v2763
        %2795 = vmatpush1.bf16.msra.mxu0 %v2762
        %2796 = vmatprep.subr.bf16.mxu0 %v2765
        %2797 = vmatpush1.bf16.msra.mxu0 %v2764
        %2798 = vmatprep.subr.bf16.mxu0 0
        %2799 = vmatpush1.bf16.msra.mxu0 0
        %2800 = vmatprep.subr.bf16.mxu0 0
        %2801 = vmatpush1.bf16.msra.mxu0 0
        %2802 = vmatprep.subr.bf16.mxu0 0
        %2803 = vmatpush1.bf16.msra.mxu0 0
        %2804 = vmatprep.subr.bf16.mxu0 0
        %2805 = vmatpush1.bf16.msra.mxu0 0
        %2806 = vmatprep.subr.bf16.mxu0 0
        %2807 = vmatpush1.bf16.msra.mxu0 0
        %2808 = vmatprep.subr.bf16.mxu0 0
        %2809 = vmatpush1.bf16.msra.mxu0 0
        %2810 = vmatprep.subr.bf16.mxu0 0
        %2811 = vmatpush1.bf16.msra.mxu0 0
        %2812 = vmatprep.subr.bf16.mxu0 0
        %2813 = vmatpush1.bf16.msra.mxu0 0
        %2814 = vmatprep.mubr.bf16.mxu0 0
        %2815 = vmatmul.mubr.bf16.gmra.mrb[0].mxu0 %v2685
        %v2816 = vpop.f32.mrb[0].mxu0
        %v2817 = vadd.f32 0.0, %v2816
        %v2818 = vpop.f32.mrb[0].mxu0
        %v2819 = vadd.f32 0.0, %v2818
        %v2820 = vpop.f32.mrb[0].mxu0
        %v2821 = vpop.f32.mrb[0].mxu0
        %2822 = vdwg.mxu0
        %v2823 = vld [vmem:[%s13] sm:$0xf]
        %v2824 = vpack.c.bf16 %v2817, %v2817
        %v2825 = vpack.c.bf16 %v2819, %v2819
        %s2826 = scalar_lea.vmem [#allocation15], 128
        %v2827 = vld [vmem:[%s2826] sm:$0xff]
        %v2828 = vld [vmem:[%s2826 + $0x8] sm:$0xff]
        %v2829 = vld [vmem:[%s2826 + $0x10] sm:$0xff]
        %v2830 = vld [vmem:[%s2826 + $0x18] sm:$0xff]
        %v2831 = vld [vmem:[%s2826 + $0x20] sm:$0xff]
        %v2832 = vld [vmem:[%s2826 + $0x28] sm:$0xff]
        %v2833 = vld [vmem:[%s2826 + $0x30] sm:$0xff]
        %v2834 = vld [vmem:[%s2826 + $0x38] sm:$0xff]
        %v2835 = vld [vmem:[%s2826 + $0x40] sm:$0xff]
        %v2836 = vld [vmem:[%s2826 + $0x48] sm:$0xff]
        %v2837 = vld [vmem:[%s2826 + $0x50] sm:$0xff]
        %v2838 = vld [vmem:[%s2826 + $0x58] sm:$0xff]
        %v2839 = vld [vmem:[%s2826 + $0x60] sm:$0xff]
        %v2840 = vld [vmem:[%s2826 + $0x68] sm:$0xff]
        %v2841 = vld [vmem:[%s2826 + $0x70] sm:$0xff]
        %v2842 = vld [vmem:[%s2826 + $0x78] sm:$0xff]
        %v2859 = vunpack.c.l.b16 %v2827
        %v2860 = vunpack.c.h.b16 %v2827
        %v2861 = vunpack.c.l.b16 %v2828
        %v2862 = vunpack.c.h.b16 %v2828
        %v2863 = vunpack.c.l.b16 %v2829
        %v2864 = vunpack.c.h.b16 %v2829
        %v2865 = vunpack.c.l.b16 %v2830
        %v2866 = vunpack.c.h.b16 %v2830
        %v2867 = vunpack.c.l.b16 %v2831
        %v2868 = vunpack.c.h.b16 %v2831
        %v2869 = vunpack.c.l.b16 %v2832
        %v2870 = vunpack.c.h.b16 %v2832
        %v2871 = vunpack.c.l.b16 %v2833
        %v2872 = vunpack.c.h.b16 %v2833
        %v2873 = vunpack.c.l.b16 %v2834
        %v2874 = vunpack.c.h.b16 %v2834
        %v2875 = vunpack.c.l.b16 %v2835
        %v2876 = vunpack.c.h.b16 %v2835
        %v2877 = vunpack.c.l.b16 %v2836
        %v2878 = vunpack.c.h.b16 %v2836
        %v2879 = vunpack.c.l.b16 %v2837
        %v2880 = vunpack.c.h.b16 %v2837
        %v2881 = vunpack.c.l.b16 %v2838
        %v2882 = vunpack.c.h.b16 %v2838
        %v2883 = vunpack.c.l.b16 %v2839
        %v2884 = vunpack.c.h.b16 %v2839
        %v2885 = vunpack.c.l.b16 %v2840
        %v2886 = vunpack.c.h.b16 %v2840
        %v2887 = vunpack.c.l.b16 %v2841
        %v2888 = vunpack.c.h.b16 %v2841
        %v2889 = vunpack.c.l.b16 %v2842
        %v2890 = vunpack.c.h.b16 %v2842
        %v2891 = vpack.c.b16 %v2861, %v2859
        %v2892 = vpack.c.b16 %v2862, %v2860
        %v2893 = vpack.c.b16 %v2865, %v2863
        %v2894 = vpack.c.b16 %v2866, %v2864
        %v2895 = vpack.c.b16 %v2869, %v2867
        %v2896 = vpack.c.b16 %v2870, %v2868
        %v2897 = vpack.c.b16 %v2873, %v2871
        %v2898 = vpack.c.b16 %v2874, %v2872
        %v2899 = vpack.c.b16 %v2877, %v2875
        %v2900 = vpack.c.b16 %v2878, %v2876
        %v2901 = vpack.c.b16 %v2881, %v2879
        %v2902 = vpack.c.b16 %v2882, %v2880
        %v2903 = vpack.c.b16 %v2885, %v2883
        %v2904 = vpack.c.b16 %v2886, %v2884
        %v2905 = vpack.c.b16 %v2889, %v2887
        %v2906 = vpack.c.b16 %v2890, %v2888
        %2923 = vmatprep.subr.bf16.mxu0 %v2892
        %2924 = vmatpush1.bf16.msra.mxu0 %v2891
        %2925 = vmatprep.subr.bf16.mxu0 %v2894
        %2926 = vmatpush1.bf16.msra.mxu0 %v2893
        %2927 = vmatprep.subr.bf16.mxu0 %v2896
        %2928 = vmatpush1.bf16.msra.mxu0 %v2895
        %2929 = vmatprep.subr.bf16.mxu0 %v2898
        %2930 = vmatpush1.bf16.msra.mxu0 %v2897
        %2931 = vmatprep.subr.bf16.mxu0 %v2900
        %2932 = vmatpush1.bf16.msra.mxu0 %v2899
        %2933 = vmatprep.subr.bf16.mxu0 %v2902
        %2934 = vmatpush1.bf16.msra.mxu0 %v2901
        %2935 = vmatprep.subr.bf16.mxu0 %v2904
        %2936 = vmatpush1.bf16.msra.mxu0 %v2903
        %2937 = vmatprep.subr.bf16.mxu0 %v2906
        %2938 = vmatpush1.bf16.msra.mxu0 %v2905
        %2939 = vmatprep.subr.bf16.mxu0 0
        %2940 = vmatpush1.bf16.msra.mxu0 0
        %2941 = vmatprep.subr.bf16.mxu0 0
        %2942 = vmatpush1.bf16.msra.mxu0 0
        %2943 = vmatprep.subr.bf16.mxu0 0
        %2944 = vmatpush1.bf16.msra.mxu0 0
        %2945 = vmatprep.subr.bf16.mxu0 0
        %2946 = vmatpush1.bf16.msra.mxu0 0
        %2947 = vmatprep.subr.bf16.mxu0 0
        %2948 = vmatpush1.bf16.msra.mxu0 0
        %2949 = vmatprep.subr.bf16.mxu0 0
        %2950 = vmatpush1.bf16.msra.mxu0 0
        %2951 = vmatprep.subr.bf16.mxu0 0
        %2952 = vmatpush1.bf16.msra.mxu0 0
        %2953 = vmatprep.subr.bf16.mxu0 0
        %2954 = vmatpush1.bf16.msra.mxu0 0
        %2955 = vmatprep.mubr.bf16.mxu0 0
        %2956 = vmatmul.mubr.bf16.gmra.mrb[0].mxu0 %v2685
        %v2957 = vpop.f32.mrb[0].mxu0
        %v2958 = vadd.f32 0.0, %v2957
        %v2959 = vpop.f32.mrb[0].mxu0
        %v2960 = vadd.f32 0.0, %v2959
        %v2961 = vpop.f32.mrb[0].mxu0
        %v2962 = vpop.f32.mrb[0].mxu0
        %2963 = vdwg.mxu0
        %s2964 = scalar_lea.vmem %s13, 4
        %v2965 = vld [vmem:[%s2964] sm:$0xf]
        %v2966 = vpack.c.bf16 %v2958, %v2958
        %v2967 = vpack.c.bf16 %v2960, %v2960
        %v2969 = vsel %vm1957, %v2965, 0
        %v2972 = vsel %vm1961, %v2966, 0
        %v2975 = vsel %vm1961, %v2967, 0
        %2977 = vmatprep.subr.bf16.mxu0 %v2975
        %2978 = vmatpush1.bf16.msra.mxu0 %v2972
        %2979 = vmatprep.subr.bf16.mxu0 0
        %2980 = vmatpush1.bf16.msra.mxu0 0
        %2981 = vmatprep.subr.bf16.mxu0 0
        %2982 = vmatpush1.bf16.msra.mxu0 0
        %2983 = vmatprep.subr.bf16.mxu0 0
        %2984 = vmatpush1.bf16.msra.mxu0 0
        %2985 = vmatprep.subr.bf16.mxu0 0
        %2986 = vmatpush1.bf16.msra.mxu0 0
        %2987 = vmatprep.subr.bf16.mxu0 0
        %2988 = vmatpush1.bf16.msra.mxu0 0
        %2989 = vmatprep.subr.bf16.mxu0 0
        %2990 = vmatpush1.bf16.msra.mxu0 0
        %2991 = vmatprep.subr.bf16.mxu0 0
        %2992 = vmatpush1.bf16.msra.mxu0 0
        %2993 = vmatprep.subr.bf16.mxu0 0
        %2994 = vmatpush1.bf16.msra.mxu0 0
        %2995 = vmatprep.subr.bf16.mxu0 0
        %2996 = vmatpush1.bf16.msra.mxu0 0
        %2997 = vmatprep.subr.bf16.mxu0 0
        %2998 = vmatpush1.bf16.msra.mxu0 0
        %2999 = vmatprep.subr.bf16.mxu0 0
        %3000 = vmatpush1.bf16.msra.mxu0 0
        %3001 = vmatprep.subr.bf16.mxu0 0
        %3002 = vmatpush1.bf16.msra.mxu0 0
        %3003 = vmatprep.subr.bf16.mxu0 0
        %3004 = vmatpush1.bf16.msra.mxu0 0
        %3005 = vmatprep.subr.bf16.mxu0 0
        %3006 = vmatpush1.bf16.msra.mxu0 0
        %3007 = vmatprep.subr.bf16.mxu0 0
        %3008 = vmatpush1.bf16.msra.mxu0 0
        %3009 = vmatprep.mubr.bf16.mxu0 0
        %3010 = vmatmul.mubr.bf16.gmra.mrb[0].mxu0 %v2969
        %v3011 = vpop.f32.mrb[0].mxu0
        %v3012 = vadd.f32 0.0, %v3011
        %v3013 = vpop.f32.mrb[0].mxu0
        %v3014 = vadd.f32 0.0, %v3013
        %v3015 = vpop.f32.mrb[0].mxu0
        %v3016 = vpop.f32.mrb[0].mxu0
        %3017 = vdwg.mxu0
        %v3019 = vsel %vm1957, %v2823, 0
        %v3022 = vsel %vm1961, %v2824, 0
        %v3025 = vsel %vm1961, %v2825, 0
        %3027 = vmatprep.subr.bf16.mxu0 %v3025
        %3028 = vmatpush1.bf16.msra.mxu0 %v3022
        %3029 = vmatprep.subr.bf16.mxu0 0
        %3030 = vmatpush1.bf16.msra.mxu0 0
        %3031 = vmatprep.subr.bf16.mxu0 0
        %3032 = vmatpush1.bf16.msra.mxu0 0
        %3033 = vmatprep.subr.bf16.mxu0 0
        %3034 = vmatpush1.bf16.msra.mxu0 0
        %3035 = vmatprep.subr.bf16.mxu0 0
        %3036 = vmatpush1.bf16.msra.mxu0 0
        %3037 = vmatprep.subr.bf16.mxu0 0
        %3038 = vmatpush1.bf16.msra.mxu0 0
        %3039 = vmatprep.subr.bf16.mxu0 0
        %3040 = vmatpush1.bf16.msra.mxu0 0
        %3041 = vmatprep.subr.bf16.mxu0 0
        %3042 = vmatpush1.bf16.msra.mxu0 0
        %3043 = vmatprep.subr.bf16.mxu0 0
        %3044 = vmatpush1.bf16.msra.mxu0 0
        %3045 = vmatprep.subr.bf16.mxu0 0
        %3046 = vmatpush1.bf16.msra.mxu0 0
        %3047 = vmatprep.subr.bf16.mxu0 0
        %3048 = vmatpush1.bf16.msra.mxu0 0
        %3049 = vmatprep.subr.bf16.mxu0 0
        %3050 = vmatpush1.bf16.msra.mxu0 0
        %3051 = vmatprep.subr.bf16.mxu0 0
        %3052 = vmatpush1.bf16.msra.mxu0 0
        %3053 = vmatprep.subr.bf16.mxu0 0
        %3054 = vmatpush1.bf16.msra.mxu0 0
        %3055 = vmatprep.subr.bf16.mxu0 0
        %3056 = vmatpush1.bf16.msra.mxu0 0
        %3057 = vmatprep.subr.bf16.mxu0 0
        %3058 = vmatpush1.bf16.msra.mxu0 0
        %3059 = vmatprep.mubr.bf16.mxu0 0
        %3060 = vmatmul.mubr.bf16.gmra.mrb[0].mxu0 %v3019
        %v3061 = vpop.f32.mrb[0].mxu0
        %v3062 = vadd.f32 %v3012, %v3061
        %v3063 = vpop.f32.mrb[0].mxu0
        %v3064 = vadd.f32 %v3014, %v3063
        %v3065 = vpop.f32.mrb[0].mxu0
        %v3066 = vpop.f32.mrb[0].mxu0
        %3067 = vdwg.mxu0
        %v3068 = vld [vmem:[#allocation16] sm:$0x3]
        %v3070 = vlaneseq
        %v3071 = vshrl.u32 %v3070, 7
        %v3072 = vsub.s32 0, %v3071
        %v3073 = vrot.slane %v3068, %v3072
        %v3074 = vlaneseq
        %v3075 = vshrl.u32 %v3074, 7
        %v3076 = vsub.s32 1, %v3075
        %v3077 = vrot.slane %v3068, %v3076
        %v3080 = vadd.f32 %v3062, %v3073
        %v3081 = vadd.f32 %v3064, %v3077
        %v3082 = vadd.f32 %v3080, %v1279
        %v3083 = vadd.f32 %v3081, %v1280
        %v3084 = vpack.c.bf16 %v3082, %v3082
        %v3085 = vpack.c.bf16 %v3083, %v3083
        %v3086 = vld [vmem:[%s17] sm:$0xff]
        %v3087 = vld [vmem:[%s17 + $0x8] sm:$0xff]
        %v3088 = vld [vmem:[%s17 + $0x10] sm:$0xff]
        %v3089 = vld [vmem:[%s17 + $0x18] sm:$0xff]
        %v3090 = vld [vmem:[%s17 + $0x20] sm:$0xff]
        %v3091 = vld [vmem:[%s17 + $0x28] sm:$0xff]
        %v3092 = vld [vmem:[%s17 + $0x30] sm:$0xff]
        %v3093 = vld [vmem:[%s17 + $0x38] sm:$0xff]
        %v3094 = vld [vmem:[%s17 + $0x40] sm:$0xff]
        %v3095 = vld [vmem:[%s17 + $0x48] sm:$0xff]
        %v3096 = vld [vmem:[%s17 + $0x50] sm:$0xff]
        %v3097 = vld [vmem:[%s17 + $0x58] sm:$0xff]
        %v3098 = vld [vmem:[%s17 + $0x60] sm:$0xff]
        %v3099 = vld [vmem:[%s17 + $0x68] sm:$0xff]
        %v3100 = vld [vmem:[%s17 + $0x70] sm:$0xff]
        %v3101 = vld [vmem:[%s17 + $0x78] sm:$0xff]
        %v3102 = vld [vmem:[%s17 + $0x80] sm:$0xff]
        %v3103 = vld [vmem:[%s17 + $0x88] sm:$0xff]
        %v3104 = vld [vmem:[%s17 + $0x90] sm:$0xff]
        %v3105 = vld [vmem:[%s17 + $0x98] sm:$0xff]
        %v3106 = vld [vmem:[%s17 + $0xa0] sm:$0xff]
        %v3107 = vld [vmem:[%s17 + $0xa8] sm:$0xff]
        %v3108 = vld [vmem:[%s17 + $0xb0] sm:$0xff]
        %v3109 = vld [vmem:[%s17 + $0xb8] sm:$0xff]
        %v3110 = vld [vmem:[%s17 + $0xc0] sm:$0xff]
        %v3111 = vld [vmem:[%s17 + $0xc8] sm:$0xff]
        %v3112 = vld [vmem:[%s17 + $0xd0] sm:$0xff]
        %v3113 = vld [vmem:[%s17 + $0xd8] sm:$0xff]
        %v3114 = vld [vmem:[%s17 + $0xe0] sm:$0xff]
        %v3115 = vld [vmem:[%s17 + $0xe8] sm:$0xff]
        %v3116 = vld [vmem:[%s17 + $0xf0] sm:$0xff]
        %v3117 = vld [vmem:[%s17 + $0xf8] sm:$0xff]
        %v3118 = vld [vmem:[%s17 + $0x100] sm:$0xff]
        %v3119 = vld [vmem:[%s17 + $0x108] sm:$0xff]
        %v3120 = vld [vmem:[%s17 + $0x110] sm:$0xff]
        %v3121 = vld [vmem:[%s17 + $0x118] sm:$0xff]
        %v3122 = vld [vmem:[%s17 + $0x120] sm:$0xff]
        %v3123 = vld [vmem:[%s17 + $0x128] sm:$0xff]
        %v3124 = vld [vmem:[%s17 + $0x130] sm:$0xff]
        %v3125 = vld [vmem:[%s17 + $0x138] sm:$0xff]
        %v3126 = vld [vmem:[%s17 + $0x140] sm:$0xff]
        %v3127 = vld [vmem:[%s17 + $0x148] sm:$0xff]
        %v3128 = vld [vmem:[%s17 + $0x150] sm:$0xff]
        %v3129 = vld [vmem:[%s17 + $0x158] sm:$0xff]
        %v3130 = vld [vmem:[%s17 + $0x160] sm:$0xff]
        %v3131 = vld [vmem:[%s17 + $0x168] sm:$0xff]
        %v3132 = vld [vmem:[%s17 + $0x170] sm:$0xff]
        %v3133 = vld [vmem:[%s17 + $0x178] sm:$0xff]
        %v3134 = vld [vmem:[%s17 + $0x180] sm:$0xff]
        %v3135 = vld [vmem:[%s17 + $0x188] sm:$0xff]
        %v3136 = vld [vmem:[%s17 + $0x190] sm:$0xff]
        %v3137 = vld [vmem:[%s17 + $0x198] sm:$0xff]
        %v3138 = vld [vmem:[%s17 + $0x1a0] sm:$0xff]
        %v3139 = vld [vmem:[%s17 + $0x1a8] sm:$0xff]
        %v3140 = vld [vmem:[%s17 + $0x1b0] sm:$0xff]
        %v3141 = vld [vmem:[%s17 + $0x1b8] sm:$0xff]
        %v3142 = vld [vmem:[%s17 + $0x1c0] sm:$0xff]
        %v3143 = vld [vmem:[%s17 + $0x1c8] sm:$0xff]
        %v3144 = vld [vmem:[%s17 + $0x1d0] sm:$0xff]
        %v3145 = vld [vmem:[%s17 + $0x1d8] sm:$0xff]
        %v3146 = vld [vmem:[%s17 + $0x1e0] sm:$0xff]
        %v3147 = vld [vmem:[%s17 + $0x1e8] sm:$0xff]
        %v3148 = vld [vmem:[%s17 + $0x1f0] sm:$0xff]
        %v3149 = vld [vmem:[%s17 + $0x1f8] sm:$0xff]
        %v3214 = vunpack.c.l.b16 %v3086
        %v3215 = vunpack.c.h.b16 %v3086
        %v3216 = vunpack.c.l.b16 %v3087
        %v3217 = vunpack.c.h.b16 %v3087
        %v3218 = vunpack.c.l.b16 %v3088
        %v3219 = vunpack.c.h.b16 %v3088
        %v3220 = vunpack.c.l.b16 %v3089
        %v3221 = vunpack.c.h.b16 %v3089
        %v3222 = vunpack.c.l.b16 %v3090
        %v3223 = vunpack.c.h.b16 %v3090
        %v3224 = vunpack.c.l.b16 %v3091
        %v3225 = vunpack.c.h.b16 %v3091
        %v3226 = vunpack.c.l.b16 %v3092
        %v3227 = vunpack.c.h.b16 %v3092
        %v3228 = vunpack.c.l.b16 %v3093
        %v3229 = vunpack.c.h.b16 %v3093
        %v3230 = vunpack.c.l.b16 %v3094
        %v3231 = vunpack.c.h.b16 %v3094
        %v3232 = vunpack.c.l.b16 %v3095
        %v3233 = vunpack.c.h.b16 %v3095
        %v3234 = vunpack.c.l.b16 %v3096
        %v3235 = vunpack.c.h.b16 %v3096
        %v3236 = vunpack.c.l.b16 %v3097
        %v3237 = vunpack.c.h.b16 %v3097
        %v3238 = vunpack.c.l.b16 %v3098
        %v3239 = vunpack.c.h.b16 %v3098
        %v3240 = vunpack.c.l.b16 %v3099
        %v3241 = vunpack.c.h.b16 %v3099
        %v3242 = vunpack.c.l.b16 %v3100
        %v3243 = vunpack.c.h.b16 %v3100
        %v3244 = vunpack.c.l.b16 %v3101
        %v3245 = vunpack.c.h.b16 %v3101
        %v3246 = vunpack.c.l.b16 %v3102
        %v3247 = vunpack.c.h.b16 %v3102
        %v3248 = vunpack.c.l.b16 %v3103
        %v3249 = vunpack.c.h.b16 %v3103
        %v3250 = vunpack.c.l.b16 %v3104
        %v3251 = vunpack.c.h.b16 %v3104
        %v3252 = vunpack.c.l.b16 %v3105
        %v3253 = vunpack.c.h.b16 %v3105
        %v3254 = vunpack.c.l.b16 %v3106
        %v3255 = vunpack.c.h.b16 %v3106
        %v3256 = vunpack.c.l.b16 %v3107
        %v3257 = vunpack.c.h.b16 %v3107
        %v3258 = vunpack.c.l.b16 %v3108
        %v3259 = vunpack.c.h.b16 %v3108
        %v3260 = vunpack.c.l.b16 %v3109
        %v3261 = vunpack.c.h.b16 %v3109
        %v3262 = vunpack.c.l.b16 %v3110
        %v3263 = vunpack.c.h.b16 %v3110
        %v3264 = vunpack.c.l.b16 %v3111
        %v3265 = vunpack.c.h.b16 %v3111
        %v3266 = vunpack.c.l.b16 %v3112
        %v3267 = vunpack.c.h.b16 %v3112
        %v3268 = vunpack.c.l.b16 %v3113
        %v3269 = vunpack.c.h.b16 %v3113
        %v3270 = vunpack.c.l.b16 %v3114
        %v3271 = vunpack.c.h.b16 %v3114
        %v3272 = vunpack.c.l.b16 %v3115
        %v3273 = vunpack.c.h.b16 %v3115
        %v3274 = vunpack.c.l.b16 %v3116
        %v3275 = vunpack.c.h.b16 %v3116
        %v3276 = vunpack.c.l.b16 %v3117
        %v3277 = vunpack.c.h.b16 %v3117
        %v3278 = vunpack.c.l.b16 %v3118
        %v3279 = vunpack.c.h.b16 %v3118
        %v3280 = vunpack.c.l.b16 %v3119
        %v3281 = vunpack.c.h.b16 %v3119
        %v3282 = vunpack.c.l.b16 %v3120
        %v3283 = vunpack.c.h.b16 %v3120
        %v3284 = vunpack.c.l.b16 %v3121
        %v3285 = vunpack.c.h.b16 %v3121
        %v3286 = vunpack.c.l.b16 %v3122
        %v3287 = vunpack.c.h.b16 %v3122
        %v3288 = vunpack.c.l.b16 %v3123
        %v3289 = vunpack.c.h.b16 %v3123
        %v3290 = vunpack.c.l.b16 %v3124
        %v3291 = vunpack.c.h.b16 %v3124
        %v3292 = vunpack.c.l.b16 %v3125
        %v3293 = vunpack.c.h.b16 %v3125
        %v3294 = vunpack.c.l.b16 %v3126
        %v3295 = vunpack.c.h.b16 %v3126
        %v3296 = vunpack.c.l.b16 %v3127
        %v3297 = vunpack.c.h.b16 %v3127
        %v3298 = vunpack.c.l.b16 %v3128
        %v3299 = vunpack.c.h.b16 %v3128
        %v3300 = vunpack.c.l.b16 %v3129
        %v3301 = vunpack.c.h.b16 %v3129
        %v3302 = vunpack.c.l.b16 %v3130
        %v3303 = vunpack.c.h.b16 %v3130
        %v3304 = vunpack.c.l.b16 %v3131
        %v3305 = vunpack.c.h.b16 %v3131
        %v3306 = vunpack.c.l.b16 %v3132
        %v3307 = vunpack.c.h.b16 %v3132
        %v3308 = vunpack.c.l.b16 %v3133
        %v3309 = vunpack.c.h.b16 %v3133
        %v3310 = vunpack.c.l.b16 %v3134
        %v3311 = vunpack.c.h.b16 %v3134
        %v3312 = vunpack.c.l.b16 %v3135
        %v3313 = vunpack.c.h.b16 %v3135
        %v3314 = vunpack.c.l.b16 %v3136
        %v3315 = vunpack.c.h.b16 %v3136
        %v3316 = vunpack.c.l.b16 %v3137
        %v3317 = vunpack.c.h.b16 %v3137
        %v3318 = vunpack.c.l.b16 %v3138
        %v3319 = vunpack.c.h.b16 %v3138
        %v3320 = vunpack.c.l.b16 %v3139
        %v3321 = vunpack.c.h.b16 %v3139
        %v3322 = vunpack.c.l.b16 %v3140
        %v3323 = vunpack.c.h.b16 %v3140
        %v3324 = vunpack.c.l.b16 %v3141
        %v3325 = vunpack.c.h.b16 %v3141
        %v3326 = vunpack.c.l.b16 %v3142
        %v3327 = vunpack.c.h.b16 %v3142
        %v3328 = vunpack.c.l.b16 %v3143
        %v3329 = vunpack.c.h.b16 %v3143
        %v3330 = vunpack.c.l.b16 %v3144
        %v3331 = vunpack.c.h.b16 %v3144
        %v3332 = vunpack.c.l.b16 %v3145
        %v3333 = vunpack.c.h.b16 %v3145
        %v3334 = vunpack.c.l.b16 %v3146
        %v3335 = vunpack.c.h.b16 %v3146
        %v3336 = vunpack.c.l.b16 %v3147
        %v3337 = vunpack.c.h.b16 %v3147
        %v3338 = vunpack.c.l.b16 %v3148
        %v3339 = vunpack.c.h.b16 %v3148
        %v3340 = vunpack.c.l.b16 %v3149
        %v3341 = vunpack.c.h.b16 %v3149
        %v3342 = vpack.c.b16 %v3218, %v3214
        %v3343 = vpack.c.b16 %v3219, %v3215
        %v3344 = vpack.c.b16 %v3220, %v3216
        %v3345 = vpack.c.b16 %v3221, %v3217
        %v3346 = vpack.c.b16 %v3226, %v3222
        %v3347 = vpack.c.b16 %v3227, %v3223
        %v3348 = vpack.c.b16 %v3228, %v3224
        %v3349 = vpack.c.b16 %v3229, %v3225
        %v3350 = vpack.c.b16 %v3234, %v3230
        %v3351 = vpack.c.b16 %v3235, %v3231
        %v3352 = vpack.c.b16 %v3236, %v3232
        %v3353 = vpack.c.b16 %v3237, %v3233
        %v3354 = vpack.c.b16 %v3242, %v3238
        %v3355 = vpack.c.b16 %v3243, %v3239
        %v3356 = vpack.c.b16 %v3244, %v3240
        %v3357 = vpack.c.b16 %v3245, %v3241
        %v3358 = vpack.c.b16 %v3250, %v3246
        %v3359 = vpack.c.b16 %v3251, %v3247
        %v3360 = vpack.c.b16 %v3252, %v3248
        %v3361 = vpack.c.b16 %v3253, %v3249
        %v3362 = vpack.c.b16 %v3258, %v3254
        %v3363 = vpack.c.b16 %v3259, %v3255
        %v3364 = vpack.c.b16 %v3260, %v3256
        %v3365 = vpack.c.b16 %v3261, %v3257
        %v3366 = vpack.c.b16 %v3266, %v3262
        %v3367 = vpack.c.b16 %v3267, %v3263
        %v3368 = vpack.c.b16 %v3268, %v3264
        %v3369 = vpack.c.b16 %v3269, %v3265
        %v3370 = vpack.c.b16 %v3274, %v3270
        %v3371 = vpack.c.b16 %v3275, %v3271
        %v3372 = vpack.c.b16 %v3276, %v3272
        %v3373 = vpack.c.b16 %v3277, %v3273
        %v3374 = vpack.c.b16 %v3282, %v3278
        %v3375 = vpack.c.b16 %v3283, %v3279
        %v3376 = vpack.c.b16 %v3284, %v3280
        %v3377 = vpack.c.b16 %v3285, %v3281
        %v3378 = vpack.c.b16 %v3290, %v3286
        %v3379 = vpack.c.b16 %v3291, %v3287
        %v3380 = vpack.c.b16 %v3292, %v3288
        %v3381 = vpack.c.b16 %v3293, %v3289
        %v3382 = vpack.c.b16 %v3298, %v3294
        %v3383 = vpack.c.b16 %v3299, %v3295
        %v3384 = vpack.c.b16 %v3300, %v3296
        %v3385 = vpack.c.b16 %v3301, %v3297
        %v3386 = vpack.c.b16 %v3306, %v3302
        %v3387 = vpack.c.b16 %v3307, %v3303
        %v3388 = vpack.c.b16 %v3308, %v3304
        %v3389 = vpack.c.b16 %v3309, %v3305
        %v3390 = vpack.c.b16 %v3314, %v3310
        %v3391 = vpack.c.b16 %v3315, %v3311
        %v3392 = vpack.c.b16 %v3316, %v3312
        %v3393 = vpack.c.b16 %v3317, %v3313
        %v3394 = vpack.c.b16 %v3322, %v3318
        %v3395 = vpack.c.b16 %v3323, %v3319
        %v3396 = vpack.c.b16 %v3324, %v3320
        %v3397 = vpack.c.b16 %v3325, %v3321
        %v3398 = vpack.c.b16 %v3330, %v3326
        %v3399 = vpack.c.b16 %v3331, %v3327
        %v3400 = vpack.c.b16 %v3332, %v3328
        %v3401 = vpack.c.b16 %v3333, %v3329
        %v3402 = vpack.c.b16 %v3338, %v3334
        %v3403 = vpack.c.b16 %v3339, %v3335
        %v3404 = vpack.c.b16 %v3340, %v3336
        %v3405 = vpack.c.b16 %v3341, %v3337
        %3470 = vmatprep.subr.bf16.mxu0 %v3343
        %3471 = vmatpush1.bf16.msra.mxu0 %v3342
        %3472 = vmatprep.subr.bf16.mxu0 %v3347
        %3473 = vmatpush1.bf16.msra.mxu0 %v3346
        %3474 = vmatprep.subr.bf16.mxu0 %v3351
        %3475 = vmatpush1.bf16.msra.mxu0 %v3350
        %3476 = vmatprep.subr.bf16.mxu0 %v3355
        %3477 = vmatpush1.bf16.msra.mxu0 %v3354
        %3478 = vmatprep.subr.bf16.mxu0 %v3359
        %3479 = vmatpush1.bf16.msra.mxu0 %v3358
        %3480 = vmatprep.subr.bf16.mxu0 %v3363
        %3481 = vmatpush1.bf16.msra.mxu0 %v3362
        %3482 = vmatprep.subr.bf16.mxu0 %v3367
        %3483 = vmatpush1.bf16.msra.mxu0 %v3366
        %3484 = vmatprep.subr.bf16.mxu0 %v3371
        %3485 = vmatpush1.bf16.msra.mxu0 %v3370
        %3486 = vmatprep.subr.bf16.mxu0 %v3375
        %3487 = vmatpush1.bf16.msra.mxu0 %v3374
        %3488 = vmatprep.subr.bf16.mxu0 %v3379
        %3489 = vmatpush1.bf16.msra.mxu0 %v3378
        %3490 = vmatprep.subr.bf16.mxu0 %v3383
        %3491 = vmatpush1.bf16.msra.mxu0 %v3382
        %3492 = vmatprep.subr.bf16.mxu0 %v3387
        %3493 = vmatpush1.bf16.msra.mxu0 %v3386
        %3494 = vmatprep.subr.bf16.mxu0 %v3391
        %3495 = vmatpush1.bf16.msra.mxu0 %v3390
        %3496 = vmatprep.subr.bf16.mxu0 %v3395
        %3497 = vmatpush1.bf16.msra.mxu0 %v3394
        %3498 = vmatprep.subr.bf16.mxu0 %v3399
        %3499 = vmatpush1.bf16.msra.mxu0 %v3398
        %3500 = vmatprep.subr.bf16.mxu0 %v3403
        %3501 = vmatpush1.bf16.msra.mxu0 %v3402
        %3502 = vmatprep.mubr.bf16.mxu0 %v3085
        %3503 = vmatmul.mubr.bf16.gmra.mrb[0].mxu0 %v3084
        %v3504 = vpop.f32.mrb[0].mxu0
        %v3505 = vadd.f32 0.0, %v3504
        %v3506 = vpop.f32.mrb[0].mxu0
        %v3507 = vadd.f32 0.0, %v3506
        %v3508 = vpop.f32.mrb[0].mxu0
        %v3509 = vpop.f32.mrb[0].mxu0
        %3510 = vdwg.mxu0
        %3511 = vmatprep.subr.bf16.mxu0 %v3345
        %3512 = vmatpush1.bf16.msra.mxu0 %v3344
        %3513 = vmatprep.subr.bf16.mxu0 %v3349
        %3514 = vmatpush1.bf16.msra.mxu0 %v3348
        %3515 = vmatprep.subr.bf16.mxu0 %v3353
        %3516 = vmatpush1.bf16.msra.mxu0 %v3352
        %3517 = vmatprep.subr.bf16.mxu0 %v3357
        %3518 = vmatpush1.bf16.msra.mxu0 %v3356
        %3519 = vmatprep.subr.bf16.mxu0 %v3361
        %3520 = vmatpush1.bf16.msra.mxu0 %v3360
        %3521 = vmatprep.subr.bf16.mxu0 %v3365
        %3522 = vmatpush1.bf16.msra.mxu0 %v3364
        %3523 = vmatprep.subr.bf16.mxu0 %v3369
        %3524 = vmatpush1.bf16.msra.mxu0 %v3368
        %3525 = vmatprep.subr.bf16.mxu0 %v3373
        %3526 = vmatpush1.bf16.msra.mxu0 %v3372
        %3527 = vmatprep.subr.bf16.mxu0 %v3377
        %3528 = vmatpush1.bf16.msra.mxu0 %v3376
        %3529 = vmatprep.subr.bf16.mxu0 %v3381
        %3530 = vmatpush1.bf16.msra.mxu0 %v3380
        %3531 = vmatprep.subr.bf16.mxu0 %v3385
        %3532 = vmatpush1.bf16.msra.mxu0 %v3384
        %3533 = vmatprep.subr.bf16.mxu0 %v3389
        %3534 = vmatpush1.bf16.msra.mxu0 %v3388
        %3535 = vmatprep.subr.bf16.mxu0 %v3393
        %3536 = vmatpush1.bf16.msra.mxu0 %v3392
        %3537 = vmatprep.subr.bf16.mxu0 %v3397
        %3538 = vmatpush1.bf16.msra.mxu0 %v3396
        %3539 = vmatprep.subr.bf16.mxu0 %v3401
        %3540 = vmatpush1.bf16.msra.mxu0 %v3400
        %3541 = vmatprep.subr.bf16.mxu0 %v3405
        %3542 = vmatpush1.bf16.msra.mxu0 %v3404
        %3543 = vmatprep.mubr.bf16.mxu0 %v3085
        %3544 = vmatmul.mubr.bf16.gmra.mrb[0].mxu0 %v3084
        %v3545 = vpop.f32.mrb[0].mxu0
        %v3546 = vadd.f32 0.0, %v3545
        %v3547 = vpop.f32.mrb[0].mxu0
        %v3548 = vadd.f32 0.0, %v3547
        %v3549 = vpop.f32.mrb[0].mxu0
        %v3550 = vpop.f32.mrb[0].mxu0
        %3551 = vdwg.mxu0
        %v3552 = vld [vmem:[%s16] sm:$0xf]
        %v3553 = vld [vmem:[%s16 + $0x4] sm:$0xf]
        %v3554 = vpack.c.bf16 %v3505, %v3505
        %v3555 = vpack.c.bf16 %v3507, %v3507
        %v3556 = vpack.c.bf16 %v3546, %v3546
        %v3557 = vpack.c.bf16 %v3548, %v3548
        %s3558 = scalar_lea.vmem %s17, 512
        %v3559 = vld [vmem:[%s3558] sm:$0xff]
        %v3560 = vld [vmem:[%s3558 + $0x8] sm:$0xff]
        %v3561 = vld [vmem:[%s3558 + $0x10] sm:$0xff]
        %v3562 = vld [vmem:[%s3558 + $0x18] sm:$0xff]
        %v3563 = vld [vmem:[%s3558 + $0x20] sm:$0xff]
        %v3564 = vld [vmem:[%s3558 + $0x28] sm:$0xff]
        %v3565 = vld [vmem:[%s3558 + $0x30] sm:$0xff]
        %v3566 = vld [vmem:[%s3558 + $0x38] sm:$0xff]
        %v3567 = vld [vmem:[%s3558 + $0x40] sm:$0xff]
        %v3568 = vld [vmem:[%s3558 + $0x48] sm:$0xff]
        %v3569 = vld [vmem:[%s3558 + $0x50] sm:$0xff]
        %v3570 = vld [vmem:[%s3558 + $0x58] sm:$0xff]
        %v3571 = vld [vmem:[%s3558 + $0x60] sm:$0xff]
        %v3572 = vld [vmem:[%s3558 + $0x68] sm:$0xff]
        %v3573 = vld [vmem:[%s3558 + $0x70] sm:$0xff]
        %v3574 = vld [vmem:[%s3558 + $0x78] sm:$0xff]
        %v3575 = vld [vmem:[%s3558 + $0x80] sm:$0xff]
        %v3576 = vld [vmem:[%s3558 + $0x88] sm:$0xff]
        %v3577 = vld [vmem:[%s3558 + $0x90] sm:$0xff]
        %v3578 = vld [vmem:[%s3558 + $0x98] sm:$0xff]
        %v3579 = vld [vmem:[%s3558 + $0xa0] sm:$0xff]
        %v3580 = vld [vmem:[%s3558 + $0xa8] sm:$0xff]
        %v3581 = vld [vmem:[%s3558 + $0xb0] sm:$0xff]
        %v3582 = vld [vmem:[%s3558 + $0xb8] sm:$0xff]
        %v3583 = vld [vmem:[%s3558 + $0xc0] sm:$0xff]
        %v3584 = vld [vmem:[%s3558 + $0xc8] sm:$0xff]
        %v3585 = vld [vmem:[%s3558 + $0xd0] sm:$0xff]
        %v3586 = vld [vmem:[%s3558 + $0xd8] sm:$0xff]
        %v3587 = vld [vmem:[%s3558 + $0xe0] sm:$0xff]
        %v3588 = vld [vmem:[%s3558 + $0xe8] sm:$0xff]
        %v3589 = vld [vmem:[%s3558 + $0xf0] sm:$0xff]
        %v3590 = vld [vmem:[%s3558 + $0xf8] sm:$0xff]
        %v3591 = vld [vmem:[%s3558 + $0x100] sm:$0xff]
        %v3592 = vld [vmem:[%s3558 + $0x108] sm:$0xff]
        %v3593 = vld [vmem:[%s3558 + $0x110] sm:$0xff]
        %v3594 = vld [vmem:[%s3558 + $0x118] sm:$0xff]
        %v3595 = vld [vmem:[%s3558 + $0x120] sm:$0xff]
        %v3596 = vld [vmem:[%s3558 + $0x128] sm:$0xff]
        %v3597 = vld [vmem:[%s3558 + $0x130] sm:$0xff]
        %v3598 = vld [vmem:[%s3558 + $0x138] sm:$0xff]
        %v3599 = vld [vmem:[%s3558 + $0x140] sm:$0xff]
        %v3600 = vld [vmem:[%s3558 + $0x148] sm:$0xff]
        %v3601 = vld [vmem:[%s3558 + $0x150] sm:$0xff]
        %v3602 = vld [vmem:[%s3558 + $0x158] sm:$0xff]
        %v3603 = vld [vmem:[%s3558 + $0x160] sm:$0xff]
        %v3604 = vld [vmem:[%s3558 + $0x168] sm:$0xff]
        %v3605 = vld [vmem:[%s3558 + $0x170] sm:$0xff]
        %v3606 = vld [vmem:[%s3558 + $0x178] sm:$0xff]
        %v3607 = vld [vmem:[%s3558 + $0x180] sm:$0xff]
        %v3608 = vld [vmem:[%s3558 + $0x188] sm:$0xff]
        %v3609 = vld [vmem:[%s3558 + $0x190] sm:$0xff]
        %v3610 = vld [vmem:[%s3558 + $0x198] sm:$0xff]
        %v3611 = vld [vmem:[%s3558 + $0x1a0] sm:$0xff]
        %v3612 = vld [vmem:[%s3558 + $0x1a8] sm:$0xff]
        %v3613 = vld [vmem:[%s3558 + $0x1b0] sm:$0xff]
        %v3614 = vld [vmem:[%s3558 + $0x1b8] sm:$0xff]
        %v3615 = vld [vmem:[%s3558 + $0x1c0] sm:$0xff]
        %v3616 = vld [vmem:[%s3558 + $0x1c8] sm:$0xff]
        %v3617 = vld [vmem:[%s3558 + $0x1d0] sm:$0xff]
        %v3618 = vld [vmem:[%s3558 + $0x1d8] sm:$0xff]
        %v3619 = vld [vmem:[%s3558 + $0x1e0] sm:$0xff]
        %v3620 = vld [vmem:[%s3558 + $0x1e8] sm:$0xff]
        %v3621 = vld [vmem:[%s3558 + $0x1f0] sm:$0xff]
        %v3622 = vld [vmem:[%s3558 + $0x1f8] sm:$0xff]
        %v3687 = vunpack.c.l.b16 %v3559
        %v3688 = vunpack.c.h.b16 %v3559
        %v3689 = vunpack.c.l.b16 %v3560
        %v3690 = vunpack.c.h.b16 %v3560
        %v3691 = vunpack.c.l.b16 %v3561
        %v3692 = vunpack.c.h.b16 %v3561
        %v3693 = vunpack.c.l.b16 %v3562
        %v3694 = vunpack.c.h.b16 %v3562
        %v3695 = vunpack.c.l.b16 %v3563
        %v3696 = vunpack.c.h.b16 %v3563
        %v3697 = vunpack.c.l.b16 %v3564
        %v3698 = vunpack.c.h.b16 %v3564
        %v3699 = vunpack.c.l.b16 %v3565
        %v3700 = vunpack.c.h.b16 %v3565
        %v3701 = vunpack.c.l.b16 %v3566
        %v3702 = vunpack.c.h.b16 %v3566
        %v3703 = vunpack.c.l.b16 %v3567
        %v3704 = vunpack.c.h.b16 %v3567
        %v3705 = vunpack.c.l.b16 %v3568
        %v3706 = vunpack.c.h.b16 %v3568
        %v3707 = vunpack.c.l.b16 %v3569
        %v3708 = vunpack.c.h.b16 %v3569
        %v3709 = vunpack.c.l.b16 %v3570
        %v3710 = vunpack.c.h.b16 %v3570
        %v3711 = vunpack.c.l.b16 %v3571
        %v3712 = vunpack.c.h.b16 %v3571
        %v3713 = vunpack.c.l.b16 %v3572
        %v3714 = vunpack.c.h.b16 %v3572
        %v3715 = vunpack.c.l.b16 %v3573
        %v3716 = vunpack.c.h.b16 %v3573
        %v3717 = vunpack.c.l.b16 %v3574
        %v3718 = vunpack.c.h.b16 %v3574
        %v3719 = vunpack.c.l.b16 %v3575
        %v3720 = vunpack.c.h.b16 %v3575
        %v3721 = vunpack.c.l.b16 %v3576
        %v3722 = vunpack.c.h.b16 %v3576
        %v3723 = vunpack.c.l.b16 %v3577
        %v3724 = vunpack.c.h.b16 %v3577
        %v3725 = vunpack.c.l.b16 %v3578
        %v3726 = vunpack.c.h.b16 %v3578
        %v3727 = vunpack.c.l.b16 %v3579
        %v3728 = vunpack.c.h.b16 %v3579
        %v3729 = vunpack.c.l.b16 %v3580
        %v3730 = vunpack.c.h.b16 %v3580
        %v3731 = vunpack.c.l.b16 %v3581
        %v3732 = vunpack.c.h.b16 %v3581
        %v3733 = vunpack.c.l.b16 %v3582
        %v3734 = vunpack.c.h.b16 %v3582
        %v3735 = vunpack.c.l.b16 %v3583
        %v3736 = vunpack.c.h.b16 %v3583
        %v3737 = vunpack.c.l.b16 %v3584
        %v3738 = vunpack.c.h.b16 %v3584
        %v3739 = vunpack.c.l.b16 %v3585
        %v3740 = vunpack.c.h.b16 %v3585
        %v3741 = vunpack.c.l.b16 %v3586
        %v3742 = vunpack.c.h.b16 %v3586
        %v3743 = vunpack.c.l.b16 %v3587
        %v3744 = vunpack.c.h.b16 %v3587
        %v3745 = vunpack.c.l.b16 %v3588
        %v3746 = vunpack.c.h.b16 %v3588
        %v3747 = vunpack.c.l.b16 %v3589
        %v3748 = vunpack.c.h.b16 %v3589
        %v3749 = vunpack.c.l.b16 %v3590
        %v3750 = vunpack.c.h.b16 %v3590
        %v3751 = vunpack.c.l.b16 %v3591
        %v3752 = vunpack.c.h.b16 %v3591
        %v3753 = vunpack.c.l.b16 %v3592
        %v3754 = vunpack.c.h.b16 %v3592
        %v3755 = vunpack.c.l.b16 %v3593
        %v3756 = vunpack.c.h.b16 %v3593
        %v3757 = vunpack.c.l.b16 %v3594
        %v3758 = vunpack.c.h.b16 %v3594
        %v3759 = vunpack.c.l.b16 %v3595
        %v3760 = vunpack.c.h.b16 %v3595
        %v3761 = vunpack.c.l.b16 %v3596
        %v3762 = vunpack.c.h.b16 %v3596
        %v3763 = vunpack.c.l.b16 %v3597
        %v3764 = vunpack.c.h.b16 %v3597
        %v3765 = vunpack.c.l.b16 %v3598
        %v3766 = vunpack.c.h.b16 %v3598
        %v3767 = vunpack.c.l.b16 %v3599
        %v3768 = vunpack.c.h.b16 %v3599
        %v3769 = vunpack.c.l.b16 %v3600
        %v3770 = vunpack.c.h.b16 %v3600
        %v3771 = vunpack.c.l.b16 %v3601
        %v3772 = vunpack.c.h.b16 %v3601
        %v3773 = vunpack.c.l.b16 %v3602
        %v3774 = vunpack.c.h.b16 %v3602
        %v3775 = vunpack.c.l.b16 %v3603
        %v3776 = vunpack.c.h.b16 %v3603
        %v3777 = vunpack.c.l.b16 %v3604
        %v3778 = vunpack.c.h.b16 %v3604
        %v3779 = vunpack.c.l.b16 %v3605
        %v3780 = vunpack.c.h.b16 %v3605
        %v3781 = vunpack.c.l.b16 %v3606
        %v3782 = vunpack.c.h.b16 %v3606
        %v3783 = vunpack.c.l.b16 %v3607
        %v3784 = vunpack.c.h.b16 %v3607
        %v3785 = vunpack.c.l.b16 %v3608
        %v3786 = vunpack.c.h.b16 %v3608
        %v3787 = vunpack.c.l.b16 %v3609
        %v3788 = vunpack.c.h.b16 %v3609
        %v3789 = vunpack.c.l.b16 %v3610
        %v3790 = vunpack.c.h.b16 %v3610
        %v3791 = vunpack.c.l.b16 %v3611
        %v3792 = vunpack.c.h.b16 %v3611
        %v3793 = vunpack.c.l.b16 %v3612
        %v3794 = vunpack.c.h.b16 %v3612
        %v3795 = vunpack.c.l.b16 %v3613
        %v3796 = vunpack.c.h.b16 %v3613
        %v3797 = vunpack.c.l.b16 %v3614
        %v3798 = vunpack.c.h.b16 %v3614
        %v3799 = vunpack.c.l.b16 %v3615
        %v3800 = vunpack.c.h.b16 %v3615
        %v3801 = vunpack.c.l.b16 %v3616
        %v3802 = vunpack.c.h.b16 %v3616
        %v3803 = vunpack.c.l.b16 %v3617
        %v3804 = vunpack.c.h.b16 %v3617
        %v3805 = vunpack.c.l.b16 %v3618
        %v3806 = vunpack.c.h.b16 %v3618
        %v3807 = vunpack.c.l.b16 %v3619
        %v3808 = vunpack.c.h.b16 %v3619
        %v3809 = vunpack.c.l.b16 %v3620
        %v3810 = vunpack.c.h.b16 %v3620
        %v3811 = vunpack.c.l.b16 %v3621
        %v3812 = vunpack.c.h.b16 %v3621
        %v3813 = vunpack.c.l.b16 %v3622
        %v3814 = vunpack.c.h.b16 %v3622
        %v3815 = vpack.c.b16 %v3691, %v3687
        %v3816 = vpack.c.b16 %v3692, %v3688
        %v3817 = vpack.c.b16 %v3693, %v3689
        %v3818 = vpack.c.b16 %v3694, %v3690
        %v3819 = vpack.c.b16 %v3699, %v3695
        %v3820 = vpack.c.b16 %v3700, %v3696
        %v3821 = vpack.c.b16 %v3701, %v3697
        %v3822 = vpack.c.b16 %v3702, %v3698
        %v3823 = vpack.c.b16 %v3707, %v3703
        %v3824 = vpack.c.b16 %v3708, %v3704
        %v3825 = vpack.c.b16 %v3709, %v3705
        %v3826 = vpack.c.b16 %v3710, %v3706
        %v3827 = vpack.c.b16 %v3715, %v3711
        %v3828 = vpack.c.b16 %v3716, %v3712
        %v3829 = vpack.c.b16 %v3717, %v3713
        %v3830 = vpack.c.b16 %v3718, %v3714
        %v3831 = vpack.c.b16 %v3723, %v3719
        %v3832 = vpack.c.b16 %v3724, %v3720
        %v3833 = vpack.c.b16 %v3725, %v3721
        %v3834 = vpack.c.b16 %v3726, %v3722
        %v3835 = vpack.c.b16 %v3731, %v3727
        %v3836 = vpack.c.b16 %v3732, %v3728
        %v3837 = vpack.c.b16 %v3733, %v3729
        %v3838 = vpack.c.b16 %v3734, %v3730
        %v3839 = vpack.c.b16 %v3739, %v3735
        %v3840 = vpack.c.b16 %v3740, %v3736
        %v3841 = vpack.c.b16 %v3741, %v3737
        %v3842 = vpack.c.b16 %v3742, %v3738
        %v3843 = vpack.c.b16 %v3747, %v3743
        %v3844 = vpack.c.b16 %v3748, %v3744
        %v3845 = vpack.c.b16 %v3749, %v3745
        %v3846 = vpack.c.b16 %v3750, %v3746
        %v3847 = vpack.c.b16 %v3755, %v3751
        %v3848 = vpack.c.b16 %v3756, %v3752
        %v3849 = vpack.c.b16 %v3757, %v3753
        %v3850 = vpack.c.b16 %v3758, %v3754
        %v3851 = vpack.c.b16 %v3763, %v3759
        %v3852 = vpack.c.b16 %v3764, %v3760
        %v3853 = vpack.c.b16 %v3765, %v3761
        %v3854 = vpack.c.b16 %v3766, %v3762
        %v3855 = vpack.c.b16 %v3771, %v3767
        %v3856 = vpack.c.b16 %v3772, %v3768
        %v3857 = vpack.c.b16 %v3773, %v3769
        %v3858 = vpack.c.b16 %v3774, %v3770
        %v3859 = vpack.c.b16 %v3779, %v3775
        %v3860 = vpack.c.b16 %v3780, %v3776
        %v3861 = vpack.c.b16 %v3781, %v3777
        %v3862 = vpack.c.b16 %v3782, %v3778
        %v3863 = vpack.c.b16 %v3787, %v3783
        %v3864 = vpack.c.b16 %v3788, %v3784
        %v3865 = vpack.c.b16 %v3789, %v3785
        %v3866 = vpack.c.b16 %v3790, %v3786
        %v3867 = vpack.c.b16 %v3795, %v3791
        %v3868 = vpack.c.b16 %v3796, %v3792
        %v3869 = vpack.c.b16 %v3797, %v3793
        %v3870 = vpack.c.b16 %v3798, %v3794
        %v3871 = vpack.c.b16 %v3803, %v3799
        %v3872 = vpack.c.b16 %v3804, %v3800
        %v3873 = vpack.c.b16 %v3805, %v3801
        %v3874 = vpack.c.b16 %v3806, %v3802
        %v3875 = vpack.c.b16 %v3811, %v3807
        %v3876 = vpack.c.b16 %v3812, %v3808
        %v3877 = vpack.c.b16 %v3813, %v3809
        %v3878 = vpack.c.b16 %v3814, %v3810
        %3943 = vmatprep.subr.bf16.mxu0 %v3816
        %3944 = vmatpush1.bf16.msra.mxu0 %v3815
        %3945 = vmatprep.subr.bf16.mxu0 %v3820
        %3946 = vmatpush1.bf16.msra.mxu0 %v3819
        %3947 = vmatprep.subr.bf16.mxu0 %v3824
        %3948 = vmatpush1.bf16.msra.mxu0 %v3823
        %3949 = vmatprep.subr.bf16.mxu0 %v3828
        %3950 = vmatpush1.bf16.msra.mxu0 %v3827
        %3951 = vmatprep.subr.bf16.mxu0 %v3832
        %3952 = vmatpush1.bf16.msra.mxu0 %v3831
        %3953 = vmatprep.subr.bf16.mxu0 %v3836
        %3954 = vmatpush1.bf16.msra.mxu0 %v3835
        %3955 = vmatprep.subr.bf16.mxu0 %v3840
        %3956 = vmatpush1.bf16.msra.mxu0 %v3839
        %3957 = vmatprep.subr.bf16.mxu0 %v3844
        %3958 = vmatpush1.bf16.msra.mxu0 %v3843
        %3959 = vmatprep.subr.bf16.mxu0 %v3848
        %3960 = vmatpush1.bf16.msra.mxu0 %v3847
        %3961 = vmatprep.subr.bf16.mxu0 %v3852
        %3962 = vmatpush1.bf16.msra.mxu0 %v3851
        %3963 = vmatprep.subr.bf16.mxu0 %v3856
        %3964 = vmatpush1.bf16.msra.mxu0 %v3855
        %3965 = vmatprep.subr.bf16.mxu0 %v3860
        %3966 = vmatpush1.bf16.msra.mxu0 %v3859
        %3967 = vmatprep.subr.bf16.mxu0 %v3864
        %3968 = vmatpush1.bf16.msra.mxu0 %v3863
        %3969 = vmatprep.subr.bf16.mxu0 %v3868
        %3970 = vmatpush1.bf16.msra.mxu0 %v3867
        %3971 = vmatprep.subr.bf16.mxu0 %v3872
        %3972 = vmatpush1.bf16.msra.mxu0 %v3871
        %3973 = vmatprep.subr.bf16.mxu0 %v3876
        %3974 = vmatpush1.bf16.msra.mxu0 %v3875
        %3975 = vmatprep.mubr.bf16.mxu0 %v3085
        %3976 = vmatmul.mubr.bf16.gmra.mrb[0].mxu0 %v3084
        %v3977 = vpop.f32.mrb[0].mxu0
        %v3978 = vadd.f32 0.0, %v3977
        %v3979 = vpop.f32.mrb[0].mxu0
        %v3980 = vadd.f32 0.0, %v3979
        %v3981 = vpop.f32.mrb[0].mxu0
        %v3982 = vpop.f32.mrb[0].mxu0
        %3983 = vdwg.mxu0
        %3984 = vmatprep.subr.bf16.mxu0 %v3818
        %3985 = vmatpush1.bf16.msra.mxu0 %v3817
        %3986 = vmatprep.subr.bf16.mxu0 %v3822
        %3987 = vmatpush1.bf16.msra.mxu0 %v3821
        %3988 = vmatprep.subr.bf16.mxu0 %v3826
        %3989 = vmatpush1.bf16.msra.mxu0 %v3825
        %3990 = vmatprep.subr.bf16.mxu0 %v3830
        %3991 = vmatpush1.bf16.msra.mxu0 %v3829
        %3992 = vmatprep.subr.bf16.mxu0 %v3834
        %3993 = vmatpush1.bf16.msra.mxu0 %v3833
        %3994 = vmatprep.subr.bf16.mxu0 %v3838
        %3995 = vmatpush1.bf16.msra.mxu0 %v3837
        %3996 = vmatprep.subr.bf16.mxu0 %v3842
        %3997 = vmatpush1.bf16.msra.mxu0 %v3841
        %3998 = vmatprep.subr.bf16.mxu0 %v3846
        %3999 = vmatpush1.bf16.msra.mxu0 %v3845
        %4000 = vmatprep.subr.bf16.mxu0 %v3850
        %4001 = vmatpush1.bf16.msra.mxu0 %v3849
        %4002 = vmatprep.subr.bf16.mxu0 %v3854
        %4003 = vmatpush1.bf16.msra.mxu0 %v3853
        %4004 = vmatprep.subr.bf16.mxu0 %v3858
        %4005 = vmatpush1.bf16.msra.mxu0 %v3857
        %4006 = vmatprep.subr.bf16.mxu0 %v3862
        %4007 = vmatpush1.bf16.msra.mxu0 %v3861
        %4008 = vmatprep.subr.bf16.mxu0 %v3866
        %4009 = vmatpush1.bf16.msra.mxu0 %v3865
        %4010 = vmatprep.subr.bf16.mxu0 %v3870
        %4011 = vmatpush1.bf16.msra.mxu0 %v3869
        %4012 = vmatprep.subr.bf16.mxu0 %v3874
        %4013 = vmatpush1.bf16.msra.mxu0 %v3873
        %4014 = vmatprep.subr.bf16.mxu0 %v3878
        %4015 = vmatpush1.bf16.msra.mxu0 %v3877
        %4016 = vmatprep.mubr.bf16.mxu0 %v3085
        %4017 = vmatmul.mubr.bf16.gmra.mrb[0].mxu0 %v3084
        %v4018 = vpop.f32.mrb[0].mxu0
        %v4019 = vadd.f32 0.0, %v4018
        %v4020 = vpop.f32.mrb[0].mxu0
        %v4021 = vadd.f32 0.0, %v4020
        %v4022 = vpop.f32.mrb[0].mxu0
        %v4023 = vpop.f32.mrb[0].mxu0
        %4024 = vdwg.mxu0
        %s4025 = scalar_lea.vmem %s16, 8
        %v4026 = vld [vmem:[%s4025] sm:$0xf]
        %v4027 = vld [vmem:[%s4025 + $0x4] sm:$0xf]
        %v4028 = vpack.c.bf16 %v3978, %v3978
        %v4029 = vpack.c.bf16 %v3980, %v3980
        %v4030 = vpack.c.bf16 %v4019, %v4019
        %v4031 = vpack.c.bf16 %v4021, %v4021
        %v4034 = vunpack.c.l.b16 %v4026
        %v4035 = vunpack.c.l.b16 %v4027
        %v4036 = vpack.c.b16 %v4035, %v4034
        %v4038 = vsel %vm1284, %v4036, 0
        %v4041 = vsel %vm1288, %v4028, 0
        %v4044 = vsel %vm1288, %v4029, 0
        %v4047 = vsel %vm1288, %v4030, 0
        %v4050 = vsel %vm1288, %v4031, 0
        %4052 = vmatprep.subr.bf16.mxu0 %v4044
        %4053 = vmatpush1.bf16.msra.mxu0 %v4041
        %4054 = vmatprep.subr.bf16.mxu0 0
        %4055 = vmatpush1.bf16.msra.mxu0 0
        %4056 = vmatprep.subr.bf16.mxu0 0
        %4057 = vmatpush1.bf16.msra.mxu0 0
        %4058 = vmatprep.subr.bf16.mxu0 0
        %4059 = vmatpush1.bf16.msra.mxu0 0
        %4060 = vmatprep.subr.bf16.mxu0 0
        %4061 = vmatpush1.bf16.msra.mxu0 0
        %4062 = vmatprep.subr.bf16.mxu0 0
        %4063 = vmatpush1.bf16.msra.mxu0 0
        %4064 = vmatprep.subr.bf16.mxu0 0
        %4065 = vmatpush1.bf16.msra.mxu0 0
        %4066 = vmatprep.subr.bf16.mxu0 0
        %4067 = vmatpush1.bf16.msra.mxu0 0
        %4068 = vmatprep.subr.bf16.mxu0 0
        %4069 = vmatpush1.bf16.msra.mxu0 0
        %4070 = vmatprep.subr.bf16.mxu0 0
        %4071 = vmatpush1.bf16.msra.mxu0 0
        %4072 = vmatprep.subr.bf16.mxu0 0
        %4073 = vmatpush1.bf16.msra.mxu0 0
        %4074 = vmatprep.subr.bf16.mxu0 0
        %4075 = vmatpush1.bf16.msra.mxu0 0
        %4076 = vmatprep.subr.bf16.mxu0 0
        %4077 = vmatpush1.bf16.msra.mxu0 0
        %4078 = vmatprep.subr.bf16.mxu0 0
        %4079 = vmatpush1.bf16.msra.mxu0 0
        %4080 = vmatprep.subr.bf16.mxu0 0
        %4081 = vmatpush1.bf16.msra.mxu0 0
        %4082 = vmatprep.subr.bf16.mxu0 0
        %4083 = vmatpush1.bf16.msra.mxu0 0
        %4084 = vmatprep.mubr.bf16.mxu0 0
        %4085 = vmatmul.mubr.bf16.gmra.mrb[0].mxu0 %v4038
        %v4086 = vpop.f32.mrb[0].mxu0
        %v4087 = vadd.f32 0.0, %v4086
        %v4088 = vpop.f32.mrb[0].mxu0
        %v4089 = vadd.f32 0.0, %v4088
        %v4090 = vpop.f32.mrb[0].mxu0
        %v4091 = vadd.f32 0.0, %v4090
        %v4092 = vpop.f32.mrb[0].mxu0
        %v4093 = vadd.f32 0.0, %v4092
        %4094 = vdwg.mxu0
        %4095 = vmatprep.subr.bf16.mxu0 %v4050
        %4096 = vmatpush1.bf16.msra.mxu0 %v4047
        %4097 = vmatprep.subr.bf16.mxu0 0
        %4098 = vmatpush1.bf16.msra.mxu0 0
        %4099 = vmatprep.subr.bf16.mxu0 0
        %4100 = vmatpush1.bf16.msra.mxu0 0
        %4101 = vmatprep.subr.bf16.mxu0 0
        %4102 = vmatpush1.bf16.msra.mxu0 0
        %4103 = vmatprep.subr.bf16.mxu0 0
        %4104 = vmatpush1.bf16.msra.mxu0 0
        %4105 = vmatprep.subr.bf16.mxu0 0
        %4106 = vmatpush1.bf16.msra.mxu0 0
        %4107 = vmatprep.subr.bf16.mxu0 0
        %4108 = vmatpush1.bf16.msra.mxu0 0
        %4109 = vmatprep.subr.bf16.mxu0 0
        %4110 = vmatpush1.bf16.msra.mxu0 0
        %4111 = vmatprep.subr.bf16.mxu0 0
        %4112 = vmatpush1.bf16.msra.mxu0 0
        %4113 = vmatprep.subr.bf16.mxu0 0
        %4114 = vmatpush1.bf16.msra.mxu0 0
        %4115 = vmatprep.subr.bf16.mxu0 0
        %4116 = vmatpush1.bf16.msra.mxu0 0
        %4117 = vmatprep.subr.bf16.mxu0 0
        %4118 = vmatpush1.bf16.msra.mxu0 0
        %4119 = vmatprep.subr.bf16.mxu0 0
        %4120 = vmatpush1.bf16.msra.mxu0 0
        %4121 = vmatprep.subr.bf16.mxu0 0
        %4122 = vmatpush1.bf16.msra.mxu0 0
        %4123 = vmatprep.subr.bf16.mxu0 0
        %4124 = vmatpush1.bf16.msra.mxu0 0
        %4125 = vmatprep.subr.bf16.mxu0 0
        %4126 = vmatpush1.bf16.msra.mxu0 0
        %4127 = vmatprep.mubr.bf16.mxu0 0
        %4128 = vmatmul.mubr.bf16.gmra.mrb[0].mxu0 %v4038
        %v4129 = vpop.f32.mrb[0].mxu0
        %v4130 = vadd.f32 0.0, %v4129
        %v4131 = vpop.f32.mrb[0].mxu0
        %v4132 = vadd.f32 0.0, %v4131
        %v4133 = vpop.f32.mrb[0].mxu0
        %v4134 = vadd.f32 0.0, %v4133
        %v4135 = vpop.f32.mrb[0].mxu0
        %v4136 = vadd.f32 0.0, %v4135
        %4137 = vdwg.mxu0
        %v4140 = vunpack.c.l.b16 %v3552
        %v4141 = vunpack.c.l.b16 %v3553
        %v4142 = vpack.c.b16 %v4141, %v4140
        %v4144 = vsel %vm1284, %v4142, 0
        %v4147 = vsel %vm1288, %v3554, 0
        %v4150 = vsel %vm1288, %v3555, 0
        %v4153 = vsel %vm1288, %v3556, 0
        %v4156 = vsel %vm1288, %v3557, 0
        %4158 = vmatprep.subr.bf16.mxu0 %v4150
        %4159 = vmatpush1.bf16.msra.mxu0 %v4147
        %4160 = vmatprep.subr.bf16.mxu0 0
        %4161 = vmatpush1.bf16.msra.mxu0 0
        %4162 = vmatprep.subr.bf16.mxu0 0
        %4163 = vmatpush1.bf16.msra.mxu0 0
        %4164 = vmatprep.subr.bf16.mxu0 0
        %4165 = vmatpush1.bf16.msra.mxu0 0
        %4166 = vmatprep.subr.bf16.mxu0 0
        %4167 = vmatpush1.bf16.msra.mxu0 0
        %4168 = vmatprep.subr.bf16.mxu0 0
        %4169 = vmatpush1.bf16.msra.mxu0 0
        %4170 = vmatprep.subr.bf16.mxu0 0
        %4171 = vmatpush1.bf16.msra.mxu0 0
        %4172 = vmatprep.subr.bf16.mxu0 0
        %4173 = vmatpush1.bf16.msra.mxu0 0
        %4174 = vmatprep.subr.bf16.mxu0 0
        %4175 = vmatpush1.bf16.msra.mxu0 0
        %4176 = vmatprep.subr.bf16.mxu0 0
        %4177 = vmatpush1.bf16.msra.mxu0 0
        %4178 = vmatprep.subr.bf16.mxu0 0
        %4179 = vmatpush1.bf16.msra.mxu0 0
        %4180 = vmatprep.subr.bf16.mxu0 0
        %4181 = vmatpush1.bf16.msra.mxu0 0
        %4182 = vmatprep.subr.bf16.mxu0 0
        %4183 = vmatpush1.bf16.msra.mxu0 0
        %4184 = vmatprep.subr.bf16.mxu0 0
        %4185 = vmatpush1.bf16.msra.mxu0 0
        %4186 = vmatprep.subr.bf16.mxu0 0
        %4187 = vmatpush1.bf16.msra.mxu0 0
        %4188 = vmatprep.subr.bf16.mxu0 0
        %4189 = vmatpush1.bf16.msra.mxu0 0
        %4190 = vmatprep.mubr.bf16.mxu0 0
        %4191 = vmatmul.mubr.bf16.gmra.mrb[0].mxu0 %v4144
        %v4192 = vpop.f32.mrb[0].mxu0
        %v4193 = vadd.f32 %v4087, %v4192
        %v4194 = vpop.f32.mrb[0].mxu0
        %v4195 = vadd.f32 %v4089, %v4194
        %v4196 = vpop.f32.mrb[0].mxu0
        %v4197 = vadd.f32 %v4091, %v4196
        %v4198 = vpop.f32.mrb[0].mxu0
        %v4199 = vadd.f32 %v4093, %v4198
        %4200 = vdwg.mxu0
        %4201 = vmatprep.subr.bf16.mxu0 %v4156
        %4202 = vmatpush1.bf16.msra.mxu0 %v4153
        %4203 = vmatprep.subr.bf16.mxu0 0
        %4204 = vmatpush1.bf16.msra.mxu0 0
        %4205 = vmatprep.subr.bf16.mxu0 0
        %4206 = vmatpush1.bf16.msra.mxu0 0
        %4207 = vmatprep.subr.bf16.mxu0 0
        %4208 = vmatpush1.bf16.msra.mxu0 0
        %4209 = vmatprep.subr.bf16.mxu0 0
        %4210 = vmatpush1.bf16.msra.mxu0 0
        %4211 = vmatprep.subr.bf16.mxu0 0
        %4212 = vmatpush1.bf16.msra.mxu0 0
        %4213 = vmatprep.subr.bf16.mxu0 0
        %4214 = vmatpush1.bf16.msra.mxu0 0
        %4215 = vmatprep.subr.bf16.mxu0 0
        %4216 = vmatpush1.bf16.msra.mxu0 0
        %4217 = vmatprep.subr.bf16.mxu0 0
        %4218 = vmatpush1.bf16.msra.mxu0 0
        %4219 = vmatprep.subr.bf16.mxu0 0
        %4220 = vmatpush1.bf16.msra.mxu0 0
        %4221 = vmatprep.subr.bf16.mxu0 0
        %4222 = vmatpush1.bf16.msra.mxu0 0
        %4223 = vmatprep.subr.bf16.mxu0 0
        %4224 = vmatpush1.bf16.msra.mxu0 0
        %4225 = vmatprep.subr.bf16.mxu0 0
        %4226 = vmatpush1.bf16.msra.mxu0 0
        %4227 = vmatprep.subr.bf16.mxu0 0
        %4228 = vmatpush1.bf16.msra.mxu0 0
        %4229 = vmatprep.subr.bf16.mxu0 0
        %4230 = vmatpush1.bf16.msra.mxu0 0
        %4231 = vmatprep.subr.bf16.mxu0 0
        %4232 = vmatpush1.bf16.msra.mxu0 0
        %4233 = vmatprep.mubr.bf16.mxu0 0
        %4234 = vmatmul.mubr.bf16.gmra.mrb[0].mxu0 %v4144
        %v4235 = vpop.f32.mrb[0].mxu0
        %v4236 = vadd.f32 %v4130, %v4235
        %v4237 = vpop.f32.mrb[0].mxu0
        %v4238 = vadd.f32 %v4132, %v4237
        %v4239 = vpop.f32.mrb[0].mxu0
        %v4240 = vadd.f32 %v4134, %v4239
        %v4241 = vpop.f32.mrb[0].mxu0
        %v4242 = vadd.f32 %v4136, %v4241
        %4243 = vdwg.mxu0
        %v4244 = vld [vmem:[#allocation18] sm:$0xf]
        %v4246 = vlaneseq
        %v4247 = vshrl.u32 %v4246, 7
        %v4248 = vsub.s32 0, %v4247
        %v4249 = vrot.slane %v4244, %v4248
        %v4250 = vlaneseq
        %v4251 = vshrl.u32 %v4250, 7
        %v4252 = vsub.s32 1, %v4251
        %v4253 = vrot.slane %v4244, %v4252
        %v4254 = vlaneseq
        %v4255 = vshrl.u32 %v4254, 7
        %v4256 = vsub.s32 2, %v4255
        %v4257 = vrot.slane %v4244, %v4256
        %v4258 = vlaneseq
        %v4259 = vshrl.u32 %v4258, 7
        %v4260 = vsub.s32 3, %v4259
        %v4261 = vrot.slane %v4244, %v4260
        %v4266 = vadd.f32 %v4193, %v4249
        %v4267 = vadd.f32 %v4195, %v4253
        %v4268 = vadd.f32 %v4236, %v4257
        %v4269 = vadd.f32 %v4238, %v4261
        %v4270 = vadd.f32 %v4197, %v4249
        %v4271 = vadd.f32 %v4199, %v4253
        %v4272 = vadd.f32 %v4240, %v4257
        %v4273 = vadd.f32 %v4242, %v4261
        %v4274 = vpack.c.bf16 %v4270, %v4266
        %v4275 = vpack.c.bf16 %v4271, %v4267
        %v4276 = vpack.c.bf16 %v4272, %v4268
        %v4277 = vpack.c.bf16 %v4273, %v4269
        %v4278 = vld [vmem:[#allocation19] sm:$0xf]
        %v4279 = vld [vmem:[#allocation19 + $0x4] sm:$0xf]
        %v4282 = vunpack.c.l.b16 %v4278
        %v4283 = vunpack.c.l.b16 %v4279
        %v4284 = vpack.c.b16 %v4283, %v4282
        %v4286 = vsel %vm866, %v4284, 0
        %4288 = vmatprep.subr.bf16.mxu0 %v4275
        %4289 = vmatpush1.bf16.msra.mxu0 %v4274
        %4290 = vmatprep.subr.bf16.mxu0 0
        %4291 = vmatpush1.bf16.msra.mxu0 0
        %4292 = vmatprep.subr.bf16.mxu0 0
        %4293 = vmatpush1.bf16.msra.mxu0 0
        %4294 = vmatprep.subr.bf16.mxu0 0
        %4295 = vmatpush1.bf16.msra.mxu0 0
        %4296 = vmatprep.subr.bf16.mxu0 0
        %4297 = vmatpush1.bf16.msra.mxu0 0
        %4298 = vmatprep.subr.bf16.mxu0 0
        %4299 = vmatpush1.bf16.msra.mxu0 0
        %4300 = vmatprep.subr.bf16.mxu0 0
        %4301 = vmatpush1.bf16.msra.mxu0 0
        %4302 = vmatprep.subr.bf16.mxu0 0
        %4303 = vmatpush1.bf16.msra.mxu0 0
        %4304 = vmatprep.subr.bf16.mxu0 0
        %4305 = vmatpush1.bf16.msra.mxu0 0
        %4306 = vmatprep.subr.bf16.mxu0 0
        %4307 = vmatpush1.bf16.msra.mxu0 0
        %4308 = vmatprep.subr.bf16.mxu0 0
        %4309 = vmatpush1.bf16.msra.mxu0 0
        %4310 = vmatprep.subr.bf16.mxu0 0
        %4311 = vmatpush1.bf16.msra.mxu0 0
        %4312 = vmatprep.subr.bf16.mxu0 0
        %4313 = vmatpush1.bf16.msra.mxu0 0
        %4314 = vmatprep.subr.bf16.mxu0 0
        %4315 = vmatpush1.bf16.msra.mxu0 0
        %4316 = vmatprep.subr.bf16.mxu0 0
        %4317 = vmatpush1.bf16.msra.mxu0 0
        %4318 = vmatprep.subr.bf16.mxu0 0
        %4319 = vmatpush1.bf16.msra.mxu0 0
        %4320 = vmatprep.mubr.bf16.mxu0 0
        %4321 = vmatmul.mubr.bf16.gmra.mrb[0].mxu0 %v4286
        %v4322 = vpop.f32.mrb[0].mxu0
        %v4323 = vadd.f32 0.0, %v4322
        %v4324 = vpop.f32.mrb[0].mxu0
        %v4325 = vadd.f32 0.0, %v4324
        %v4326 = vpop.f32.mrb[0].mxu0
        %v4327 = vadd.f32 0.0, %v4326
        %v4328 = vpop.f32.mrb[0].mxu0
        %v4329 = vadd.f32 0.0, %v4328
        %4330 = vdwg.mxu0
        %4331 = vmatprep.subr.bf16.mxu0 %v4277
        %4332 = vmatpush1.bf16.msra.mxu0 %v4276
        %4333 = vmatprep.subr.bf16.mxu0 0
        %4334 = vmatpush1.bf16.msra.mxu0 0
        %4335 = vmatprep.subr.bf16.mxu0 0
        %4336 = vmatpush1.bf16.msra.mxu0 0
        %4337 = vmatprep.subr.bf16.mxu0 0
        %4338 = vmatpush1.bf16.msra.mxu0 0
        %4339 = vmatprep.subr.bf16.mxu0 0
        %4340 = vmatpush1.bf16.msra.mxu0 0
        %4341 = vmatprep.subr.bf16.mxu0 0
        %4342 = vmatpush1.bf16.msra.mxu0 0
        %4343 = vmatprep.subr.bf16.mxu0 0
        %4344 = vmatpush1.bf16.msra.mxu0 0
        %4345 = vmatprep.subr.bf16.mxu0 0
        %4346 = vmatpush1.bf16.msra.mxu0 0
        %4347 = vmatprep.subr.bf16.mxu0 0
        %4348 = vmatpush1.bf16.msra.mxu0 0
        %4349 = vmatprep.subr.bf16.mxu0 0
        %4350 = vmatpush1.bf16.msra.mxu0 0
        %4351 = vmatprep.subr.bf16.mxu0 0
        %4352 = vmatpush1.bf16.msra.mxu0 0
        %4353 = vmatprep.subr.bf16.mxu0 0
        %4354 = vmatpush1.bf16.msra.mxu0 0
        %4355 = vmatprep.subr.bf16.mxu0 0
        %4356 = vmatpush1.bf16.msra.mxu0 0
        %4357 = vmatprep.subr.bf16.mxu0 0
        %4358 = vmatpush1.bf16.msra.mxu0 0
        %4359 = vmatprep.subr.bf16.mxu0 0
        %4360 = vmatpush1.bf16.msra.mxu0 0
        %4361 = vmatprep.subr.bf16.mxu0 0
        %4362 = vmatpush1.bf16.msra.mxu0 0
        %4363 = vmatprep.mubr.bf16.mxu0 0
        %4364 = vmatmul.mubr.bf16.gmra.mrb[0].mxu0 %v4286
        %v4365 = vpop.f32.mrb[0].mxu0
        %v4366 = vadd.f32 0.0, %v4365
        %v4367 = vpop.f32.mrb[0].mxu0
        %v4368 = vadd.f32 0.0, %v4367
        %v4369 = vpop.f32.mrb[0].mxu0
        %v4370 = vadd.f32 0.0, %v4369
        %v4371 = vpop.f32.mrb[0].mxu0
        %v4372 = vadd.f32 0.0, %v4371
        %4373 = vdwg.mxu0
        %v4374 = vpack.c.bf16 %v4327, %v4323
        %v4375 = vpack.c.bf16 %v4329, %v4325
        %v4376 = vpack.c.bf16 %v4370, %v4366
        %v4377 = vpack.c.bf16 %v4372, %v4368
        %v4378 = vld [vmem:[%s20] sm:$0xf]
        %v4379 = vld [vmem:[%s20 + $0x4] sm:$0xf]
        %v4380 = vld [vmem:[%s20 + $0x8] sm:$0xf]
        %v4381 = vld [vmem:[%s20 + $0xc] sm:$0xf]
        %v4382 = vld [vmem:[%s20 + $0x10] sm:$0xf]
        %v4383 = vld [vmem:[%s20 + $0x14] sm:$0xf]
        %v4384 = vld [vmem:[%s20 + $0x18] sm:$0xf]
        %v4385 = vld [vmem:[%s20 + $0x1c] sm:$0xf]
        %v4386 = vld [vmem:[%s20 + $0x20] sm:$0xf]
        %v4387 = vld [vmem:[%s20 + $0x24] sm:$0xf]
        %v4388 = vld [vmem:[%s20 + $0x28] sm:$0xf]
        %v4389 = vld [vmem:[%s20 + $0x2c] sm:$0xf]
        %v4390 = vld [vmem:[%s20 + $0x30] sm:$0xf]
        %v4391 = vld [vmem:[%s20 + $0x34] sm:$0xf]
        %v4392 = vld [vmem:[%s20 + $0x38] sm:$0xf]
        %v4393 = vld [vmem:[%s20 + $0x3c] sm:$0xf]
        %v4394 = vld [vmem:[%s20 + $0x40] sm:$0xf]
        %v4395 = vld [vmem:[%s20 + $0x44] sm:$0xf]
        %v4396 = vld [vmem:[%s20 + $0x48] sm:$0xf]
        %v4397 = vld [vmem:[%s20 + $0x4c] sm:$0xf]
        %v4398 = vld [vmem:[%s20 + $0x50] sm:$0xf]
        %v4399 = vld [vmem:[%s20 + $0x54] sm:$0xf]
        %v4400 = vld [vmem:[%s20 + $0x58] sm:$0xf]
        %v4401 = vld [vmem:[%s20 + $0x5c] sm:$0xf]
        %v4402 = vld [vmem:[%s20 + $0x60] sm:$0xf]
        %v4403 = vld [vmem:[%s20 + $0x64] sm:$0xf]
        %v4404 = vld [vmem:[%s20 + $0x68] sm:$0xf]
        %v4405 = vld [vmem:[%s20 + $0x6c] sm:$0xf]
        %v4406 = vld [vmem:[%s20 + $0x70] sm:$0xf]
        %v4407 = vld [vmem:[%s20 + $0x74] sm:$0xf]
        %v4408 = vld [vmem:[%s20 + $0x78] sm:$0xf]
        %v4409 = vld [vmem:[%s20 + $0x7c] sm:$0xf]
        %v4410 = vld [vmem:[%s20 + $0x80] sm:$0xf]
        %v4411 = vld [vmem:[%s20 + $0x84] sm:$0xf]
        %v4412 = vld [vmem:[%s20 + $0x88] sm:$0xf]
        %v4413 = vld [vmem:[%s20 + $0x8c] sm:$0xf]
        %v4414 = vld [vmem:[%s20 + $0x90] sm:$0xf]
        %v4415 = vld [vmem:[%s20 + $0x94] sm:$0xf]
        %v4416 = vld [vmem:[%s20 + $0x98] sm:$0xf]
        %v4417 = vld [vmem:[%s20 + $0x9c] sm:$0xf]
        %v4418 = vld [vmem:[%s20 + $0xa0] sm:$0xf]
        %v4419 = vld [vmem:[%s20 + $0xa4] sm:$0xf]
        %v4420 = vld [vmem:[%s20 + $0xa8] sm:$0xf]
        %v4421 = vld [vmem:[%s20 + $0xac] sm:$0xf]
        %v4422 = vld [vmem:[%s20 + $0xb0] sm:$0xf]
        %v4423 = vld [vmem:[%s20 + $0xb4] sm:$0xf]
        %v4424 = vld [vmem:[%s20 + $0xb8] sm:$0xf]
        %v4425 = vld [vmem:[%s20 + $0xbc] sm:$0xf]
        %v4426 = vld [vmem:[%s20 + $0xc0] sm:$0xf]
        %v4427 = vld [vmem:[%s20 + $0xc4] sm:$0xf]
        %v4428 = vld [vmem:[%s20 + $0xc8] sm:$0xf]
        %v4429 = vld [vmem:[%s20 + $0xcc] sm:$0xf]
        %v4430 = vld [vmem:[%s20 + $0xd0] sm:$0xf]
        %v4431 = vld [vmem:[%s20 + $0xd4] sm:$0xf]
        %v4432 = vld [vmem:[%s20 + $0xd8] sm:$0xf]
        %v4433 = vld [vmem:[%s20 + $0xdc] sm:$0xf]
        %v4434 = vld [vmem:[%s20 + $0xe0] sm:$0xf]
        %v4435 = vld [vmem:[%s20 + $0xe4] sm:$0xf]
        %v4436 = vld [vmem:[%s20 + $0xe8] sm:$0xf]
        %v4437 = vld [vmem:[%s20 + $0xec] sm:$0xf]
        %v4438 = vld [vmem:[%s20 + $0xf0] sm:$0xf]
        %v4439 = vld [vmem:[%s20 + $0xf4] sm:$0xf]
        %v4440 = vld [vmem:[%s20 + $0xf8] sm:$0xf]
        %v4441 = vld [vmem:[%s20 + $0xfc] sm:$0xf]
        %s4442 = scalar_lea.vmem [#allocation19], 8
        %v4443 = vld [vmem:[%s4442] sm:$0xf]
        %v4444 = vld [vmem:[%s4442 + $0x4] sm:$0xf]
        %v4447 = vunpack.c.l.b16 %v4443
        %v4448 = vunpack.c.l.b16 %v4444
        %v4449 = vpack.c.b16 %v4448, %v4447
        %v4451 = vsel %vm866, %v4449, 0
        %4453 = vmatprep.subr.bf16.mxu0 %v4275
        %4454 = vmatpush1.bf16.msra.mxu0 %v4274
        %4455 = vmatprep.subr.bf16.mxu0 0
        %4456 = vmatpush1.bf16.msra.mxu0 0
        %4457 = vmatprep.subr.bf16.mxu0 0
        %4458 = vmatpush1.bf16.msra.mxu0 0
        %4459 = vmatprep.subr.bf16.mxu0 0
        %4460 = vmatpush1.bf16.msra.mxu0 0
        %4461 = vmatprep.subr.bf16.mxu0 0
        %4462 = vmatpush1.bf16.msra.mxu0 0
        %4463 = vmatprep.subr.bf16.mxu0 0
        %4464 = vmatpush1.bf16.msra.mxu0 0
        %4465 = vmatprep.subr.bf16.mxu0 0
        %4466 = vmatpush1.bf16.msra.mxu0 0
        %4467 = vmatprep.subr.bf16.mxu0 0
        %4468 = vmatpush1.bf16.msra.mxu0 0
        %4469 = vmatprep.subr.bf16.mxu0 0
        %4470 = vmatpush1.bf16.msra.mxu0 0
        %4471 = vmatprep.subr.bf16.mxu0 0
        %4472 = vmatpush1.bf16.msra.mxu0 0
        %4473 = vmatprep.subr.bf16.mxu0 0
        %4474 = vmatpush1.bf16.msra.mxu0 0
        %4475 = vmatprep.subr.bf16.mxu0 0
        %4476 = vmatpush1.bf16.msra.mxu0 0
        %4477 = vmatprep.subr.bf16.mxu0 0
        %4478 = vmatpush1.bf16.msra.mxu0 0
        %4479 = vmatprep.subr.bf16.mxu0 0
        %4480 = vmatpush1.bf16.msra.mxu0 0
        %4481 = vmatprep.subr.bf16.mxu0 0
        %4482 = vmatpush1.bf16.msra.mxu0 0
        %4483 = vmatprep.subr.bf16.mxu0 0
        %4484 = vmatpush1.bf16.msra.mxu0 0
        %4485 = vmatprep.mubr.bf16.mxu0 0
        %4486 = vmatmul.mubr.bf16.gmra.mrb[0].mxu0 %v4451
        %v4487 = vpop.f32.mrb[0].mxu0
        %v4488 = vadd.f32 0.0, %v4487
        %v4489 = vpop.f32.mrb[0].mxu0
        %v4490 = vadd.f32 0.0, %v4489
        %v4491 = vpop.f32.mrb[0].mxu0
        %v4492 = vadd.f32 0.0, %v4491
        %v4493 = vpop.f32.mrb[0].mxu0
        %v4494 = vadd.f32 0.0, %v4493
        %4495 = vdwg.mxu0
        %4496 = vmatprep.subr.bf16.mxu0 %v4277
        %4497 = vmatpush1.bf16.msra.mxu0 %v4276
        %4498 = vmatprep.subr.bf16.mxu0 0
        %4499 = vmatpush1.bf16.msra.mxu0 0
        %4500 = vmatprep.subr.bf16.mxu0 0
        %4501 = vmatpush1.bf16.msra.mxu0 0
        %4502 = vmatprep.subr.bf16.mxu0 0
        %4503 = vmatpush1.bf16.msra.mxu0 0
        %4504 = vmatprep.subr.bf16.mxu0 0
        %4505 = vmatpush1.bf16.msra.mxu0 0
        %4506 = vmatprep.subr.bf16.mxu0 0
        %4507 = vmatpush1.bf16.msra.mxu0 0
        %4508 = vmatprep.subr.bf16.mxu0 0
        %4509 = vmatpush1.bf16.msra.mxu0 0
        %4510 = vmatprep.subr.bf16.mxu0 0
        %4511 = vmatpush1.bf16.msra.mxu0 0
        %4512 = vmatprep.subr.bf16.mxu0 0
        %4513 = vmatpush1.bf16.msra.mxu0 0
        %4514 = vmatprep.subr.bf16.mxu0 0
        %4515 = vmatpush1.bf16.msra.mxu0 0
        %4516 = vmatprep.subr.bf16.mxu0 0
        %4517 = vmatpush1.bf16.msra.mxu0 0
        %4518 = vmatprep.subr.bf16.mxu0 0
        %4519 = vmatpush1.bf16.msra.mxu0 0
        %4520 = vmatprep.subr.bf16.mxu0 0
        %4521 = vmatpush1.bf16.msra.mxu0 0
        %4522 = vmatprep.subr.bf16.mxu0 0
        %4523 = vmatpush1.bf16.msra.mxu0 0
        %4524 = vmatprep.subr.bf16.mxu0 0
        %4525 = vmatpush1.bf16.msra.mxu0 0
        %4526 = vmatprep.subr.bf16.mxu0 0
        %4527 = vmatpush1.bf16.msra.mxu0 0
        %4528 = vmatprep.mubr.bf16.mxu0 0
        %4529 = vmatmul.mubr.bf16.gmra.mrb[0].mxu0 %v4451
        %v4530 = vpop.f32.mrb[0].mxu0
        %v4531 = vadd.f32 0.0, %v4530
        %v4532 = vpop.f32.mrb[0].mxu0
        %v4533 = vadd.f32 0.0, %v4532
        %v4534 = vpop.f32.mrb[0].mxu0
        %v4535 = vadd.f32 0.0, %v4534
        %v4536 = vpop.f32.mrb[0].mxu0
        %v4537 = vadd.f32 0.0, %v4536
        %4538 = vdwg.mxu0
        %v4539 = vpack.c.bf16 %v4492, %v4488
        %v4540 = vpack.c.bf16 %v4494, %v4490
        %v4541 = vpack.c.bf16 %v4535, %v4531
        %v4542 = vpack.c.bf16 %v4537, %v4533
        %s4543 = scalar_lea.vmem %s20, 256
        %v4544 = vld [vmem:[%s4543] sm:$0xf]
        %v4545 = vld [vmem:[%s4543 + $0x4] sm:$0xf]
        %v4546 = vld [vmem:[%s4543 + $0x8] sm:$0xf]
        %v4547 = vld [vmem:[%s4543 + $0xc] sm:$0xf]
        %v4548 = vld [vmem:[%s4543 + $0x10] sm:$0xf]
        %v4549 = vld [vmem:[%s4543 + $0x14] sm:$0xf]
        %v4550 = vld [vmem:[%s4543 + $0x18] sm:$0xf]
        %v4551 = vld [vmem:[%s4543 + $0x1c] sm:$0xf]
        %v4552 = vld [vmem:[%s4543 + $0x20] sm:$0xf]
        %v4553 = vld [vmem:[%s4543 + $0x24] sm:$0xf]
        %v4554 = vld [vmem:[%s4543 + $0x28] sm:$0xf]
        %v4555 = vld [vmem:[%s4543 + $0x2c] sm:$0xf]
        %v4556 = vld [vmem:[%s4543 + $0x30] sm:$0xf]
        %v4557 = vld [vmem:[%s4543 + $0x34] sm:$0xf]
        %v4558 = vld [vmem:[%s4543 + $0x38] sm:$0xf]
        %v4559 = vld [vmem:[%s4543 + $0x3c] sm:$0xf]
        %v4560 = vld [vmem:[%s4543 + $0x40] sm:$0xf]
        %v4561 = vld [vmem:[%s4543 + $0x44] sm:$0xf]
        %v4562 = vld [vmem:[%s4543 + $0x48] sm:$0xf]
        %v4563 = vld [vmem:[%s4543 + $0x4c] sm:$0xf]
        %v4564 = vld [vmem:[%s4543 + $0x50] sm:$0xf]
        %v4565 = vld [vmem:[%s4543 + $0x54] sm:$0xf]
        %v4566 = vld [vmem:[%s4543 + $0x58] sm:$0xf]
        %v4567 = vld [vmem:[%s4543 + $0x5c] sm:$0xf]
        %v4568 = vld [vmem:[%s4543 + $0x60] sm:$0xf]
        %v4569 = vld [vmem:[%s4543 + $0x64] sm:$0xf]
        %v4570 = vld [vmem:[%s4543 + $0x68] sm:$0xf]
        %v4571 = vld [vmem:[%s4543 + $0x6c] sm:$0xf]
        %v4572 = vld [vmem:[%s4543 + $0x70] sm:$0xf]
        %v4573 = vld [vmem:[%s4543 + $0x74] sm:$0xf]
        %v4574 = vld [vmem:[%s4543 + $0x78] sm:$0xf]
        %v4575 = vld [vmem:[%s4543 + $0x7c] sm:$0xf]
        %v4576 = vld [vmem:[%s4543 + $0x80] sm:$0xf]
        %v4577 = vld [vmem:[%s4543 + $0x84] sm:$0xf]
        %v4578 = vld [vmem:[%s4543 + $0x88] sm:$0xf]
        %v4579 = vld [vmem:[%s4543 + $0x8c] sm:$0xf]
        %v4580 = vld [vmem:[%s4543 + $0x90] sm:$0xf]
        %v4581 = vld [vmem:[%s4543 + $0x94] sm:$0xf]
        %v4582 = vld [vmem:[%s4543 + $0x98] sm:$0xf]
        %v4583 = vld [vmem:[%s4543 + $0x9c] sm:$0xf]
        %v4584 = vld [vmem:[%s4543 + $0xa0] sm:$0xf]
        %v4585 = vld [vmem:[%s4543 + $0xa4] sm:$0xf]
        %v4586 = vld [vmem:[%s4543 + $0xa8] sm:$0xf]
        %v4587 = vld [vmem:[%s4543 + $0xac] sm:$0xf]
        %v4588 = vld [vmem:[%s4543 + $0xb0] sm:$0xf]
        %v4589 = vld [vmem:[%s4543 + $0xb4] sm:$0xf]
        %v4590 = vld [vmem:[%s4543 + $0xb8] sm:$0xf]
        %v4591 = vld [vmem:[%s4543 + $0xbc] sm:$0xf]
        %v4592 = vld [vmem:[%s4543 + $0xc0] sm:$0xf]
        %v4593 = vld [vmem:[%s4543 + $0xc4] sm:$0xf]
        %v4594 = vld [vmem:[%s4543 + $0xc8] sm:$0xf]
        %v4595 = vld [vmem:[%s4543 + $0xcc] sm:$0xf]
        %v4596 = vld [vmem:[%s4543 + $0xd0] sm:$0xf]
        %v4597 = vld [vmem:[%s4543 + $0xd4] sm:$0xf]
        %v4598 = vld [vmem:[%s4543 + $0xd8] sm:$0xf]
        %v4599 = vld [vmem:[%s4543 + $0xdc] sm:$0xf]
        %v4600 = vld [vmem:[%s4543 + $0xe0] sm:$0xf]
        %v4601 = vld [vmem:[%s4543 + $0xe4] sm:$0xf]
        %v4602 = vld [vmem:[%s4543 + $0xe8] sm:$0xf]
        %v4603 = vld [vmem:[%s4543 + $0xec] sm:$0xf]
        %v4604 = vld [vmem:[%s4543 + $0xf0] sm:$0xf]
        %v4605 = vld [vmem:[%s4543 + $0xf4] sm:$0xf]
        %v4606 = vld [vmem:[%s4543 + $0xf8] sm:$0xf]
        %v4607 = vld [vmem:[%s4543 + $0xfc] sm:$0xf]
        %v4672 = vunpack.c.l.b16 %v4544
        %v4673 = vunpack.c.l.b16 %v4545
        %v4674 = vunpack.c.l.b16 %v4546
        %v4675 = vunpack.c.l.b16 %v4547
        %v4676 = vunpack.c.l.b16 %v4548
        %v4677 = vunpack.c.l.b16 %v4549
        %v4678 = vunpack.c.l.b16 %v4550
        %v4679 = vunpack.c.l.b16 %v4551
        %v4680 = vunpack.c.l.b16 %v4552
        %v4681 = vunpack.c.l.b16 %v4553
        %v4682 = vunpack.c.l.b16 %v4554
        %v4683 = vunpack.c.l.b16 %v4555
        %v4684 = vunpack.c.l.b16 %v4556
        %v4685 = vunpack.c.l.b16 %v4557
        %v4686 = vunpack.c.l.b16 %v4558
        %v4687 = vunpack.c.l.b16 %v4559
        %v4688 = vunpack.c.l.b16 %v4560
        %v4689 = vunpack.c.l.b16 %v4561
        %v4690 = vunpack.c.l.b16 %v4562
        %v4691 = vunpack.c.l.b16 %v4563
        %v4692 = vunpack.c.l.b16 %v4564
        %v4693 = vunpack.c.l.b16 %v4565
        %v4694 = vunpack.c.l.b16 %v4566
        %v4695 = vunpack.c.l.b16 %v4567
        %v4696 = vunpack.c.l.b16 %v4568
        %v4697 = vunpack.c.l.b16 %v4569
        %v4698 = vunpack.c.l.b16 %v4570
        %v4699 = vunpack.c.l.b16 %v4571
        %v4700 = vunpack.c.l.b16 %v4572
        %v4701 = vunpack.c.l.b16 %v4573
        %v4702 = vunpack.c.l.b16 %v4574
        %v4703 = vunpack.c.l.b16 %v4575
        %v4704 = vunpack.c.l.b16 %v4576
        %v4705 = vunpack.c.l.b16 %v4577
        %v4706 = vunpack.c.l.b16 %v4578
        %v4707 = vunpack.c.l.b16 %v4579
        %v4708 = vunpack.c.l.b16 %v4580
        %v4709 = vunpack.c.l.b16 %v4581
        %v4710 = vunpack.c.l.b16 %v4582
        %v4711 = vunpack.c.l.b16 %v4583
        %v4712 = vunpack.c.l.b16 %v4584
        %v4713 = vunpack.c.l.b16 %v4585
        %v4714 = vunpack.c.l.b16 %v4586
        %v4715 = vunpack.c.l.b16 %v4587
        %v4716 = vunpack.c.l.b16 %v4588
        %v4717 = vunpack.c.l.b16 %v4589
        %v4718 = vunpack.c.l.b16 %v4590
        %v4719 = vunpack.c.l.b16 %v4591
        %v4720 = vunpack.c.l.b16 %v4592
        %v4721 = vunpack.c.l.b16 %v4593
        %v4722 = vunpack.c.l.b16 %v4594
        %v4723 = vunpack.c.l.b16 %v4595
        %v4724 = vunpack.c.l.b16 %v4596
        %v4725 = vunpack.c.l.b16 %v4597
        %v4726 = vunpack.c.l.b16 %v4598
        %v4727 = vunpack.c.l.b16 %v4599
        %v4728 = vunpack.c.l.b16 %v4600
        %v4729 = vunpack.c.l.b16 %v4601
        %v4730 = vunpack.c.l.b16 %v4602
        %v4731 = vunpack.c.l.b16 %v4603
        %v4732 = vunpack.c.l.b16 %v4604
        %v4733 = vunpack.c.l.b16 %v4605
        %v4734 = vunpack.c.l.b16 %v4606
        %v4735 = vunpack.c.l.b16 %v4607
        %v4736 = vpack.c.b16 %v4673, %v4672
        %v4737 = vpack.c.b16 %v4675, %v4674
        %v4738 = vpack.c.b16 %v4677, %v4676
        %v4739 = vpack.c.b16 %v4679, %v4678
        %v4740 = vpack.c.b16 %v4681, %v4680
        %v4741 = vpack.c.b16 %v4683, %v4682
        %v4742 = vpack.c.b16 %v4685, %v4684
        %v4743 = vpack.c.b16 %v4687, %v4686
        %v4744 = vpack.c.b16 %v4689, %v4688
        %v4745 = vpack.c.b16 %v4691, %v4690
        %v4746 = vpack.c.b16 %v4693, %v4692
        %v4747 = vpack.c.b16 %v4695, %v4694
        %v4748 = vpack.c.b16 %v4697, %v4696
        %v4749 = vpack.c.b16 %v4699, %v4698
        %v4750 = vpack.c.b16 %v4701, %v4700
        %v4751 = vpack.c.b16 %v4703, %v4702
        %v4752 = vpack.c.b16 %v4705, %v4704
        %v4753 = vpack.c.b16 %v4707, %v4706
        %v4754 = vpack.c.b16 %v4709, %v4708
        %v4755 = vpack.c.b16 %v4711, %v4710
        %v4756 = vpack.c.b16 %v4713, %v4712
        %v4757 = vpack.c.b16 %v4715, %v4714
        %v4758 = vpack.c.b16 %v4717, %v4716
        %v4759 = vpack.c.b16 %v4719, %v4718
        %v4760 = vpack.c.b16 %v4721, %v4720
        %v4761 = vpack.c.b16 %v4723, %v4722
        %v4762 = vpack.c.b16 %v4725, %v4724
        %v4763 = vpack.c.b16 %v4727, %v4726
        %v4764 = vpack.c.b16 %v4729, %v4728
        %v4765 = vpack.c.b16 %v4731, %v4730
        %v4766 = vpack.c.b16 %v4733, %v4732
        %v4767 = vpack.c.b16 %v4735, %v4734
        %4800 = vmatprep.subr.bf16.mxu0 0
        %4801 = vmatpush1.bf16.msra.mxu0 %v4736
        %4802 = vmatprep.subr.bf16.mxu0 0
        %4803 = vmatpush1.bf16.msra.mxu0 %v4737
        %4804 = vmatprep.subr.bf16.mxu0 0
        %4805 = vmatpush1.bf16.msra.mxu0 %v4738
        %4806 = vmatprep.subr.bf16.mxu0 0
        %4807 = vmatpush1.bf16.msra.mxu0 %v4739
        %4808 = vmatprep.subr.bf16.mxu0 0
        %4809 = vmatpush1.bf16.msra.mxu0 %v4740
        %4810 = vmatprep.subr.bf16.mxu0 0
        %4811 = vmatpush1.bf16.msra.mxu0 %v4741
        %4812 = vmatprep.subr.bf16.mxu0 0
        %4813 = vmatpush1.bf16.msra.mxu0 %v4742
        %4814 = vmatprep.subr.bf16.mxu0 0
        %4815 = vmatpush1.bf16.msra.mxu0 %v4743
        %4816 = vmatprep.subr.bf16.mxu0 0
        %4817 = vmatpush1.bf16.msra.mxu0 %v4744
        %4818 = vmatprep.subr.bf16.mxu0 0
        %4819 = vmatpush1.bf16.msra.mxu0 %v4745
        %4820 = vmatprep.subr.bf16.mxu0 0
        %4821 = vmatpush1.bf16.msra.mxu0 %v4746
        %4822 = vmatprep.subr.bf16.mxu0 0
        %4823 = vmatpush1.bf16.msra.mxu0 %v4747
        %4824 = vmatprep.subr.bf16.mxu0 0
        %4825 = vmatpush1.bf16.msra.mxu0 %v4748
        %4826 = vmatprep.subr.bf16.mxu0 0
        %4827 = vmatpush1.bf16.msra.mxu0 %v4749
        %4828 = vmatprep.subr.bf16.mxu0 0
        %4829 = vmatpush1.bf16.msra.mxu0 %v4750
        %4830 = vmatprep.subr.bf16.mxu0 0
        %4831 = vmatpush1.bf16.msra.mxu0 %v4751
        %4832 = vmatprep.mubr.bf16.mxu0 %v4540
        %4833 = vmatmul.mubr.bf16.gmra.mrb[0].mxu0 %v4539
        %v4834 = vpop.f32.mrb[0].mxu0
        %v4835 = vadd.f32 0.0, %v4834
        %v4836 = vpop.f32.mrb[0].mxu0
        %v4837 = vpop.f32.mrb[0].mxu0
        %v4838 = vadd.f32 0.0, %v4837
        %v4839 = vpop.f32.mrb[0].mxu0
        %4840 = vdwg.mxu0
        %4841 = vmatprep.subr.bf16.mxu0 0
        %4842 = vmatpush1.bf16.msra.mxu0 %v4752
        %4843 = vmatprep.subr.bf16.mxu0 0
        %4844 = vmatpush1.bf16.msra.mxu0 %v4753
        %4845 = vmatprep.subr.bf16.mxu0 0
        %4846 = vmatpush1.bf16.msra.mxu0 %v4754
        %4847 = vmatprep.subr.bf16.mxu0 0
        %4848 = vmatpush1.bf16.msra.mxu0 %v4755
        %4849 = vmatprep.subr.bf16.mxu0 0
        %4850 = vmatpush1.bf16.msra.mxu0 %v4756
        %4851 = vmatprep.subr.bf16.mxu0 0
        %4852 = vmatpush1.bf16.msra.mxu0 %v4757
        %4853 = vmatprep.subr.bf16.mxu0 0
        %4854 = vmatpush1.bf16.msra.mxu0 %v4758
        %4855 = vmatprep.subr.bf16.mxu0 0
        %4856 = vmatpush1.bf16.msra.mxu0 %v4759
        %4857 = vmatprep.subr.bf16.mxu0 0
        %4858 = vmatpush1.bf16.msra.mxu0 %v4760
        %4859 = vmatprep.subr.bf16.mxu0 0
        %4860 = vmatpush1.bf16.msra.mxu0 %v4761
        %4861 = vmatprep.subr.bf16.mxu0 0
        %4862 = vmatpush1.bf16.msra.mxu0 %v4762
        %4863 = vmatprep.subr.bf16.mxu0 0
        %4864 = vmatpush1.bf16.msra.mxu0 %v4763
        %4865 = vmatprep.subr.bf16.mxu0 0
        %4866 = vmatpush1.bf16.msra.mxu0 %v4764
        %4867 = vmatprep.subr.bf16.mxu0 0
        %4868 = vmatpush1.bf16.msra.mxu0 %v4765
        %4869 = vmatprep.subr.bf16.mxu0 0
        %4870 = vmatpush1.bf16.msra.mxu0 %v4766
        %4871 = vmatprep.subr.bf16.mxu0 0
        %4872 = vmatpush1.bf16.msra.mxu0 %v4767
        %4873 = vmatprep.mubr.bf16.mxu0 %v4542
        %4874 = vmatmul.mubr.bf16.gmra.mrb[0].mxu0 %v4541
        %v4875 = vpop.f32.mrb[0].mxu0
        %v4876 = vadd.f32 %v4835, %v4875
        %v4877 = vpop.f32.mrb[0].mxu0
        %v4878 = vpop.f32.mrb[0].mxu0
        %v4879 = vadd.f32 %v4838, %v4878
        %v4880 = vpop.f32.mrb[0].mxu0
        %4881 = vdwg.mxu0
        %v4946 = vunpack.c.l.b16 %v4378
        %v4947 = vunpack.c.l.b16 %v4379
        %v4948 = vunpack.c.l.b16 %v4380
        %v4949 = vunpack.c.l.b16 %v4381
        %v4950 = vunpack.c.l.b16 %v4382
        %v4951 = vunpack.c.l.b16 %v4383
        %v4952 = vunpack.c.l.b16 %v4384
        %v4953 = vunpack.c.l.b16 %v4385
        %v4954 = vunpack.c.l.b16 %v4386
        %v4955 = vunpack.c.l.b16 %v4387
        %v4956 = vunpack.c.l.b16 %v4388
        %v4957 = vunpack.c.l.b16 %v4389
        %v4958 = vunpack.c.l.b16 %v4390
        %v4959 = vunpack.c.l.b16 %v4391
        %v4960 = vunpack.c.l.b16 %v4392
        %v4961 = vunpack.c.l.b16 %v4393
        %v4962 = vunpack.c.l.b16 %v4394
        %v4963 = vunpack.c.l.b16 %v4395
        %v4964 = vunpack.c.l.b16 %v4396
        %v4965 = vunpack.c.l.b16 %v4397
        %v4966 = vunpack.c.l.b16 %v4398
        %v4967 = vunpack.c.l.b16 %v4399
        %v4968 = vunpack.c.l.b16 %v4400
        %v4969 = vunpack.c.l.b16 %v4401
        %v4970 = vunpack.c.l.b16 %v4402
        %v4971 = vunpack.c.l.b16 %v4403
        %v4972 = vunpack.c.l.b16 %v4404
        %v4973 = vunpack.c.l.b16 %v4405
        %v4974 = vunpack.c.l.b16 %v4406
        %v4975 = vunpack.c.l.b16 %v4407
        %v4976 = vunpack.c.l.b16 %v4408
        %v4977 = vunpack.c.l.b16 %v4409
        %v4978 = vunpack.c.l.b16 %v4410
        %v4979 = vunpack.c.l.b16 %v4411
        %v4980 = vunpack.c.l.b16 %v4412
        %v4981 = vunpack.c.l.b16 %v4413
        %v4982 = vunpack.c.l.b16 %v4414
        %v4983 = vunpack.c.l.b16 %v4415
        %v4984 = vunpack.c.l.b16 %v4416
        %v4985 = vunpack.c.l.b16 %v4417
        %v4986 = vunpack.c.l.b16 %v4418
        %v4987 = vunpack.c.l.b16 %v4419
        %v4988 = vunpack.c.l.b16 %v4420
        %v4989 = vunpack.c.l.b16 %v4421
        %v4990 = vunpack.c.l.b16 %v4422
        %v4991 = vunpack.c.l.b16 %v4423
        %v4992 = vunpack.c.l.b16 %v4424
        %v4993 = vunpack.c.l.b16 %v4425
        %v4994 = vunpack.c.l.b16 %v4426
        %v4995 = vunpack.c.l.b16 %v4427
        %v4996 = vunpack.c.l.b16 %v4428
        %v4997 = vunpack.c.l.b16 %v4429
        %v4998 = vunpack.c.l.b16 %v4430
        %v4999 = vunpack.c.l.b16 %v4431
        %v5000 = vunpack.c.l.b16 %v4432
        %v5001 = vunpack.c.l.b16 %v4433
        %v5002 = vunpack.c.l.b16 %v4434
        %v5003 = vunpack.c.l.b16 %v4435
        %v5004 = vunpack.c.l.b16 %v4436
        %v5005 = vunpack.c.l.b16 %v4437
        %v5006 = vunpack.c.l.b16 %v4438
        %v5007 = vunpack.c.l.b16 %v4439
        %v5008 = vunpack.c.l.b16 %v4440
        %v5009 = vunpack.c.l.b16 %v4441
        %v5010 = vpack.c.b16 %v4947, %v4946
        %v5011 = vpack.c.b16 %v4949, %v4948
        %v5012 = vpack.c.b16 %v4951, %v4950
        %v5013 = vpack.c.b16 %v4953, %v4952
        %v5014 = vpack.c.b16 %v4955, %v4954
        %v5015 = vpack.c.b16 %v4957, %v4956
        %v5016 = vpack.c.b16 %v4959, %v4958
        %v5017 = vpack.c.b16 %v4961, %v4960
        %v5018 = vpack.c.b16 %v4963, %v4962
        %v5019 = vpack.c.b16 %v4965, %v4964
        %v5020 = vpack.c.b16 %v4967, %v4966
        %v5021 = vpack.c.b16 %v4969, %v4968
        %v5022 = vpack.c.b16 %v4971, %v4970
        %v5023 = vpack.c.b16 %v4973, %v4972
        %v5024 = vpack.c.b16 %v4975, %v4974
        %v5025 = vpack.c.b16 %v4977, %v4976
        %v5026 = vpack.c.b16 %v4979, %v4978
        %v5027 = vpack.c.b16 %v4981, %v4980
        %v5028 = vpack.c.b16 %v4983, %v4982
        %v5029 = vpack.c.b16 %v4985, %v4984
        %v5030 = vpack.c.b16 %v4987, %v4986
        %v5031 = vpack.c.b16 %v4989, %v4988
        %v5032 = vpack.c.b16 %v4991, %v4990
        %v5033 = vpack.c.b16 %v4993, %v4992
        %v5034 = vpack.c.b16 %v4995, %v4994
        %v5035 = vpack.c.b16 %v4997, %v4996
        %v5036 = vpack.c.b16 %v4999, %v4998
        %v5037 = vpack.c.b16 %v5001, %v5000
        %v5038 = vpack.c.b16 %v5003, %v5002
        %v5039 = vpack.c.b16 %v5005, %v5004
        %v5040 = vpack.c.b16 %v5007, %v5006
        %v5041 = vpack.c.b16 %v5009, %v5008
        %5074 = vmatprep.subr.bf16.mxu0 0
        %5075 = vmatpush1.bf16.msra.mxu0 %v5010
        %5076 = vmatprep.subr.bf16.mxu0 0
        %5077 = vmatpush1.bf16.msra.mxu0 %v5011
        %5078 = vmatprep.subr.bf16.mxu0 0
        %5079 = vmatpush1.bf16.msra.mxu0 %v5012
        %5080 = vmatprep.subr.bf16.mxu0 0
        %5081 = vmatpush1.bf16.msra.mxu0 %v5013
        %5082 = vmatprep.subr.bf16.mxu0 0
        %5083 = vmatpush1.bf16.msra.mxu0 %v5014
        %5084 = vmatprep.subr.bf16.mxu0 0
        %5085 = vmatpush1.bf16.msra.mxu0 %v5015
        %5086 = vmatprep.subr.bf16.mxu0 0
        %5087 = vmatpush1.bf16.msra.mxu0 %v5016
        %5088 = vmatprep.subr.bf16.mxu0 0
        %5089 = vmatpush1.bf16.msra.mxu0 %v5017
        %5090 = vmatprep.subr.bf16.mxu0 0
        %5091 = vmatpush1.bf16.msra.mxu0 %v5018
        %5092 = vmatprep.subr.bf16.mxu0 0
        %5093 = vmatpush1.bf16.msra.mxu0 %v5019
        %5094 = vmatprep.subr.bf16.mxu0 0
        %5095 = vmatpush1.bf16.msra.mxu0 %v5020
        %5096 = vmatprep.subr.bf16.mxu0 0
        %5097 = vmatpush1.bf16.msra.mxu0 %v5021
        %5098 = vmatprep.subr.bf16.mxu0 0
        %5099 = vmatpush1.bf16.msra.mxu0 %v5022
        %5100 = vmatprep.subr.bf16.mxu0 0
        %5101 = vmatpush1.bf16.msra.mxu0 %v5023
        %5102 = vmatprep.subr.bf16.mxu0 0
        %5103 = vmatpush1.bf16.msra.mxu0 %v5024
        %5104 = vmatprep.subr.bf16.mxu0 0
        %5105 = vmatpush1.bf16.msra.mxu0 %v5025
        %5106 = vmatprep.mubr.bf16.mxu0 %v4375
        %5107 = vmatmul.mubr.bf16.gmra.mrb[0].mxu0 %v4374
        %v5108 = vpop.f32.mrb[0].mxu0
        %v5109 = vadd.f32 %v4876, %v5108
        %v5110 = vpop.f32.mrb[0].mxu0
        %v5111 = vpop.f32.mrb[0].mxu0
        %v5112 = vadd.f32 %v4879, %v5111
        %v5113 = vpop.f32.mrb[0].mxu0
        %5114 = vdwg.mxu0
        %5115 = vmatprep.subr.bf16.mxu0 0
        %5116 = vmatpush1.bf16.msra.mxu0 %v5026
        %5117 = vmatprep.subr.bf16.mxu0 0
        %5118 = vmatpush1.bf16.msra.mxu0 %v5027
        %5119 = vmatprep.subr.bf16.mxu0 0
        %5120 = vmatpush1.bf16.msra.mxu0 %v5028
        %5121 = vmatprep.subr.bf16.mxu0 0
        %5122 = vmatpush1.bf16.msra.mxu0 %v5029
        %5123 = vmatprep.subr.bf16.mxu0 0
        %5124 = vmatpush1.bf16.msra.mxu0 %v5030
        %5125 = vmatprep.subr.bf16.mxu0 0
        %5126 = vmatpush1.bf16.msra.mxu0 %v5031
        %5127 = vmatprep.subr.bf16.mxu0 0
        %5128 = vmatpush1.bf16.msra.mxu0 %v5032
        %5129 = vmatprep.subr.bf16.mxu0 0
        %5130 = vmatpush1.bf16.msra.mxu0 %v5033
        %5131 = vmatprep.subr.bf16.mxu0 0
        %5132 = vmatpush1.bf16.msra.mxu0 %v5034
        %5133 = vmatprep.subr.bf16.mxu0 0
        %5134 = vmatpush1.bf16.msra.mxu0 %v5035
        %5135 = vmatprep.subr.bf16.mxu0 0
        %5136 = vmatpush1.bf16.msra.mxu0 %v5036
        %5137 = vmatprep.subr.bf16.mxu0 0
        %5138 = vmatpush1.bf16.msra.mxu0 %v5037
        %5139 = vmatprep.subr.bf16.mxu0 0
        %5140 = vmatpush1.bf16.msra.mxu0 %v5038
        %5141 = vmatprep.subr.bf16.mxu0 0
        %5142 = vmatpush1.bf16.msra.mxu0 %v5039
        %5143 = vmatprep.subr.bf16.mxu0 0
        %5144 = vmatpush1.bf16.msra.mxu0 %v5040
        %5145 = vmatprep.subr.bf16.mxu0 0
        %5146 = vmatpush1.bf16.msra.mxu0 %v5041
        %5147 = vmatprep.mubr.bf16.mxu0 %v4377
        %5148 = vmatmul.mubr.bf16.gmra.mrb[0].mxu0 %v4376
        %v5149 = vpop.f32.mrb[0].mxu0
        %v5150 = vadd.f32 %v5109, %v5149
        %v5151 = vpop.f32.mrb[0].mxu0
        %v5152 = vpop.f32.mrb[0].mxu0
        %v5153 = vadd.f32 %v5112, %v5152
        %v5154 = vpop.f32.mrb[0].mxu0
        %5155 = vdwg.mxu0
        %s5156 = scalar_lea.vmem [#allocation19], 16
        %v5157 = vld [vmem:[%s5156] sm:$0xf]
        %v5158 = vld [vmem:[%s5156 + $0x4] sm:$0xf]
        %v5161 = vunpack.c.l.b16 %v5157
        %v5162 = vunpack.c.l.b16 %v5158
        %v5163 = vpack.c.b16 %v5162, %v5161
        %v5165 = vsel %vm866, %v5163, 0
        %5167 = vmatprep.subr.bf16.mxu0 %v4275
        %5168 = vmatpush1.bf16.msra.mxu0 %v4274
        %5169 = vmatprep.subr.bf16.mxu0 0
        %5170 = vmatpush1.bf16.msra.mxu0 0
        %5171 = vmatprep.subr.bf16.mxu0 0
        %5172 = vmatpush1.bf16.msra.mxu0 0
        %5173 = vmatprep.subr.bf16.mxu0 0
        %5174 = vmatpush1.bf16.msra.mxu0 0
        %5175 = vmatprep.subr.bf16.mxu0 0
        %5176 = vmatpush1.bf16.msra.mxu0 0
        %5177 = vmatprep.subr.bf16.mxu0 0
        %5178 = vmatpush1.bf16.msra.mxu0 0
        %5179 = vmatprep.subr.bf16.mxu0 0
        %5180 = vmatpush1.bf16.msra.mxu0 0
        %5181 = vmatprep.subr.bf16.mxu0 0
        %5182 = vmatpush1.bf16.msra.mxu0 0
        %5183 = vmatprep.subr.bf16.mxu0 0
        %5184 = vmatpush1.bf16.msra.mxu0 0
        %5185 = vmatprep.subr.bf16.mxu0 0
        %5186 = vmatpush1.bf16.msra.mxu0 0
        %5187 = vmatprep.subr.bf16.mxu0 0
        %5188 = vmatpush1.bf16.msra.mxu0 0
        %5189 = vmatprep.subr.bf16.mxu0 0
        %5190 = vmatpush1.bf16.msra.mxu0 0
        %5191 = vmatprep.subr.bf16.mxu0 0
        %5192 = vmatpush1.bf16.msra.mxu0 0
        %5193 = vmatprep.subr.bf16.mxu0 0
        %5194 = vmatpush1.bf16.msra.mxu0 0
        %5195 = vmatprep.subr.bf16.mxu0 0
        %5196 = vmatpush1.bf16.msra.mxu0 0
        %5197 = vmatprep.subr.bf16.mxu0 0
        %5198 = vmatpush1.bf16.msra.mxu0 0
        %5199 = vmatprep.mubr.bf16.mxu0 0
        %5200 = vmatmul.mubr.bf16.gmra.mrb[0].mxu0 %v5165
        %v5201 = vpop.f32.mrb[0].mxu0
        %v5202 = vadd.f32 0.0, %v5201
        %v5203 = vpop.f32.mrb[0].mxu0
        %v5204 = vadd.f32 0.0, %v5203
        %v5205 = vpop.f32.mrb[0].mxu0
        %v5206 = vadd.f32 0.0, %v5205
        %v5207 = vpop.f32.mrb[0].mxu0
        %v5208 = vadd.f32 0.0, %v5207
        %5209 = vdwg.mxu0
        %5210 = vmatprep.subr.bf16.mxu0 %v4277
        %5211 = vmatpush1.bf16.msra.mxu0 %v4276
        %5212 = vmatprep.subr.bf16.mxu0 0
        %5213 = vmatpush1.bf16.msra.mxu0 0
        %5214 = vmatprep.subr.bf16.mxu0 0
        %5215 = vmatpush1.bf16.msra.mxu0 0
        %5216 = vmatprep.subr.bf16.mxu0 0
        %5217 = vmatpush1.bf16.msra.mxu0 0
        %5218 = vmatprep.subr.bf16.mxu0 0
        %5219 = vmatpush1.bf16.msra.mxu0 0
        %5220 = vmatprep.subr.bf16.mxu0 0
        %5221 = vmatpush1.bf16.msra.mxu0 0
        %5222 = vmatprep.subr.bf16.mxu0 0
        %5223 = vmatpush1.bf16.msra.mxu0 0
        %5224 = vmatprep.subr.bf16.mxu0 0
        %5225 = vmatpush1.bf16.msra.mxu0 0
        %5226 = vmatprep.subr.bf16.mxu0 0
        %5227 = vmatpush1.bf16.msra.mxu0 0
        %5228 = vmatprep.subr.bf16.mxu0 0
        %5229 = vmatpush1.bf16.msra.mxu0 0
        %5230 = vmatprep.subr.bf16.mxu0 0
        %5231 = vmatpush1.bf16.msra.mxu0 0
        %5232 = vmatprep.subr.bf16.mxu0 0
        %5233 = vmatpush1.bf16.msra.mxu0 0
        %5234 = vmatprep.subr.bf16.mxu0 0
        %5235 = vmatpush1.bf16.msra.mxu0 0
        %5236 = vmatprep.subr.bf16.mxu0 0
        %5237 = vmatpush1.bf16.msra.mxu0 0
        %5238 = vmatprep.subr.bf16.mxu0 0
        %5239 = vmatpush1.bf16.msra.mxu0 0
        %5240 = vmatprep.subr.bf16.mxu0 0
        %5241 = vmatpush1.bf16.msra.mxu0 0
        %5242 = vmatprep.mubr.bf16.mxu0 0
        %5243 = vmatmul.mubr.bf16.gmra.mrb[0].mxu0 %v5165
        %v5244 = vpop.f32.mrb[0].mxu0
        %v5245 = vadd.f32 0.0, %v5244
        %v5246 = vpop.f32.mrb[0].mxu0
        %v5247 = vadd.f32 0.0, %v5246
        %v5248 = vpop.f32.mrb[0].mxu0
        %v5249 = vadd.f32 0.0, %v5248
        %v5250 = vpop.f32.mrb[0].mxu0
        %v5251 = vadd.f32 0.0, %v5250
        %5252 = vdwg.mxu0
        %v5253 = vpack.c.bf16 %v5206, %v5202
        %v5254 = vpack.c.bf16 %v5208, %v5204
        %v5255 = vpack.c.bf16 %v5249, %v5245
        %v5256 = vpack.c.bf16 %v5251, %v5247
        %s5257 = scalar_lea.vmem %s20, 512
        %v5258 = vld [vmem:[%s5257] sm:$0xf]
        %v5259 = vld [vmem:[%s5257 + $0x4] sm:$0xf]
        %v5260 = vld [vmem:[%s5257 + $0x8] sm:$0xf]
        %v5261 = vld [vmem:[%s5257 + $0xc] sm:$0xf]
        %v5262 = vld [vmem:[%s5257 + $0x10] sm:$0xf]
        %v5263 = vld [vmem:[%s5257 + $0x14] sm:$0xf]
        %v5264 = vld [vmem:[%s5257 + $0x18] sm:$0xf]
        %v5265 = vld [vmem:[%s5257 + $0x1c] sm:$0xf]
        %v5266 = vld [vmem:[%s5257 + $0x20] sm:$0xf]
        %v5267 = vld [vmem:[%s5257 + $0x24] sm:$0xf]
        %v5268 = vld [vmem:[%s5257 + $0x28] sm:$0xf]
        %v5269 = vld [vmem:[%s5257 + $0x2c] sm:$0xf]
        %v5270 = vld [vmem:[%s5257 + $0x30] sm:$0xf]
        %v5271 = vld [vmem:[%s5257 + $0x34] sm:$0xf]
        %v5272 = vld [vmem:[%s5257 + $0x38] sm:$0xf]
        %v5273 = vld [vmem:[%s5257 + $0x3c] sm:$0xf]
        %v5274 = vld [vmem:[%s5257 + $0x40] sm:$0xf]
        %v5275 = vld [vmem:[%s5257 + $0x44] sm:$0xf]
        %v5276 = vld [vmem:[%s5257 + $0x48] sm:$0xf]
        %v5277 = vld [vmem:[%s5257 + $0x4c] sm:$0xf]
        %v5278 = vld [vmem:[%s5257 + $0x50] sm:$0xf]
        %v5279 = vld [vmem:[%s5257 + $0x54] sm:$0xf]
        %v5280 = vld [vmem:[%s5257 + $0x58] sm:$0xf]
        %v5281 = vld [vmem:[%s5257 + $0x5c] sm:$0xf]
        %v5282 = vld [vmem:[%s5257 + $0x60] sm:$0xf]
        %v5283 = vld [vmem:[%s5257 + $0x64] sm:$0xf]
        %v5284 = vld [vmem:[%s5257 + $0x68] sm:$0xf]
        %v5285 = vld [vmem:[%s5257 + $0x6c] sm:$0xf]
        %v5286 = vld [vmem:[%s5257 + $0x70] sm:$0xf]
        %v5287 = vld [vmem:[%s5257 + $0x74] sm:$0xf]
        %v5288 = vld [vmem:[%s5257 + $0x78] sm:$0xf]
        %v5289 = vld [vmem:[%s5257 + $0x7c] sm:$0xf]
        %v5290 = vld [vmem:[%s5257 + $0x80] sm:$0xf]
        %v5291 = vld [vmem:[%s5257 + $0x84] sm:$0xf]
        %v5292 = vld [vmem:[%s5257 + $0x88] sm:$0xf]
        %v5293 = vld [vmem:[%s5257 + $0x8c] sm:$0xf]
        %v5294 = vld [vmem:[%s5257 + $0x90] sm:$0xf]
        %v5295 = vld [vmem:[%s5257 + $0x94] sm:$0xf]
        %v5296 = vld [vmem:[%s5257 + $0x98] sm:$0xf]
        %v5297 = vld [vmem:[%s5257 + $0x9c] sm:$0xf]
        %v5298 = vld [vmem:[%s5257 + $0xa0] sm:$0xf]
        %v5299 = vld [vmem:[%s5257 + $0xa4] sm:$0xf]
        %v5300 = vld [vmem:[%s5257 + $0xa8] sm:$0xf]
        %v5301 = vld [vmem:[%s5257 + $0xac] sm:$0xf]
        %v5302 = vld [vmem:[%s5257 + $0xb0] sm:$0xf]
        %v5303 = vld [vmem:[%s5257 + $0xb4] sm:$0xf]
        %v5304 = vld [vmem:[%s5257 + $0xb8] sm:$0xf]
        %v5305 = vld [vmem:[%s5257 + $0xbc] sm:$0xf]
        %v5306 = vld [vmem:[%s5257 + $0xc0] sm:$0xf]
        %v5307 = vld [vmem:[%s5257 + $0xc4] sm:$0xf]
        %v5308 = vld [vmem:[%s5257 + $0xc8] sm:$0xf]
        %v5309 = vld [vmem:[%s5257 + $0xcc] sm:$0xf]
        %v5310 = vld [vmem:[%s5257 + $0xd0] sm:$0xf]
        %v5311 = vld [vmem:[%s5257 + $0xd4] sm:$0xf]
        %v5312 = vld [vmem:[%s5257 + $0xd8] sm:$0xf]
        %v5313 = vld [vmem:[%s5257 + $0xdc] sm:$0xf]
        %v5314 = vld [vmem:[%s5257 + $0xe0] sm:$0xf]
        %v5315 = vld [vmem:[%s5257 + $0xe4] sm:$0xf]
        %v5316 = vld [vmem:[%s5257 + $0xe8] sm:$0xf]
        %v5317 = vld [vmem:[%s5257 + $0xec] sm:$0xf]
        %v5318 = vld [vmem:[%s5257 + $0xf0] sm:$0xf]
        %v5319 = vld [vmem:[%s5257 + $0xf4] sm:$0xf]
        %v5320 = vld [vmem:[%s5257 + $0xf8] sm:$0xf]
        %v5321 = vld [vmem:[%s5257 + $0xfc] sm:$0xf]
        %v5386 = vunpack.c.l.b16 %v5258
        %v5387 = vunpack.c.l.b16 %v5259
        %v5388 = vunpack.c.l.b16 %v5260
        %v5389 = vunpack.c.l.b16 %v5261
        %v5390 = vunpack.c.l.b16 %v5262
        %v5391 = vunpack.c.l.b16 %v5263
        %v5392 = vunpack.c.l.b16 %v5264
        %v5393 = vunpack.c.l.b16 %v5265
        %v5394 = vunpack.c.l.b16 %v5266
        %v5395 = vunpack.c.l.b16 %v5267
        %v5396 = vunpack.c.l.b16 %v5268
        %v5397 = vunpack.c.l.b16 %v5269
        %v5398 = vunpack.c.l.b16 %v5270
        %v5399 = vunpack.c.l.b16 %v5271
        %v5400 = vunpack.c.l.b16 %v5272
        %v5401 = vunpack.c.l.b16 %v5273
        %v5402 = vunpack.c.l.b16 %v5274
        %v5403 = vunpack.c.l.b16 %v5275
        %v5404 = vunpack.c.l.b16 %v5276
        %v5405 = vunpack.c.l.b16 %v5277
        %v5406 = vunpack.c.l.b16 %v5278
        %v5407 = vunpack.c.l.b16 %v5279
        %v5408 = vunpack.c.l.b16 %v5280
        %v5409 = vunpack.c.l.b16 %v5281
        %v5410 = vunpack.c.l.b16 %v5282
        %v5411 = vunpack.c.l.b16 %v5283
        %v5412 = vunpack.c.l.b16 %v5284
        %v5413 = vunpack.c.l.b16 %v5285
        %v5414 = vunpack.c.l.b16 %v5286
        %v5415 = vunpack.c.l.b16 %v5287
        %v5416 = vunpack.c.l.b16 %v5288
        %v5417 = vunpack.c.l.b16 %v5289
        %v5418 = vunpack.c.l.b16 %v5290
        %v5419 = vunpack.c.l.b16 %v5291
        %v5420 = vunpack.c.l.b16 %v5292
        %v5421 = vunpack.c.l.b16 %v5293
        %v5422 = vunpack.c.l.b16 %v5294
        %v5423 = vunpack.c.l.b16 %v5295
        %v5424 = vunpack.c.l.b16 %v5296
        %v5425 = vunpack.c.l.b16 %v5297
        %v5426 = vunpack.c.l.b16 %v5298
        %v5427 = vunpack.c.l.b16 %v5299
        %v5428 = vunpack.c.l.b16 %v5300
        %v5429 = vunpack.c.l.b16 %v5301
        %v5430 = vunpack.c.l.b16 %v5302
        %v5431 = vunpack.c.l.b16 %v5303
        %v5432 = vunpack.c.l.b16 %v5304
        %v5433 = vunpack.c.l.b16 %v5305
        %v5434 = vunpack.c.l.b16 %v5306
        %v5435 = vunpack.c.l.b16 %v5307
        %v5436 = vunpack.c.l.b16 %v5308
        %v5437 = vunpack.c.l.b16 %v5309
        %v5438 = vunpack.c.l.b16 %v5310
        %v5439 = vunpack.c.l.b16 %v5311
        %v5440 = vunpack.c.l.b16 %v5312
        %v5441 = vunpack.c.l.b16 %v5313
        %v5442 = vunpack.c.l.b16 %v5314
        %v5443 = vunpack.c.l.b16 %v5315
        %v5444 = vunpack.c.l.b16 %v5316
        %v5445 = vunpack.c.l.b16 %v5317
        %v5446 = vunpack.c.l.b16 %v5318
        %v5447 = vunpack.c.l.b16 %v5319
        %v5448 = vunpack.c.l.b16 %v5320
        %v5449 = vunpack.c.l.b16 %v5321
        %v5450 = vpack.c.b16 %v5387, %v5386
        %v5451 = vpack.c.b16 %v5389, %v5388
        %v5452 = vpack.c.b16 %v5391, %v5390
        %v5453 = vpack.c.b16 %v5393, %v5392
        %v5454 = vpack.c.b16 %v5395, %v5394
        %v5455 = vpack.c.b16 %v5397, %v5396
        %v5456 = vpack.c.b16 %v5399, %v5398
        %v5457 = vpack.c.b16 %v5401, %v5400
        %v5458 = vpack.c.b16 %v5403, %v5402
        %v5459 = vpack.c.b16 %v5405, %v5404
        %v5460 = vpack.c.b16 %v5407, %v5406
        %v5461 = vpack.c.b16 %v5409, %v5408
        %v5462 = vpack.c.b16 %v5411, %v5410
        %v5463 = vpack.c.b16 %v5413, %v5412
        %v5464 = vpack.c.b16 %v5415, %v5414
        %v5465 = vpack.c.b16 %v5417, %v5416
        %v5466 = vpack.c.b16 %v5419, %v5418
        %v5467 = vpack.c.b16 %v5421, %v5420
        %v5468 = vpack.c.b16 %v5423, %v5422
        %v5469 = vpack.c.b16 %v5425, %v5424
        %v5470 = vpack.c.b16 %v5427, %v5426
        %v5471 = vpack.c.b16 %v5429, %v5428
        %v5472 = vpack.c.b16 %v5431, %v5430
        %v5473 = vpack.c.b16 %v5433, %v5432
        %v5474 = vpack.c.b16 %v5435, %v5434
        %v5475 = vpack.c.b16 %v5437, %v5436
        %v5476 = vpack.c.b16 %v5439, %v5438
        %v5477 = vpack.c.b16 %v5441, %v5440
        %v5478 = vpack.c.b16 %v5443, %v5442
        %v5479 = vpack.c.b16 %v5445, %v5444
        %v5480 = vpack.c.b16 %v5447, %v5446
        %v5481 = vpack.c.b16 %v5449, %v5448
        %5514 = vmatprep.subr.bf16.mxu0 0
        %5515 = vmatpush1.bf16.msra.mxu0 %v5450
        %5516 = vmatprep.subr.bf16.mxu0 0
        %5517 = vmatpush1.bf16.msra.mxu0 %v5451
        %5518 = vmatprep.subr.bf16.mxu0 0
        %5519 = vmatpush1.bf16.msra.mxu0 %v5452
        %5520 = vmatprep.subr.bf16.mxu0 0
        %5521 = vmatpush1.bf16.msra.mxu0 %v5453
        %5522 = vmatprep.subr.bf16.mxu0 0
        %5523 = vmatpush1.bf16.msra.mxu0 %v5454
        %5524 = vmatprep.subr.bf16.mxu0 0
        %5525 = vmatpush1.bf16.msra.mxu0 %v5455
        %5526 = vmatprep.subr.bf16.mxu0 0
        %5527 = vmatpush1.bf16.msra.mxu0 %v5456
        %5528 = vmatprep.subr.bf16.mxu0 0
        %5529 = vmatpush1.bf16.msra.mxu0 %v5457
        %5530 = vmatprep.subr.bf16.mxu0 0
        %5531 = vmatpush1.bf16.msra.mxu0 %v5458
        %5532 = vmatprep.subr.bf16.mxu0 0
        %5533 = vmatpush1.bf16.msra.mxu0 %v5459
        %5534 = vmatprep.subr.bf16.mxu0 0
        %5535 = vmatpush1.bf16.msra.mxu0 %v5460
        %5536 = vmatprep.subr.bf16.mxu0 0
        %5537 = vmatpush1.bf16.msra.mxu0 %v5461
        %5538 = vmatprep.subr.bf16.mxu0 0
        %5539 = vmatpush1.bf16.msra.mxu0 %v5462
        %5540 = vmatprep.subr.bf16.mxu0 0
        %5541 = vmatpush1.bf16.msra.mxu0 %v5463
        %5542 = vmatprep.subr.bf16.mxu0 0
        %5543 = vmatpush1.bf16.msra.mxu0 %v5464
        %5544 = vmatprep.subr.bf16.mxu0 0
        %5545 = vmatpush1.bf16.msra.mxu0 %v5465
        %5546 = vmatprep.mubr.bf16.mxu0 %v5254
        %5547 = vmatmul.mubr.bf16.gmra.mrb[0].mxu0 %v5253
        %v5548 = vpop.f32.mrb[0].mxu0
        %v5549 = vadd.f32 0.0, %v5548
        %v5550 = vpop.f32.mrb[0].mxu0
        %v5551 = vpop.f32.mrb[0].mxu0
        %v5552 = vadd.f32 0.0, %v5551
        %v5553 = vpop.f32.mrb[0].mxu0
        %5554 = vdwg.mxu0
        %5555 = vmatprep.subr.bf16.mxu0 0
        %5556 = vmatpush1.bf16.msra.mxu0 %v5466
        %5557 = vmatprep.subr.bf16.mxu0 0
        %5558 = vmatpush1.bf16.msra.mxu0 %v5467
        %5559 = vmatprep.subr.bf16.mxu0 0
        %5560 = vmatpush1.bf16.msra.mxu0 %v5468
        %5561 = vmatprep.subr.bf16.mxu0 0
        %5562 = vmatpush1.bf16.msra.mxu0 %v5469
        %5563 = vmatprep.subr.bf16.mxu0 0
        %5564 = vmatpush1.bf16.msra.mxu0 %v5470
        %5565 = vmatprep.subr.bf16.mxu0 0
        %5566 = vmatpush1.bf16.msra.mxu0 %v5471
        %5567 = vmatprep.subr.bf16.mxu0 0
        %5568 = vmatpush1.bf16.msra.mxu0 %v5472
        %5569 = vmatprep.subr.bf16.mxu0 0
        %5570 = vmatpush1.bf16.msra.mxu0 %v5473
        %5571 = vmatprep.subr.bf16.mxu0 0
        %5572 = vmatpush1.bf16.msra.mxu0 %v5474
        %5573 = vmatprep.subr.bf16.mxu0 0
        %5574 = vmatpush1.bf16.msra.mxu0 %v5475
        %5575 = vmatprep.subr.bf16.mxu0 0
        %5576 = vmatpush1.bf16.msra.mxu0 %v5476
        %5577 = vmatprep.subr.bf16.mxu0 0
        %5578 = vmatpush1.bf16.msra.mxu0 %v5477
        %5579 = vmatprep.subr.bf16.mxu0 0
        %5580 = vmatpush1.bf16.msra.mxu0 %v5478
        %5581 = vmatprep.subr.bf16.mxu0 0
        %5582 = vmatpush1.bf16.msra.mxu0 %v5479
        %5583 = vmatprep.subr.bf16.mxu0 0
        %5584 = vmatpush1.bf16.msra.mxu0 %v5480
        %5585 = vmatprep.subr.bf16.mxu0 0
        %5586 = vmatpush1.bf16.msra.mxu0 %v5481
        %5587 = vmatprep.mubr.bf16.mxu0 %v5256
        %5588 = vmatmul.mubr.bf16.gmra.mrb[0].mxu0 %v5255
        %v5589 = vpop.f32.mrb[0].mxu0
        %v5590 = vadd.f32 %v5549, %v5589
        %v5591 = vpop.f32.mrb[0].mxu0
        %v5592 = vpop.f32.mrb[0].mxu0
        %v5593 = vadd.f32 %v5552, %v5592
        %v5594 = vpop.f32.mrb[0].mxu0
        %5595 = vdwg.mxu0
        %v5596 = vadd.f32 %v5150, %v5590
        %v5597 = vadd.f32 %v5153, %v5593
        %v5598 = vld [vmem:[#allocation21] sm:$0x1]
        %v5600 = vlaneseq
        %v5601 = vshrl.u32 %v5600, 7
        %v5602 = vsub.s32 0, %v5601
        %v5603 = vrot.slane %v5598, %v5602
        %v5605 = vadd.f32 %v5596, %v5603
        %v5606 = vadd.f32 %v5597, %v5603
        %5607 = vst.msk [vmem:[%s860] sm:$0xff] %vm1000, %v5605
        %5608 = vst.msk [vmem:[%s860 + $0x8] sm:$0xff] %vm1000, %v5606
        %p5609 = scmp.lt.s32.totalorder %s40, 1
        %s5610 = scalar_select %p5609, %s40, 1
        %s5611 = smul.addr %s5610, 2
        %s5612 = smul.addr %s5611, 8
        %s5613 = scalar_lea.vmem %s22, %s5612
        // Predicated region
        $region161: #{unet_tiny_rf.1} parent=107 // pred_check
          %p5614 = pneg %p525
        $region162: #{unet_tiny_rf.1} parent=107 // pred_check_branch
          %5616 = sbr.rel (%p5614) target = $region164
        $region163: #{unet_tiny_rf.1} parent=107 // pred_region
          _
        $region164: #{unet_tiny_rf.1} parent=107 // pred_fallthru
          _
      $region108: #{unet_tiny_rf.1} parent=5 // pred_fallthru
        _
      %p5617 = scmp.le.s32.totalorder 2, %s35
      // Predicated region
      $region165: #{unet_tiny_rf.1} parent=5 // pred_check
        %p5618 = pneg %p5617
      $region166: #{unet_tiny_rf.1} parent=5 // pred_check_branch
        %5620 = sbr.rel (%p5618) target = $region168
      $region167: #{unet_tiny_rf.1} parent=5 // pred_region
        %s5621 = ssub.s32 %s35, 2
        // Predicated region
        $region169: #{unet_tiny_rf.1} parent=167 // pred_check
          %p5622 = pneg %p531
        $region170: #{unet_tiny_rf.1} parent=167 // pred_check_branch
          %5624 = sbr.rel (%p5622) target = $region172
        $region171: #{unet_tiny_rf.1} parent=167 // pred_region
          %p5625 = scmp.lt.s32.totalorder %s41, 1
          %s5626 = scalar_select %p5625, %s41, 1
          %s5627 = smul.addr %s5626, 2
          %s5628 = smul.addr %s5627, 8
          %s5629 = scalar_lea.vmem %s22, %s5628
        $region172: #{unet_tiny_rf.1} parent=167 // pred_fallthru
          _
      $region168: #{unet_tiny_rf.1} parent=5 // pred_fallthru
        _
    $region6: #{unet_tiny_rf.1} parent=1 // loop_footer
      %s39 = sadd.s32 1, %s35
    $region7: #{unet_tiny_rf.1} parent=1 // loop_footer_branch
      %34 = sbr.rel target = $region3
    $region8: #{unet_tiny_rf.1} parent=1 // loop_exit
      _
    %5630 = vsyncpa [#allocation3], 1
    %s5631 = scalar_lea.sflag [#allocation3], 1
    %5632 = vsyncpa %s5631, 1
    %5633 = vsyncpa [#allocation5], 1
    %5634 = vsyncpa [#allocation8], 1
    %5635 = vsyncpa [#allocation11], 1
    %5636 = vsyncpa [#allocation14], 1
    %5637 = vsyncpa [#allocation17], 1
    %5638 = vsyncpa [#allocation20], 1

</llo_original>
